<compile_context>
chip_gen: v6e
topology: v6e:2x2x1
jax: 0.10.0
libtpu: 0.0.40
codegen_flags: <defaults>
</compile_context>

<pallas_src>
import jax
import jax.numpy as jnp
from jax.experimental import pallas as pl
from jax.experimental.pallas import tpu as pltpu


def _mlp_kernel(x_ref, w1_ref, b1_ref, w2_ref, b2_ref, w3_ref, b3_ref, o_ref):
    # Layer 1: (TB, D) @ (D, 32) in the streamed dtype (bf16 fast path or f32
    # exact path), f32 accumulation on the MXU.
    h = jnp.dot(x_ref[...], w1_ref[...], preferred_element_type=jnp.float32)
    h = jnp.maximum(h + b1_ref[...], 0.0)
    # Layer 2: (TB, 32) @ (32, 32) + bias, ReLU.
    h = jnp.dot(h, w2_ref[...], preferred_element_type=jnp.float32)
    h = jnp.maximum(h + b2_ref[...], 0.0)
    # Layer 3: (TB, 32) @ (32, 128-padded) + bias, lane-dense store.
    out = jnp.dot(h, w3_ref[...], preferred_element_type=jnp.float32) + b3_ref[...]
    o_ref[...] = out.astype(o_ref.dtype)


def _round_up(x, m):
    return ((x + m - 1) // m) * m


def _choose_batch_tile(B, *, max_tb, min_grid=2):
    """Pick a batch tile (multiple of 8 sublanes).

    Preference order: minimal batch padding (pure HBM waste on a
    bandwidth-bound kernel) > grid >= min_grid (keeps pipelining / megacore
    alive) > even grid (v7x 2-TensorCore split) > largest tile (per-step
    overhead amortization).
    """
    B8 = _round_up(B, 8)
    hi = max(8, min(_round_up(max_tb, 8), B8))
    best_key, best = None, None
    for tb in range(8, hi + 1, 8):
        b_pad = _round_up(B8, tb)
        grid = b_pad // tb
        key = (b_pad - B, 0 if grid >= min_grid else 1, grid % 2, -tb)
        if best_key is None or key < best_key:
            best_key, best = key, (tb, b_pad)
    return best


def network_forward(x, params, *, max_tb=None, min_grid=2):
    """Forward pass of `Network`.

    x: (B, C, 32, 32).  The x stream dtype follows x.dtype:
       * float32  -> exact PyTorch f32 Linear semantics.
       * bfloat16 -> halves the dominant HBM stream (have the producer emit
         bf16; do not cast here, that costs an extra HBM pass).
    params: (w1, b1, w2, b2, w3, b3) with weights stored as (in, out).
    Returns (B, nclasses) float32.
    """
    w1, b1, w2, b2, w3, b3 = params
    b1 = b1.reshape(1, -1)
    b2 = b2.reshape(1, -1)
    b3 = b3.reshape(1, -1)

    B = x.shape[0]
    D = w1.shape[0]
    nclasses = w3.shape[1]

    x_flat = x.reshape(B, -1)  # identical to torch x.view(B, -1); metadata-only
    assert x_flat.shape[1] == D

    x_itemsize = x_flat.dtype.itemsize
    if max_tb is None:
        # Keep the 2x double-buffered x window <= ~16 MiB (safe on v7x 64 MiB).
        max_tb = 1024 if x_itemsize <= 2 else 512

    TB, B_pad = _choose_batch_tile(B, max_tb=max_tb, min_grid=min_grid)
    if B_pad != B:
        x_flat = jnp.pad(x_flat, ((0, B_pad - B), (0, 0)))
    grid = (B_pad // TB,)

    # Lane-dense output: pad the final layer to a multiple of 128 columns so
    # the store is an unmasked full-lane vst; sliced back outside.
    NC_PAD = _round_up(nclasses, 128)
    w3p = jnp.pad(w3, ((0, 0), (0, NC_PAD - nclasses)))
    b3p = jnp.pad(b3, ((0, 0), (0, NC_PAD - nclasses)))

    # Layer-1 weights streamed in the same dtype as x (tiny one-time cast).
    w1s = w1 if w1.dtype == x_flat.dtype else w1.astype(x_flat.dtype)

    # Rough per-step VMEM need: 2 x-buffers, 2 out-buffers, lane-padded w1.
    need = (2 * TB * D * x_itemsize
            + 2 * TB * NC_PAD * 4
            + 2 * D * 128 * w1s.dtype.itemsize
            + (2 << 20))
    vmem_limit = int(max(32 << 20, need + (4 << 20)))

    cost = pl.CostEstimate(
        flops=int(2 * B_pad * (D * 32 + 32 * 32 + 32 * NC_PAD)),
        transcendentals=0,
        bytes_accessed=int(B_pad * D * x_itemsize
                           + B_pad * NC_PAD * 4
                           + D * 32 * w1s.dtype.itemsize
                           + (32 * 32 + 32 + 32 + 32 * NC_PAD + NC_PAD) * 4),
    )

    def run(optimized):
        def resident(shape):
            # Constant index_map -> VMEM-resident; single-buffer when possible.
            if optimized:
                return pl.BlockSpec(shape, lambda i: (0, 0),
                                    pipeline_mode=pl.Buffered(1))
            return pl.BlockSpec(shape, lambda i: (0, 0))

        extra = {"allow_input_fusion": [True] + [False] * 6} if optimized else {}
        compiler_params = pltpu.CompilerParams(
            dimension_semantics=("parallel",),
            vmem_limit_bytes=vmem_limit,
            **extra,
        )
        return pl.pallas_call(
            _mlp_kernel,
            out_shape=jax.ShapeDtypeStruct((B_pad, NC_PAD), jnp.float32),
            grid=grid,
            in_specs=[
                pl.BlockSpec((TB, D), lambda i: (i, 0)),      # x: streamed tile
                resident(w1s.shape), resident(b1.shape),      # resident weights
                resident(w2.shape), resident(b2.shape),
                resident(w3p.shape), resident(b3p.shape),
            ],
            out_specs=pl.BlockSpec((TB, NC_PAD), lambda i: (i, 0)),
            compiler_params=compiler_params,
            cost_estimate=cost,
        )(x_flat, w1s, b1, w2, b2, w3p, b3p)

    try:
        out_pad = jax.block_until_ready(run(True))
    except Exception:
        # Fallback for jax versions without Buffered(1) / allow_input_fusion.
        out_pad = run(False)

    return out_pad[:B, :nclasses]


def init_params(key, nchannels, nclasses):
    """Deterministic init mimicking torch.nn.Linear default (+/- 1/sqrt(fan_in)).
    Weights stored transposed relative to torch: (in_features, out_features)."""
    D = nchannels * 32 * 32
    dims = [(D, 32), (32, 32), (32, nclasses)]
    params = []
    for (fan_in, fan_out) in dims:
        key, kw, kb = jax.random.split(key, 3)
        bound = 1.0 / jnp.sqrt(fan_in)
        w = jax.random.uniform(kw, (fan_in, fan_out), jnp.float32, -bound, bound)
        b = jax.random.uniform(kb, (1, fan_out), jnp.float32, -bound, bound)
        params += [w, b]
    return tuple(params)


if __name__ == "__main__":
    nchannels, nclasses = 4, 10
    B = 2
    key = jax.random.PRNGKey(0)
    key, kx = jax.random.split(key)
    x = jax.random.normal(kx, (B, nchannels, 32, 32), jnp.float32)
    params = init_params(key, nchannels, nclasses)

    # f32-streamed path: matches PyTorch f32 Linear semantics.
    out = network_forward(x, params)
    jax.block_until_ready(out)
    assert out.shape == (B, nclasses)

    def ref(xv, p):
        w1, b1, w2, b2, w3, b3 = p
        h = xv.reshape(xv.shape[0], -1).astype(jnp.float32)
        h = jnp.maximum(
            jnp.dot(h, w1, precision=jax.lax.Precision.HIGHEST) + b1, 0.0)
        h = jnp.maximum(
            jnp.dot(h, w2, precision=jax.lax.Precision.HIGHEST) + b2, 0.0)
        return jnp.dot(h, w3, precision=jax.lax.Precision.HIGHEST) + b3

    expected = ref(x, params)
    err = jnp.max(jnp.abs(out - expected))
    assert jnp.allclose(out, expected, atol=2e-2, rtol=2e-2), err

    # bf16 fast path: producer hands over bf16 x, halving the dominant HBM
    # stream (the main perf lever on v5e/v6e/v7x).
    out_bf16 = network_forward(x.astype(jnp.bfloat16), params)
    jax.block_until_ready(out_bf16)
    err_bf16 = jnp.max(jnp.abs(out_bf16 - expected))
    assert out_bf16.shape == (B, nclasses)
    assert jnp.allclose(out_bf16, expected, atol=6e-2, rtol=6e-2), err_bf16

    print("KERNEL_OK")
</pallas_src>

<mosaic_0001>
module attributes {stable_mosaic.version = 11 : i64} {
  func.func @_mlp_kernel(%arg0: i32, %arg1: memref<8x4096xf32, #tpu.memory_space<vmem>>, %arg2: memref<4096x32xf32, #tpu.memory_space<vmem>>, %arg3: memref<1x32xf32, #tpu.memory_space<vmem>>, %arg4: memref<32x32xf32, #tpu.memory_space<vmem>>, %arg5: memref<1x32xf32, #tpu.memory_space<vmem>>, %arg6: memref<32x128xf32, #tpu.memory_space<vmem>>, %arg7: memref<1x128xf32, #tpu.memory_space<vmem>>, %arg8: memref<8x128xf32, #tpu.memory_space<vmem>>) attributes {dimension_semantics = [#tpu.dimension_semantics<parallel>], iteration_bounds = array<i64: 1>, scalar_prefetch = 0 : i64, scratch_operands = 0 : i64, tpu.core_type = #tpu.core_type<tc>, window_params = [{transform_indices = @transform_0, window_bounds = array<i64: 8, 4096>}, {pipeline_mode = #tpu.pipeline_mode<synchronous>, transform_indices = @transform_1, window_bounds = array<i64: 4096, 32>}, {pipeline_mode = #tpu.pipeline_mode<synchronous>, transform_indices = @transform_2, window_bounds = array<i64: 1, 32>}, {pipeline_mode = #tpu.pipeline_mode<synchronous>, transform_indices = @transform_3, window_bounds = array<i64: 32, 32>}, {pipeline_mode = #tpu.pipeline_mode<synchronous>, transform_indices = @transform_4, window_bounds = array<i64: 1, 32>}, {pipeline_mode = #tpu.pipeline_mode<synchronous>, transform_indices = @transform_5, window_bounds = array<i64: 32, 128>}, {pipeline_mode = #tpu.pipeline_mode<synchronous>, transform_indices = @transform_6, window_bounds = array<i64: 1, 128>}, {transform_indices = @transform_7, window_bounds = array<i64: 8, 128>}]} {
    %c0 = arith.constant 0 : index
    %c0_0 = arith.constant 0 : index
    %0 = vector.load %arg1[%c0, %c0_0] : memref<8x4096xf32, #tpu.memory_space<vmem>>, vector<8x4096xf32>
    %c0_1 = arith.constant 0 : index
    %c0_2 = arith.constant 0 : index
    %1 = vector.load %arg2[%c0_1, %c0_2] : memref<4096x32xf32, #tpu.memory_space<vmem>>, vector<4096x32xf32>
    %cst = arith.constant dense<0.000000e+00> : vector<8x32xf32>
    %2 = tpu.matmul %0, %1, %cst {dimension_numbers = #tpu.dot_dimension_numbers<[1], [0], [0], [1], [0, 0, 1, 1], [], []>} : vector<8x4096xf32>, vector<4096x32xf32>, vector<8x32xf32> -> vector<8x32xf32>
    %c0_3 = arith.constant 0 : index
    %c0_4 = arith.constant 0 : index
    %3 = vector.load %arg3[%c0_3, %c0_4] : memref<1x32xf32, #tpu.memory_space<vmem>>, vector<1x32xf32>
    %4 = vector.broadcast %3 : vector<1x32xf32> to vector<8x32xf32>
    %5 = arith.addf %2, %4 : vector<8x32xf32>
    %cst_5 = arith.constant 0.000000e+00 : f32
    %6 = vector.broadcast %cst_5 : f32 to vector<8x32xf32>
    %7 = arith.maximumf %5, %6 : vector<8x32xf32>
    %c0_6 = arith.constant 0 : index
    %c0_7 = arith.constant 0 : index
    %8 = vector.load %arg4[%c0_6, %c0_7] : memref<32x32xf32, #tpu.memory_space<vmem>>, vector<32x32xf32>
    %cst_8 = arith.constant dense<0.000000e+00> : vector<8x32xf32>
    %9 = tpu.matmul %7, %8, %cst_8 {dimension_numbers = #tpu.dot_dimension_numbers<[1], [0], [0], [1], [0, 0, 1, 1], [], []>} : vector<8x32xf32>, vector<32x32xf32>, vector<8x32xf32> -> vector<8x32xf32>
    %c0_9 = arith.constant 0 : index
    %c0_10 = arith.constant 0 : index
    %10 = vector.load %arg5[%c0_9, %c0_10] : memref<1x32xf32, #tpu.memory_space<vmem>>, vector<1x32xf32>
    %11 = vector.broadcast %10 : vector<1x32xf32> to vector<8x32xf32>
    %12 = arith.addf %9, %11 : vector<8x32xf32>
    %cst_11 = arith.constant 0.000000e+00 : f32
    %13 = vector.broadcast %cst_11 : f32 to vector<8x32xf32>
    %14 = arith.maximumf %12, %13 : vector<8x32xf32>
    %c0_12 = arith.constant 0 : index
    %c0_13 = arith.constant 0 : index
    %15 = vector.load %arg6[%c0_12, %c0_13] : memref<32x128xf32, #tpu.memory_space<vmem>>, vector<32x128xf32>
    %cst_14 = arith.constant dense<0.000000e+00> : vector<8x128xf32>
    %16 = tpu.matmul %14, %15, %cst_14 {dimension_numbers = #tpu.dot_dimension_numbers<[1], [0], [0], [1], [0, 0, 1, 1], [], []>} : vector<8x32xf32>, vector<32x128xf32>, vector<8x128xf32> -> vector<8x128xf32>
    %c0_15 = arith.constant 0 : index
    %c0_16 = arith.constant 0 : index
    %17 = vector.load %arg7[%c0_15, %c0_16] : memref<1x128xf32, #tpu.memory_space<vmem>>, vector<1x128xf32>
    %18 = vector.broadcast %17 : vector<1x128xf32> to vector<8x128xf32>
    %19 = arith.addf %16, %18 : vector<8x128xf32>
    %c0_17 = arith.constant 0 : index
    %c0_18 = arith.constant 0 : index
    %20 = vector.load %arg8[%c0_17, %c0_18] : memref<8x128xf32, #tpu.memory_space<vmem>>, vector<8x128xf32>
    tpu.vector_store %arg8[%c0_17, %c0_18], %19 {strides = array<i32>} : memref<8x128xf32, #tpu.memory_space<vmem>>, vector<8x128xf32>,
    return
  }
  func.func @transform_0(%arg0: i32) -> (i32, i32) {
    %c0_i32 = arith.constant 0 : i32
    %c0_i32_0 = arith.constant 0 : i32
    return %arg0, %c0_i32 : i32, i32
  }
  func.func @transform_1(%arg0: i32) -> (i32, i32) {
    %c0_i32 = arith.constant 0 : i32
    %c0_i32_0 = arith.constant 0 : i32
    %c0_i32_1 = arith.constant 0 : i32
    return %c0_i32, %c0_i32_0 : i32, i32
  }
  func.func @transform_2(%arg0: i32) -> (i32, i32) {
    %c0_i32 = arith.constant 0 : i32
    %c0_i32_0 = arith.constant 0 : i32
    %c0_i32_1 = arith.constant 0 : i32
    return %c0_i32, %c0_i32_0 : i32, i32
  }
  func.func @transform_3(%arg0: i32) -> (i32, i32) {
    %c0_i32 = arith.constant 0 : i32
    %c0_i32_0 = arith.constant 0 : i32
    %c0_i32_1 = arith.constant 0 : i32
    return %c0_i32, %c0_i32_0 : i32, i32
  }
  func.func @transform_4(%arg0: i32) -> (i32, i32) {
    %c0_i32 = arith.constant 0 : i32
    %c0_i32_0 = arith.constant 0 : i32
    %c0_i32_1 = arith.constant 0 : i32
    return %c0_i32, %c0_i32_0 : i32, i32
  }
  func.func @transform_5(%arg0: i32) -> (i32, i32) {
    %c0_i32 = arith.constant 0 : i32
    %c0_i32_0 = arith.constant 0 : i32
    %c0_i32_1 = arith.constant 0 : i32
    return %c0_i32, %c0_i32_0 : i32, i32
  }
  func.func @transform_6(%arg0: i32) -> (i32, i32) {
    %c0_i32 = arith.constant 0 : i32
    %c0_i32_0 = arith.constant 0 : i32
    %c0_i32_1 = arith.constant 0 : i32
    return %c0_i32, %c0_i32_0 : i32, i32
  }
  func.func @transform_7(%arg0: i32) -> (i32, i32) {
    %c0_i32 = arith.constant 0 : i32
    %c0_i32_0 = arith.constant 0 : i32
    return %arg0, %c0_i32 : i32, i32
  }
}

module attributes {stable_mosaic.version = 11 : i64} {
  func.func @_mlp_kernel(%arg0: i32, %arg1: memref<8x4096xf32, #tpu.memory_space<vmem>>, %arg2: memref<4096x32xf32, #tpu.memory_space<vmem>>, %arg3: memref<1x32xf32, #tpu.memory_space<vmem>>, %arg4: memref<32x32xf32, #tpu.memory_space<vmem>>, %arg5: memref<1x32xf32, #tpu.memory_space<vmem>>, %arg6: memref<32x128xf32, #tpu.memory_space<vmem>>, %arg7: memref<1x128xf32, #tpu.memory_space<vmem>>, %arg8: memref<8x128xf32, #tpu.memory_space<vmem>>) attributes {dimension_semantics = [#tpu.dimension_semantics<parallel>], iteration_bounds = array<i64: 1>, scalar_prefetch = 0 : i64, scratch_operands = 0 : i64, tpu.core_type = #tpu.core_type<tc>, window_params = [{transform_indices = @transform_0, window_bounds = array<i64: 8, 4096>}, {pipeline_mode = #tpu.pipeline_mode<synchronous>, transform_indices = @transform_1, window_bounds = array<i64: 4096, 32>}, {pipeline_mode = #tpu.pipeline_mode<synchronous>, transform_indices = @transform_2, window_bounds = array<i64: 1, 32>}, {pipeline_mode = #tpu.pipeline_mode<synchronous>, transform_indices = @transform_3, window_bounds = array<i64: 32, 32>}, {pipeline_mode = #tpu.pipeline_mode<synchronous>, transform_indices = @transform_4, window_bounds = array<i64: 1, 32>}, {pipeline_mode = #tpu.pipeline_mode<synchronous>, transform_indices = @transform_5, window_bounds = array<i64: 32, 128>}, {pipeline_mode = #tpu.pipeline_mode<synchronous>, transform_indices = @transform_6, window_bounds = array<i64: 1, 128>}, {transform_indices = @transform_7, window_bounds = array<i64: 8, 128>}]} {
    %c0 = arith.constant 0 : index
    %c0_0 = arith.constant 0 : index
    %0 = vector.load %arg1[%c0, %c0_0] : memref<8x4096xf32, #tpu.memory_space<vmem>>, vector<8x4096xf32>
    %c0_1 = arith.constant 0 : index
    %c0_2 = arith.constant 0 : index
    %1 = vector.load %arg2[%c0_1, %c0_2] : memref<4096x32xf32, #tpu.memory_space<vmem>>, vector<4096x32xf32>
    %cst = arith.constant dense<0.000000e+00> : vector<8x32xf32>
    %2 = tpu.matmul %0, %1, %cst {dimension_numbers = #tpu.dot_dimension_numbers<[1], [0], [0], [1], [0, 0, 1, 1], [], []>} : vector<8x4096xf32>, vector<4096x32xf32>, vector<8x32xf32> -> vector<8x32xf32>
    %c0_3 = arith.constant 0 : index
    %c0_4 = arith.constant 0 : index
    %3 = vector.load %arg3[%c0_3, %c0_4] : memref<1x32xf32, #tpu.memory_space<vmem>>, vector<1x32xf32>
    %4 = vector.broadcast %3 : vector<1x32xf32> to vector<8x32xf32>
    %5 = arith.addf %2, %4 : vector<8x32xf32>
    %cst_5 = arith.constant 0.000000e+00 : f32
    %6 = vector.broadcast %cst_5 : f32 to vector<8x32xf32>
    %7 = arith.maximumf %5, %6 : vector<8x32xf32>
    %c0_6 = arith.constant 0 : index
    %c0_7 = arith.constant 0 : index
    %8 = vector.load %arg4[%c0_6, %c0_7] : memref<32x32xf32, #tpu.memory_space<vmem>>, vector<32x32xf32>
    %cst_8 = arith.constant dense<0.000000e+00> : vector<8x32xf32>
    %9 = tpu.matmul %7, %8, %cst_8 {dimension_numbers = #tpu.dot_dimension_numbers<[1], [0], [0], [1], [0, 0, 1, 1], [], []>} : vector<8x32xf32>, vector<32x32xf32>, vector<8x32xf32> -> vector<8x32xf32>
    %c0_9 = arith.constant 0 : index
    %c0_10 = arith.constant 0 : index
    %10 = vector.load %arg5[%c0_9, %c0_10] : memref<1x32xf32, #tpu.memory_space<vmem>>, vector<1x32xf32>
    %11 = vector.broadcast %10 : vector<1x32xf32> to vector<8x32xf32>
    %12 = arith.addf %9, %11 : vector<8x32xf32>
    %cst_11 = arith.constant 0.000000e+00 : f32
    %13 = vector.broadcast %cst_11 : f32 to vector<8x32xf32>
    %14 = arith.maximumf %12, %13 : vector<8x32xf32>
    %c0_12 = arith.constant 0 : index
    %c0_13 = arith.constant 0 : index
    %15 = vector.load %arg6[%c0_12, %c0_13] : memref<32x128xf32, #tpu.memory_space<vmem>>, vector<32x128xf32>
    %cst_14 = arith.constant dense<0.000000e+00> : vector<8x128xf32>
    %16 = tpu.matmul %14, %15, %cst_14 {dimension_numbers = #tpu.dot_dimension_numbers<[1], [0], [0], [1], [0, 0, 1, 1], [], []>} : vector<8x32xf32>, vector<32x128xf32>, vector<8x128xf32> -> vector<8x128xf32>
    %c0_15 = arith.constant 0 : index
    %c0_16 = arith.constant 0 : index
    %17 = vector.load %arg7[%c0_15, %c0_16] : memref<1x128xf32, #tpu.memory_space<vmem>>, vector<1x128xf32>
    %18 = vector.broadcast %17 : vector<1x128xf32> to vector<8x128xf32>
    %19 = arith.addf %16, %18 : vector<8x128xf32>
    %c0_17 = arith.constant 0 : index
    %c0_18 = arith.constant 0 : index
    %20 = vector.load %arg8[%c0_17, %c0_18] : memref<8x128xf32, #tpu.memory_space<vmem>>, vector<8x128xf32>
    tpu.vector_store %arg8[%c0_17, %c0_18], %19 {strides = array<i32>} : memref<8x128xf32, #tpu.memory_space<vmem>>, vector<8x128xf32>,
    return
  }
  func.func @transform_0(%arg0: i32) -> (i32, i32) {
    %c0_i32 = arith.constant 0 : i32
    %c0_i32_0 = arith.constant 0 : i32
    return %arg0, %c0_i32 : i32, i32
  }
  func.func @transform_1(%arg0: i32) -> (i32, i32) {
    %c0_i32 = arith.constant 0 : i32
    %c0_i32_0 = arith.constant 0 : i32
    %c0_i32_1 = arith.constant 0 : i32
    return %c0_i32, %c0_i32_0 : i32, i32
  }
  func.func @transform_2(%arg0: i32) -> (i32, i32) {
    %c0_i32 = arith.constant 0 : i32
    %c0_i32_0 = arith.constant 0 : i32
    %c0_i32_1 = arith.constant 0 : i32
    return %c0_i32, %c0_i32_0 : i32, i32
  }
  func.func @transform_3(%arg0: i32) -> (i32, i32) {
    %c0_i32 = arith.constant 0 : i32
    %c0_i32_0 = arith.constant 0 : i32
    %c0_i32_1 = arith.constant 0 : i32
    return %c0_i32, %c0_i32_0 : i32, i32
  }
  func.func @transform_4(%arg0: i32) -> (i32, i32) {
    %c0_i32 = arith.constant 0 : i32
    %c0_i32_0 = arith.constant 0 : i32
    %c0_i32_1 = arith.constant 0 : i32
    return %c0_i32, %c0_i32_0 : i32, i32
  }
  func.func @transform_5(%arg0: i32) -> (i32, i32) {
    %c0_i32 = arith.constant 0 : i32
    %c0_i32_0 = arith.constant 0 : i32
    %c0_i32_1 = arith.constant 0 : i32
    return %c0_i32, %c0_i32_0 : i32, i32
  }
  func.func @transform_6(%arg0: i32) -> (i32, i32) {
    %c0_i32 = arith.constant 0 : i32
    %c0_i32_0 = arith.constant 0 : i32
    %c0_i32_1 = arith.constant 0 : i32
    return %c0_i32, %c0_i32_0 : i32, i32
  }
  func.func @transform_7(%arg0: i32) -> (i32, i32) {
    %c0_i32 = arith.constant 0 : i32
    %c0_i32_0 = arith.constant 0 : i32
    return %arg0, %c0_i32 : i32, i32
  }
}

</mosaic_0001>

<llo_original>
// kernel: tpu_custom_call.1
$region0: #{tpu_custom_call.1}
  #allocation0 [shape = 'u32[]', space=smem, size = 0x4, offset = 0x4, fixed_abs, tag = 'smem constant byte address 0x4 - core index']
  #allocation1 [shape = 'u32[144,128]{1,0:T(1,128)}', space=vmem, size = 0x12000, scoped, tag = 'internal scratch']
  %s0 = inlined_call_operand.vmem [shape: f32[8,4096], index: 0, kind: input, shape index: {}]
  %s1 = inlined_call_operand.vmem [shape: f32[4096,32], index: 1, kind: input, shape index: {}]
  %s2 = inlined_call_operand.vmem [shape: f32[1,32], index: 2, kind: input, shape index: {}]
  %s3 = inlined_call_operand.vmem [shape: f32[32,32], index: 3, kind: input, shape index: {}]
  %s4 = inlined_call_operand.vmem [shape: f32[1,32], index: 4, kind: input, shape index: {}]
  %s5 = inlined_call_operand.vmem [shape: f32[32,128], index: 5, kind: input, shape index: {}]
  %s6 = inlined_call_operand.vmem [shape: f32[1,128], index: 6, kind: input, shape index: {}]
  %s7 = inlined_call_operand.hbm [shape: f32[8,128], index: 7, kind: output, shape index: {}]
  %s8 = sld [smem:[#allocation0]]
  $region38: #{tpu_custom_call.1} parent=0
    _
  %s10 = ssub.s32 1, %s8
  %s11 = scalar_select 0, %s10, %s8
  $region1: #{tpu_custom_call.1} parent=0
    #allocation2 [shape = 'u8[4096]{0}', space=vmem, size = 0x1000, scoped, tag = 'output window, operand 0, single buffered']
    #allocation3 [shape = 's32[1]{0}', space=sflag, size = 0x4, scoped, tag = 'scoped memory for tpu_custom_call.1']
    %12 = vsyncpa [#allocation3], 0
    // Predicated region
    $region2: #{tpu_custom_call.1} parent=1 // pred_check
      _
    $region3: #{tpu_custom_call.1} parent=1 // pred_check_branch
      %14 = sbr.rel (0) target = $region5
    $region4: #{tpu_custom_call.1} parent=1 // pred_region
      _
    $region5: #{tpu_custom_call.1} parent=1 // pred_fallthru
      _
    // Predicated region
    $region6: #{tpu_custom_call.1} parent=1 // pred_check
      _
    $region7: #{tpu_custom_call.1} parent=1 // pred_check_branch
      %16 = sbr.rel (0) target = $region9
    $region8: #{tpu_custom_call.1} parent=1 // pred_region
      _
    $region9: #{tpu_custom_call.1} parent=1 // pred_fallthru
      _
    // Predicated region
    $region10: #{tpu_custom_call.1} parent=1 // pred_check
      _
    $region11: #{tpu_custom_call.1} parent=1 // pred_check_branch
      %18 = sbr.rel (0) target = $region13
    $region12: #{tpu_custom_call.1} parent=1 // pred_region
      _
    $region13: #{tpu_custom_call.1} parent=1 // pred_fallthru
      _
    // Predicated region
    $region14: #{tpu_custom_call.1} parent=1 // pred_check
      _
    $region15: #{tpu_custom_call.1} parent=1 // pred_check_branch
      %20 = sbr.rel (0) target = $region17
    $region16: #{tpu_custom_call.1} parent=1 // pred_region
      _
    $region17: #{tpu_custom_call.1} parent=1 // pred_fallthru
      _
    // Predicated region
    $region18: #{tpu_custom_call.1} parent=1 // pred_check
      _
    $region19: #{tpu_custom_call.1} parent=1 // pred_check_branch
      %22 = sbr.rel (0) target = $region21
    $region20: #{tpu_custom_call.1} parent=1 // pred_region
      _
    $region21: #{tpu_custom_call.1} parent=1 // pred_fallthru
      _
    // Predicated region
    $region22: #{tpu_custom_call.1} parent=1 // pred_check
      _
    $region23: #{tpu_custom_call.1} parent=1 // pred_check_branch
      %24 = sbr.rel (0) target = $region25
    $region24: #{tpu_custom_call.1} parent=1 // pred_region
      _
    $region25: #{tpu_custom_call.1} parent=1 // pred_fallthru
      _
    // Predicated region
    $region26: #{tpu_custom_call.1} parent=1 // pred_check
      _
    $region27: #{tpu_custom_call.1} parent=1 // pred_check_branch
      %26 = sbr.rel (0) target = $region29
    $region28: #{tpu_custom_call.1} parent=1 // pred_region
      _
    $region29: #{tpu_custom_call.1} parent=1 // pred_fallthru
      _
    %v27 = vld [vmem:[%s0] sm:$0xff]
    %v28 = vld [vmem:[%s0 + $0x8] sm:$0xff]
    %v29 = vld [vmem:[%s0 + $0x10] sm:$0xff]
    %v30 = vld [vmem:[%s0 + $0x18] sm:$0xff]
    %v31 = vld [vmem:[%s0 + $0x20] sm:$0xff]
    %v32 = vld [vmem:[%s0 + $0x28] sm:$0xff]
    %v33 = vld [vmem:[%s0 + $0x30] sm:$0xff]
    %v34 = vld [vmem:[%s0 + $0x38] sm:$0xff]
    %v35 = vld [vmem:[%s0 + $0x40] sm:$0xff]
    %v36 = vld [vmem:[%s0 + $0x48] sm:$0xff]
    %v37 = vld [vmem:[%s0 + $0x50] sm:$0xff]
    %v38 = vld [vmem:[%s0 + $0x58] sm:$0xff]
    %v39 = vld [vmem:[%s0 + $0x60] sm:$0xff]
    %v40 = vld [vmem:[%s0 + $0x68] sm:$0xff]
    %v41 = vld [vmem:[%s0 + $0x70] sm:$0xff]
    %v42 = vld [vmem:[%s0 + $0x78] sm:$0xff]
    %v43 = vld [vmem:[%s0 + $0x80] sm:$0xff]
    %v44 = vld [vmem:[%s0 + $0x88] sm:$0xff]
    %v45 = vld [vmem:[%s0 + $0x90] sm:$0xff]
    %v46 = vld [vmem:[%s0 + $0x98] sm:$0xff]
    %v47 = vld [vmem:[%s0 + $0xa0] sm:$0xff]
    %v48 = vld [vmem:[%s0 + $0xa8] sm:$0xff]
    %v49 = vld [vmem:[%s0 + $0xb0] sm:$0xff]
    %v50 = vld [vmem:[%s0 + $0xb8] sm:$0xff]
    %v51 = vld [vmem:[%s0 + $0xc0] sm:$0xff]
    %v52 = vld [vmem:[%s0 + $0xc8] sm:$0xff]
    %v53 = vld [vmem:[%s0 + $0xd0] sm:$0xff]
    %v54 = vld [vmem:[%s0 + $0xd8] sm:$0xff]
    %v55 = vld [vmem:[%s0 + $0xe0] sm:$0xff]
    %v56 = vld [vmem:[%s0 + $0xe8] sm:$0xff]
    %v57 = vld [vmem:[%s0 + $0xf0] sm:$0xff]
    %v58 = vld [vmem:[%s0 + $0xf8] sm:$0xff]
    %v59 = vld [vmem:[%s1] sm:$0xff]
    %v60 = vld [vmem:[%s1 + $0x8] sm:$0xff]
    %v61 = vld [vmem:[%s1 + $0x10] sm:$0xff]
    %v62 = vld [vmem:[%s1 + $0x18] sm:$0xff]
    %v63 = vld [vmem:[%s1 + $0x20] sm:$0xff]
    %v64 = vld [vmem:[%s1 + $0x28] sm:$0xff]
    %v65 = vld [vmem:[%s1 + $0x30] sm:$0xff]
    %v66 = vld [vmem:[%s1 + $0x38] sm:$0xff]
    %v67 = vld [vmem:[%s1 + $0x40] sm:$0xff]
    %v68 = vld [vmem:[%s1 + $0x48] sm:$0xff]
    %v69 = vld [vmem:[%s1 + $0x50] sm:$0xff]
    %v70 = vld [vmem:[%s1 + $0x58] sm:$0xff]
    %v71 = vld [vmem:[%s1 + $0x60] sm:$0xff]
    %v72 = vld [vmem:[%s1 + $0x68] sm:$0xff]
    %v73 = vld [vmem:[%s1 + $0x70] sm:$0xff]
    %v74 = vld [vmem:[%s1 + $0x78] sm:$0xff]
    %v75 = vld [vmem:[%s1 + $0x80] sm:$0xff]
    %v76 = vld [vmem:[%s1 + $0x88] sm:$0xff]
    %v77 = vld [vmem:[%s1 + $0x90] sm:$0xff]
    %v78 = vld [vmem:[%s1 + $0x98] sm:$0xff]
    %v79 = vld [vmem:[%s1 + $0xa0] sm:$0xff]
    %v80 = vld [vmem:[%s1 + $0xa8] sm:$0xff]
    %v81 = vld [vmem:[%s1 + $0xb0] sm:$0xff]
    %v82 = vld [vmem:[%s1 + $0xb8] sm:$0xff]
    %v83 = vld [vmem:[%s1 + $0xc0] sm:$0xff]
    %v84 = vld [vmem:[%s1 + $0xc8] sm:$0xff]
    %v85 = vld [vmem:[%s1 + $0xd0] sm:$0xff]
    %v86 = vld [vmem:[%s1 + $0xd8] sm:$0xff]
    %v87 = vld [vmem:[%s1 + $0xe0] sm:$0xff]
    %v88 = vld [vmem:[%s1 + $0xe8] sm:$0xff]
    %v89 = vld [vmem:[%s1 + $0xf0] sm:$0xff]
    %v90 = vld [vmem:[%s1 + $0xf8] sm:$0xff]
    %v91 = vld [vmem:[%s1 + $0x100] sm:$0xff]
    %v92 = vld [vmem:[%s1 + $0x108] sm:$0xff]
    %v93 = vld [vmem:[%s1 + $0x110] sm:$0xff]
    %v94 = vld [vmem:[%s1 + $0x118] sm:$0xff]
    %v95 = vld [vmem:[%s1 + $0x120] sm:$0xff]
    %v96 = vld [vmem:[%s1 + $0x128] sm:$0xff]
    %v97 = vld [vmem:[%s1 + $0x130] sm:$0xff]
    %v98 = vld [vmem:[%s1 + $0x138] sm:$0xff]
    %v99 = vld [vmem:[%s1 + $0x140] sm:$0xff]
    %v100 = vld [vmem:[%s1 + $0x148] sm:$0xff]
    %v101 = vld [vmem:[%s1 + $0x150] sm:$0xff]
    %v102 = vld [vmem:[%s1 + $0x158] sm:$0xff]
    %v103 = vld [vmem:[%s1 + $0x160] sm:$0xff]
    %v104 = vld [vmem:[%s1 + $0x168] sm:$0xff]
    %v105 = vld [vmem:[%s1 + $0x170] sm:$0xff]
    %v106 = vld [vmem:[%s1 + $0x178] sm:$0xff]
    %v107 = vld [vmem:[%s1 + $0x180] sm:$0xff]
    %v108 = vld [vmem:[%s1 + $0x188] sm:$0xff]
    %v109 = vld [vmem:[%s1 + $0x190] sm:$0xff]
    %v110 = vld [vmem:[%s1 + $0x198] sm:$0xff]
    %v111 = vld [vmem:[%s1 + $0x1a0] sm:$0xff]
    %v112 = vld [vmem:[%s1 + $0x1a8] sm:$0xff]
    %v113 = vld [vmem:[%s1 + $0x1b0] sm:$0xff]
    %v114 = vld [vmem:[%s1 + $0x1b8] sm:$0xff]
    %v115 = vld [vmem:[%s1 + $0x1c0] sm:$0xff]
    %v116 = vld [vmem:[%s1 + $0x1c8] sm:$0xff]
    %v117 = vld [vmem:[%s1 + $0x1d0] sm:$0xff]
    %v118 = vld [vmem:[%s1 + $0x1d8] sm:$0xff]
    %v119 = vld [vmem:[%s1 + $0x1e0] sm:$0xff]
    %v120 = vld [vmem:[%s1 + $0x1e8] sm:$0xff]
    %v121 = vld [vmem:[%s1 + $0x1f0] sm:$0xff]
    %v122 = vld [vmem:[%s1 + $0x1f8] sm:$0xff]
    %v123 = vld [vmem:[%s1 + $0x200] sm:$0xff]
    %v124 = vld [vmem:[%s1 + $0x208] sm:$0xff]
    %v125 = vld [vmem:[%s1 + $0x210] sm:$0xff]
    %v126 = vld [vmem:[%s1 + $0x218] sm:$0xff]
    %v127 = vld [vmem:[%s1 + $0x220] sm:$0xff]
    %v128 = vld [vmem:[%s1 + $0x228] sm:$0xff]
    %v129 = vld [vmem:[%s1 + $0x230] sm:$0xff]
    %v130 = vld [vmem:[%s1 + $0x238] sm:$0xff]
    %v131 = vld [vmem:[%s1 + $0x240] sm:$0xff]
    %v132 = vld [vmem:[%s1 + $0x248] sm:$0xff]
    %v133 = vld [vmem:[%s1 + $0x250] sm:$0xff]
    %v134 = vld [vmem:[%s1 + $0x258] sm:$0xff]
    %v135 = vld [vmem:[%s1 + $0x260] sm:$0xff]
    %v136 = vld [vmem:[%s1 + $0x268] sm:$0xff]
    %v137 = vld [vmem:[%s1 + $0x270] sm:$0xff]
    %v138 = vld [vmem:[%s1 + $0x278] sm:$0xff]
    %v139 = vld [vmem:[%s1 + $0x280] sm:$0xff]
    %v140 = vld [vmem:[%s1 + $0x288] sm:$0xff]
    %v141 = vld [vmem:[%s1 + $0x290] sm:$0xff]
    %v142 = vld [vmem:[%s1 + $0x298] sm:$0xff]
    %v143 = vld [vmem:[%s1 + $0x2a0] sm:$0xff]
    %v144 = vld [vmem:[%s1 + $0x2a8] sm:$0xff]
    %v145 = vld [vmem:[%s1 + $0x2b0] sm:$0xff]
    %v146 = vld [vmem:[%s1 + $0x2b8] sm:$0xff]
    %v147 = vld [vmem:[%s1 + $0x2c0] sm:$0xff]
    %v148 = vld [vmem:[%s1 + $0x2c8] sm:$0xff]
    %v149 = vld [vmem:[%s1 + $0x2d0] sm:$0xff]
    %v150 = vld [vmem:[%s1 + $0x2d8] sm:$0xff]
    %v151 = vld [vmem:[%s1 + $0x2e0] sm:$0xff]
    %v152 = vld [vmem:[%s1 + $0x2e8] sm:$0xff]
    %v153 = vld [vmem:[%s1 + $0x2f0] sm:$0xff]
    %v154 = vld [vmem:[%s1 + $0x2f8] sm:$0xff]
    %v155 = vld [vmem:[%s1 + $0x300] sm:$0xff]
    %v156 = vld [vmem:[%s1 + $0x308] sm:$0xff]
    %v157 = vld [vmem:[%s1 + $0x310] sm:$0xff]
    %v158 = vld [vmem:[%s1 + $0x318] sm:$0xff]
    %v159 = vld [vmem:[%s1 + $0x320] sm:$0xff]
    %v160 = vld [vmem:[%s1 + $0x328] sm:$0xff]
    %v161 = vld [vmem:[%s1 + $0x330] sm:$0xff]
    %v162 = vld [vmem:[%s1 + $0x338] sm:$0xff]
    %v163 = vld [vmem:[%s1 + $0x340] sm:$0xff]
    %v164 = vld [vmem:[%s1 + $0x348] sm:$0xff]
    %v165 = vld [vmem:[%s1 + $0x350] sm:$0xff]
    %v166 = vld [vmem:[%s1 + $0x358] sm:$0xff]
    %v167 = vld [vmem:[%s1 + $0x360] sm:$0xff]
    %v168 = vld [vmem:[%s1 + $0x368] sm:$0xff]
    %v169 = vld [vmem:[%s1 + $0x370] sm:$0xff]
    %v170 = vld [vmem:[%s1 + $0x378] sm:$0xff]
    %v171 = vld [vmem:[%s1 + $0x380] sm:$0xff]
    %v172 = vld [vmem:[%s1 + $0x388] sm:$0xff]
    %v173 = vld [vmem:[%s1 + $0x390] sm:$0xff]
    %v174 = vld [vmem:[%s1 + $0x398] sm:$0xff]
    %v175 = vld [vmem:[%s1 + $0x3a0] sm:$0xff]
    %v176 = vld [vmem:[%s1 + $0x3a8] sm:$0xff]
    %v177 = vld [vmem:[%s1 + $0x3b0] sm:$0xff]
    %v178 = vld [vmem:[%s1 + $0x3b8] sm:$0xff]
    %v179 = vld [vmem:[%s1 + $0x3c0] sm:$0xff]
    %v180 = vld [vmem:[%s1 + $0x3c8] sm:$0xff]
    %v181 = vld [vmem:[%s1 + $0x3d0] sm:$0xff]
    %v182 = vld [vmem:[%s1 + $0x3d8] sm:$0xff]
    %v183 = vld [vmem:[%s1 + $0x3e0] sm:$0xff]
    %v184 = vld [vmem:[%s1 + $0x3e8] sm:$0xff]
    %v185 = vld [vmem:[%s1 + $0x3f0] sm:$0xff]
    %v186 = vld [vmem:[%s1 + $0x3f8] sm:$0xff]
    %v187 = vld [vmem:[%s1 + $0x400] sm:$0xff]
    %v188 = vld [vmem:[%s1 + $0x408] sm:$0xff]
    %v189 = vld [vmem:[%s1 + $0x410] sm:$0xff]
    %v190 = vld [vmem:[%s1 + $0x418] sm:$0xff]
    %v191 = vld [vmem:[%s1 + $0x420] sm:$0xff]
    %v192 = vld [vmem:[%s1 + $0x428] sm:$0xff]
    %v193 = vld [vmem:[%s1 + $0x430] sm:$0xff]
    %v194 = vld [vmem:[%s1 + $0x438] sm:$0xff]
    %v195 = vld [vmem:[%s1 + $0x440] sm:$0xff]
    %v196 = vld [vmem:[%s1 + $0x448] sm:$0xff]
    %v197 = vld [vmem:[%s1 + $0x450] sm:$0xff]
    %v198 = vld [vmem:[%s1 + $0x458] sm:$0xff]
    %v199 = vld [vmem:[%s1 + $0x460] sm:$0xff]
    %v200 = vld [vmem:[%s1 + $0x468] sm:$0xff]
    %v201 = vld [vmem:[%s1 + $0x470] sm:$0xff]
    %v202 = vld [vmem:[%s1 + $0x478] sm:$0xff]
    %v203 = vld [vmem:[%s1 + $0x480] sm:$0xff]
    %v204 = vld [vmem:[%s1 + $0x488] sm:$0xff]
    %v205 = vld [vmem:[%s1 + $0x490] sm:$0xff]
    %v206 = vld [vmem:[%s1 + $0x498] sm:$0xff]
    %v207 = vld [vmem:[%s1 + $0x4a0] sm:$0xff]
    %v208 = vld [vmem:[%s1 + $0x4a8] sm:$0xff]
    %v209 = vld [vmem:[%s1 + $0x4b0] sm:$0xff]
    %v210 = vld [vmem:[%s1 + $0x4b8] sm:$0xff]
    %v211 = vld [vmem:[%s1 + $0x4c0] sm:$0xff]
    %v212 = vld [vmem:[%s1 + $0x4c8] sm:$0xff]
    %v213 = vld [vmem:[%s1 + $0x4d0] sm:$0xff]
    %v214 = vld [vmem:[%s1 + $0x4d8] sm:$0xff]
    %v215 = vld [vmem:[%s1 + $0x4e0] sm:$0xff]
    %v216 = vld [vmem:[%s1 + $0x4e8] sm:$0xff]
    %v217 = vld [vmem:[%s1 + $0x4f0] sm:$0xff]
    %v218 = vld [vmem:[%s1 + $0x4f8] sm:$0xff]
    %v219 = vld [vmem:[%s1 + $0x500] sm:$0xff]
    %v220 = vld [vmem:[%s1 + $0x508] sm:$0xff]
    %v221 = vld [vmem:[%s1 + $0x510] sm:$0xff]
    %v222 = vld [vmem:[%s1 + $0x518] sm:$0xff]
    %v223 = vld [vmem:[%s1 + $0x520] sm:$0xff]
    %v224 = vld [vmem:[%s1 + $0x528] sm:$0xff]
    %v225 = vld [vmem:[%s1 + $0x530] sm:$0xff]
    %v226 = vld [vmem:[%s1 + $0x538] sm:$0xff]
    %v227 = vld [vmem:[%s1 + $0x540] sm:$0xff]
    %v228 = vld [vmem:[%s1 + $0x548] sm:$0xff]
    %v229 = vld [vmem:[%s1 + $0x550] sm:$0xff]
    %v230 = vld [vmem:[%s1 + $0x558] sm:$0xff]
    %v231 = vld [vmem:[%s1 + $0x560] sm:$0xff]
    %v232 = vld [vmem:[%s1 + $0x568] sm:$0xff]
    %v233 = vld [vmem:[%s1 + $0x570] sm:$0xff]
    %v234 = vld [vmem:[%s1 + $0x578] sm:$0xff]
    %v235 = vld [vmem:[%s1 + $0x580] sm:$0xff]
    %v236 = vld [vmem:[%s1 + $0x588] sm:$0xff]
    %v237 = vld [vmem:[%s1 + $0x590] sm:$0xff]
    %v238 = vld [vmem:[%s1 + $0x598] sm:$0xff]
    %v239 = vld [vmem:[%s1 + $0x5a0] sm:$0xff]
    %v240 = vld [vmem:[%s1 + $0x5a8] sm:$0xff]
    %v241 = vld [vmem:[%s1 + $0x5b0] sm:$0xff]
    %v242 = vld [vmem:[%s1 + $0x5b8] sm:$0xff]
    %v243 = vld [vmem:[%s1 + $0x5c0] sm:$0xff]
    %v244 = vld [vmem:[%s1 + $0x5c8] sm:$0xff]
    %v245 = vld [vmem:[%s1 + $0x5d0] sm:$0xff]
    %v246 = vld [vmem:[%s1 + $0x5d8] sm:$0xff]
    %v247 = vld [vmem:[%s1 + $0x5e0] sm:$0xff]
    %v248 = vld [vmem:[%s1 + $0x5e8] sm:$0xff]
    %v249 = vld [vmem:[%s1 + $0x5f0] sm:$0xff]
    %v250 = vld [vmem:[%s1 + $0x5f8] sm:$0xff]
    %v251 = vld [vmem:[%s1 + $0x600] sm:$0xff]
    %v252 = vld [vmem:[%s1 + $0x608] sm:$0xff]
    %v253 = vld [vmem:[%s1 + $0x610] sm:$0xff]
    %v254 = vld [vmem:[%s1 + $0x618] sm:$0xff]
    %v255 = vld [vmem:[%s1 + $0x620] sm:$0xff]
    %v256 = vld [vmem:[%s1 + $0x628] sm:$0xff]
    %v257 = vld [vmem:[%s1 + $0x630] sm:$0xff]
    %v258 = vld [vmem:[%s1 + $0x638] sm:$0xff]
    %v259 = vld [vmem:[%s1 + $0x640] sm:$0xff]
    %v260 = vld [vmem:[%s1 + $0x648] sm:$0xff]
    %v261 = vld [vmem:[%s1 + $0x650] sm:$0xff]
    %v262 = vld [vmem:[%s1 + $0x658] sm:$0xff]
    %v263 = vld [vmem:[%s1 + $0x660] sm:$0xff]
    %v264 = vld [vmem:[%s1 + $0x668] sm:$0xff]
    %v265 = vld [vmem:[%s1 + $0x670] sm:$0xff]
    %v266 = vld [vmem:[%s1 + $0x678] sm:$0xff]
    %v267 = vld [vmem:[%s1 + $0x680] sm:$0xff]
    %v268 = vld [vmem:[%s1 + $0x688] sm:$0xff]
    %v269 = vld [vmem:[%s1 + $0x690] sm:$0xff]
    %v270 = vld [vmem:[%s1 + $0x698] sm:$0xff]
    %v271 = vld [vmem:[%s1 + $0x6a0] sm:$0xff]
    %v272 = vld [vmem:[%s1 + $0x6a8] sm:$0xff]
    %v273 = vld [vmem:[%s1 + $0x6b0] sm:$0xff]
    %v274 = vld [vmem:[%s1 + $0x6b8] sm:$0xff]
    %v275 = vld [vmem:[%s1 + $0x6c0] sm:$0xff]
    %v276 = vld [vmem:[%s1 + $0x6c8] sm:$0xff]
    %v277 = vld [vmem:[%s1 + $0x6d0] sm:$0xff]
    %v278 = vld [vmem:[%s1 + $0x6d8] sm:$0xff]
    %v279 = vld [vmem:[%s1 + $0x6e0] sm:$0xff]
    %v280 = vld [vmem:[%s1 + $0x6e8] sm:$0xff]
    %v281 = vld [vmem:[%s1 + $0x6f0] sm:$0xff]
    %v282 = vld [vmem:[%s1 + $0x6f8] sm:$0xff]
    %v283 = vld [vmem:[%s1 + $0x700] sm:$0xff]
    %v284 = vld [vmem:[%s1 + $0x708] sm:$0xff]
    %v285 = vld [vmem:[%s1 + $0x710] sm:$0xff]
    %v286 = vld [vmem:[%s1 + $0x718] sm:$0xff]
    %v287 = vld [vmem:[%s1 + $0x720] sm:$0xff]
    %v288 = vld [vmem:[%s1 + $0x728] sm:$0xff]
    %v289 = vld [vmem:[%s1 + $0x730] sm:$0xff]
    %v290 = vld [vmem:[%s1 + $0x738] sm:$0xff]
    %v291 = vld [vmem:[%s1 + $0x740] sm:$0xff]
    %v292 = vld [vmem:[%s1 + $0x748] sm:$0xff]
    %v293 = vld [vmem:[%s1 + $0x750] sm:$0xff]
    %v294 = vld [vmem:[%s1 + $0x758] sm:$0xff]
    %v295 = vld [vmem:[%s1 + $0x760] sm:$0xff]
    %v296 = vld [vmem:[%s1 + $0x768] sm:$0xff]
    %v297 = vld [vmem:[%s1 + $0x770] sm:$0xff]
    %v298 = vld [vmem:[%s1 + $0x778] sm:$0xff]
    %v299 = vld [vmem:[%s1 + $0x780] sm:$0xff]
    %v300 = vld [vmem:[%s1 + $0x788] sm:$0xff]
    %v301 = vld [vmem:[%s1 + $0x790] sm:$0xff]
    %v302 = vld [vmem:[%s1 + $0x798] sm:$0xff]
    %v303 = vld [vmem:[%s1 + $0x7a0] sm:$0xff]
    %v304 = vld [vmem:[%s1 + $0x7a8] sm:$0xff]
    %v305 = vld [vmem:[%s1 + $0x7b0] sm:$0xff]
    %v306 = vld [vmem:[%s1 + $0x7b8] sm:$0xff]
    %v307 = vld [vmem:[%s1 + $0x7c0] sm:$0xff]
    %v308 = vld [vmem:[%s1 + $0x7c8] sm:$0xff]
    %v309 = vld [vmem:[%s1 + $0x7d0] sm:$0xff]
    %v310 = vld [vmem:[%s1 + $0x7d8] sm:$0xff]
    %v311 = vld [vmem:[%s1 + $0x7e0] sm:$0xff]
    %v312 = vld [vmem:[%s1 + $0x7e8] sm:$0xff]
    %v313 = vld [vmem:[%s1 + $0x7f0] sm:$0xff]
    %v314 = vld [vmem:[%s1 + $0x7f8] sm:$0xff]
    %v315 = vld [vmem:[%s1 + $0x800] sm:$0xff]
    %v316 = vld [vmem:[%s1 + $0x808] sm:$0xff]
    %v317 = vld [vmem:[%s1 + $0x810] sm:$0xff]
    %v318 = vld [vmem:[%s1 + $0x818] sm:$0xff]
    %v319 = vld [vmem:[%s1 + $0x820] sm:$0xff]
    %v320 = vld [vmem:[%s1 + $0x828] sm:$0xff]
    %v321 = vld [vmem:[%s1 + $0x830] sm:$0xff]
    %v322 = vld [vmem:[%s1 + $0x838] sm:$0xff]
    %v323 = vld [vmem:[%s1 + $0x840] sm:$0xff]
    %v324 = vld [vmem:[%s1 + $0x848] sm:$0xff]
    %v325 = vld [vmem:[%s1 + $0x850] sm:$0xff]
    %v326 = vld [vmem:[%s1 + $0x858] sm:$0xff]
    %v327 = vld [vmem:[%s1 + $0x860] sm:$0xff]
    %v328 = vld [vmem:[%s1 + $0x868] sm:$0xff]
    %v329 = vld [vmem:[%s1 + $0x870] sm:$0xff]
    %v330 = vld [vmem:[%s1 + $0x878] sm:$0xff]
    %v331 = vld [vmem:[%s1 + $0x880] sm:$0xff]
    %v332 = vld [vmem:[%s1 + $0x888] sm:$0xff]
    %v333 = vld [vmem:[%s1 + $0x890] sm:$0xff]
    %v334 = vld [vmem:[%s1 + $0x898] sm:$0xff]
    %v335 = vld [vmem:[%s1 + $0x8a0] sm:$0xff]
    %v336 = vld [vmem:[%s1 + $0x8a8] sm:$0xff]
    %v337 = vld [vmem:[%s1 + $0x8b0] sm:$0xff]
    %v338 = vld [vmem:[%s1 + $0x8b8] sm:$0xff]
    %v339 = vld [vmem:[%s1 + $0x8c0] sm:$0xff]
    %v340 = vld [vmem:[%s1 + $0x8c8] sm:$0xff]
    %v341 = vld [vmem:[%s1 + $0x8d0] sm:$0xff]
    %v342 = vld [vmem:[%s1 + $0x8d8] sm:$0xff]
    %v343 = vld [vmem:[%s1 + $0x8e0] sm:$0xff]
    %v344 = vld [vmem:[%s1 + $0x8e8] sm:$0xff]
    %v345 = vld [vmem:[%s1 + $0x8f0] sm:$0xff]
    %v346 = vld [vmem:[%s1 + $0x8f8] sm:$0xff]
    %v347 = vld [vmem:[%s1 + $0x900] sm:$0xff]
    %v348 = vld [vmem:[%s1 + $0x908] sm:$0xff]
    %v349 = vld [vmem:[%s1 + $0x910] sm:$0xff]
    %v350 = vld [vmem:[%s1 + $0x918] sm:$0xff]
    %v351 = vld [vmem:[%s1 + $0x920] sm:$0xff]
    %v352 = vld [vmem:[%s1 + $0x928] sm:$0xff]
    %v353 = vld [vmem:[%s1 + $0x930] sm:$0xff]
    %v354 = vld [vmem:[%s1 + $0x938] sm:$0xff]
    %v355 = vld [vmem:[%s1 + $0x940] sm:$0xff]
    %v356 = vld [vmem:[%s1 + $0x948] sm:$0xff]
    %v357 = vld [vmem:[%s1 + $0x950] sm:$0xff]
    %v358 = vld [vmem:[%s1 + $0x958] sm:$0xff]
    %v359 = vld [vmem:[%s1 + $0x960] sm:$0xff]
    %v360 = vld [vmem:[%s1 + $0x968] sm:$0xff]
    %v361 = vld [vmem:[%s1 + $0x970] sm:$0xff]
    %v362 = vld [vmem:[%s1 + $0x978] sm:$0xff]
    %v363 = vld [vmem:[%s1 + $0x980] sm:$0xff]
    %v364 = vld [vmem:[%s1 + $0x988] sm:$0xff]
    %v365 = vld [vmem:[%s1 + $0x990] sm:$0xff]
    %v366 = vld [vmem:[%s1 + $0x998] sm:$0xff]
    %v367 = vld [vmem:[%s1 + $0x9a0] sm:$0xff]
    %v368 = vld [vmem:[%s1 + $0x9a8] sm:$0xff]
    %v369 = vld [vmem:[%s1 + $0x9b0] sm:$0xff]
    %v370 = vld [vmem:[%s1 + $0x9b8] sm:$0xff]
    %v371 = vld [vmem:[%s1 + $0x9c0] sm:$0xff]
    %v372 = vld [vmem:[%s1 + $0x9c8] sm:$0xff]
    %v373 = vld [vmem:[%s1 + $0x9d0] sm:$0xff]
    %v374 = vld [vmem:[%s1 + $0x9d8] sm:$0xff]
    %v375 = vld [vmem:[%s1 + $0x9e0] sm:$0xff]
    %v376 = vld [vmem:[%s1 + $0x9e8] sm:$0xff]
    %v377 = vld [vmem:[%s1 + $0x9f0] sm:$0xff]
    %v378 = vld [vmem:[%s1 + $0x9f8] sm:$0xff]
    %v379 = vld [vmem:[%s1 + $0xa00] sm:$0xff]
    %v380 = vld [vmem:[%s1 + $0xa08] sm:$0xff]
    %v381 = vld [vmem:[%s1 + $0xa10] sm:$0xff]
    %v382 = vld [vmem:[%s1 + $0xa18] sm:$0xff]
    %v383 = vld [vmem:[%s1 + $0xa20] sm:$0xff]
    %v384 = vld [vmem:[%s1 + $0xa28] sm:$0xff]
    %v385 = vld [vmem:[%s1 + $0xa30] sm:$0xff]
    %v386 = vld [vmem:[%s1 + $0xa38] sm:$0xff]
    %v387 = vld [vmem:[%s1 + $0xa40] sm:$0xff]
    %v388 = vld [vmem:[%s1 + $0xa48] sm:$0xff]
    %v389 = vld [vmem:[%s1 + $0xa50] sm:$0xff]
    %v390 = vld [vmem:[%s1 + $0xa58] sm:$0xff]
    %v391 = vld [vmem:[%s1 + $0xa60] sm:$0xff]
    %v392 = vld [vmem:[%s1 + $0xa68] sm:$0xff]
    %v393 = vld [vmem:[%s1 + $0xa70] sm:$0xff]
    %v394 = vld [vmem:[%s1 + $0xa78] sm:$0xff]
    %v395 = vld [vmem:[%s1 + $0xa80] sm:$0xff]
    %v396 = vld [vmem:[%s1 + $0xa88] sm:$0xff]
    %v397 = vld [vmem:[%s1 + $0xa90] sm:$0xff]
    %v398 = vld [vmem:[%s1 + $0xa98] sm:$0xff]
    %v399 = vld [vmem:[%s1 + $0xaa0] sm:$0xff]
    %v400 = vld [vmem:[%s1 + $0xaa8] sm:$0xff]
    %v401 = vld [vmem:[%s1 + $0xab0] sm:$0xff]
    %v402 = vld [vmem:[%s1 + $0xab8] sm:$0xff]
    %v403 = vld [vmem:[%s1 + $0xac0] sm:$0xff]
    %v404 = vld [vmem:[%s1 + $0xac8] sm:$0xff]
    %v405 = vld [vmem:[%s1 + $0xad0] sm:$0xff]
    %v406 = vld [vmem:[%s1 + $0xad8] sm:$0xff]
    %v407 = vld [vmem:[%s1 + $0xae0] sm:$0xff]
    %v408 = vld [vmem:[%s1 + $0xae8] sm:$0xff]
    %v409 = vld [vmem:[%s1 + $0xaf0] sm:$0xff]
    %v410 = vld [vmem:[%s1 + $0xaf8] sm:$0xff]
    %v411 = vld [vmem:[%s1 + $0xb00] sm:$0xff]
    %v412 = vld [vmem:[%s1 + $0xb08] sm:$0xff]
    %v413 = vld [vmem:[%s1 + $0xb10] sm:$0xff]
    %v414 = vld [vmem:[%s1 + $0xb18] sm:$0xff]
    %v415 = vld [vmem:[%s1 + $0xb20] sm:$0xff]
    %v416 = vld [vmem:[%s1 + $0xb28] sm:$0xff]
    %v417 = vld [vmem:[%s1 + $0xb30] sm:$0xff]
    %v418 = vld [vmem:[%s1 + $0xb38] sm:$0xff]
    %v419 = vld [vmem:[%s1 + $0xb40] sm:$0xff]
    %v420 = vld [vmem:[%s1 + $0xb48] sm:$0xff]
    %v421 = vld [vmem:[%s1 + $0xb50] sm:$0xff]
    %v422 = vld [vmem:[%s1 + $0xb58] sm:$0xff]
    %v423 = vld [vmem:[%s1 + $0xb60] sm:$0xff]
    %v424 = vld [vmem:[%s1 + $0xb68] sm:$0xff]
    %v425 = vld [vmem:[%s1 + $0xb70] sm:$0xff]
    %v426 = vld [vmem:[%s1 + $0xb78] sm:$0xff]
    %v427 = vld [vmem:[%s1 + $0xb80] sm:$0xff]
    %v428 = vld [vmem:[%s1 + $0xb88] sm:$0xff]
    %v429 = vld [vmem:[%s1 + $0xb90] sm:$0xff]
    %v430 = vld [vmem:[%s1 + $0xb98] sm:$0xff]
    %v431 = vld [vmem:[%s1 + $0xba0] sm:$0xff]
    %v432 = vld [vmem:[%s1 + $0xba8] sm:$0xff]
    %v433 = vld [vmem:[%s1 + $0xbb0] sm:$0xff]
    %v434 = vld [vmem:[%s1 + $0xbb8] sm:$0xff]
    %v435 = vld [vmem:[%s1 + $0xbc0] sm:$0xff]
    %v436 = vld [vmem:[%s1 + $0xbc8] sm:$0xff]
    %v437 = vld [vmem:[%s1 + $0xbd0] sm:$0xff]
    %v438 = vld [vmem:[%s1 + $0xbd8] sm:$0xff]
    %v439 = vld [vmem:[%s1 + $0xbe0] sm:$0xff]
    %v440 = vld [vmem:[%s1 + $0xbe8] sm:$0xff]
    %v441 = vld [vmem:[%s1 + $0xbf0] sm:$0xff]
    %v442 = vld [vmem:[%s1 + $0xbf8] sm:$0xff]
    %v443 = vld [vmem:[%s1 + $0xc00] sm:$0xff]
    %v444 = vld [vmem:[%s1 + $0xc08] sm:$0xff]
    %v445 = vld [vmem:[%s1 + $0xc10] sm:$0xff]
    %v446 = vld [vmem:[%s1 + $0xc18] sm:$0xff]
    %v447 = vld [vmem:[%s1 + $0xc20] sm:$0xff]
    %v448 = vld [vmem:[%s1 + $0xc28] sm:$0xff]
    %v449 = vld [vmem:[%s1 + $0xc30] sm:$0xff]
    %v450 = vld [vmem:[%s1 + $0xc38] sm:$0xff]
    %v451 = vld [vmem:[%s1 + $0xc40] sm:$0xff]
    %v452 = vld [vmem:[%s1 + $0xc48] sm:$0xff]
    %v453 = vld [vmem:[%s1 + $0xc50] sm:$0xff]
    %v454 = vld [vmem:[%s1 + $0xc58] sm:$0xff]
    %v455 = vld [vmem:[%s1 + $0xc60] sm:$0xff]
    %v456 = vld [vmem:[%s1 + $0xc68] sm:$0xff]
    %v457 = vld [vmem:[%s1 + $0xc70] sm:$0xff]
    %v458 = vld [vmem:[%s1 + $0xc78] sm:$0xff]
    %v459 = vld [vmem:[%s1 + $0xc80] sm:$0xff]
    %v460 = vld [vmem:[%s1 + $0xc88] sm:$0xff]
    %v461 = vld [vmem:[%s1 + $0xc90] sm:$0xff]
    %v462 = vld [vmem:[%s1 + $0xc98] sm:$0xff]
    %v463 = vld [vmem:[%s1 + $0xca0] sm:$0xff]
    %v464 = vld [vmem:[%s1 + $0xca8] sm:$0xff]
    %v465 = vld [vmem:[%s1 + $0xcb0] sm:$0xff]
    %v466 = vld [vmem:[%s1 + $0xcb8] sm:$0xff]
    %v467 = vld [vmem:[%s1 + $0xcc0] sm:$0xff]
    %v468 = vld [vmem:[%s1 + $0xcc8] sm:$0xff]
    %v469 = vld [vmem:[%s1 + $0xcd0] sm:$0xff]
    %v470 = vld [vmem:[%s1 + $0xcd8] sm:$0xff]
    %v471 = vld [vmem:[%s1 + $0xce0] sm:$0xff]
    %v472 = vld [vmem:[%s1 + $0xce8] sm:$0xff]
    %v473 = vld [vmem:[%s1 + $0xcf0] sm:$0xff]
    %v474 = vld [vmem:[%s1 + $0xcf8] sm:$0xff]
    %v475 = vld [vmem:[%s1 + $0xd00] sm:$0xff]
    %v476 = vld [vmem:[%s1 + $0xd08] sm:$0xff]
    %v477 = vld [vmem:[%s1 + $0xd10] sm:$0xff]
    %v478 = vld [vmem:[%s1 + $0xd18] sm:$0xff]
    %v479 = vld [vmem:[%s1 + $0xd20] sm:$0xff]
    %v480 = vld [vmem:[%s1 + $0xd28] sm:$0xff]
    %v481 = vld [vmem:[%s1 + $0xd30] sm:$0xff]
    %v482 = vld [vmem:[%s1 + $0xd38] sm:$0xff]
    %v483 = vld [vmem:[%s1 + $0xd40] sm:$0xff]
    %v484 = vld [vmem:[%s1 + $0xd48] sm:$0xff]
    %v485 = vld [vmem:[%s1 + $0xd50] sm:$0xff]
    %v486 = vld [vmem:[%s1 + $0xd58] sm:$0xff]
    %v487 = vld [vmem:[%s1 + $0xd60] sm:$0xff]
    %v488 = vld [vmem:[%s1 + $0xd68] sm:$0xff]
    %v489 = vld [vmem:[%s1 + $0xd70] sm:$0xff]
    %v490 = vld [vmem:[%s1 + $0xd78] sm:$0xff]
    %v491 = vld [vmem:[%s1 + $0xd80] sm:$0xff]
    %v492 = vld [vmem:[%s1 + $0xd88] sm:$0xff]
    %v493 = vld [vmem:[%s1 + $0xd90] sm:$0xff]
    %v494 = vld [vmem:[%s1 + $0xd98] sm:$0xff]
    %v495 = vld [vmem:[%s1 + $0xda0] sm:$0xff]
    %v496 = vld [vmem:[%s1 + $0xda8] sm:$0xff]
    %v497 = vld [vmem:[%s1 + $0xdb0] sm:$0xff]
    %v498 = vld [vmem:[%s1 + $0xdb8] sm:$0xff]
    %v499 = vld [vmem:[%s1 + $0xdc0] sm:$0xff]
    %v500 = vld [vmem:[%s1 + $0xdc8] sm:$0xff]
    %v501 = vld [vmem:[%s1 + $0xdd0] sm:$0xff]
    %v502 = vld [vmem:[%s1 + $0xdd8] sm:$0xff]
    %v503 = vld [vmem:[%s1 + $0xde0] sm:$0xff]
    %v504 = vld [vmem:[%s1 + $0xde8] sm:$0xff]
    %v505 = vld [vmem:[%s1 + $0xdf0] sm:$0xff]
    %v506 = vld [vmem:[%s1 + $0xdf8] sm:$0xff]
    %v507 = vld [vmem:[%s1 + $0xe00] sm:$0xff]
    %v508 = vld [vmem:[%s1 + $0xe08] sm:$0xff]
    %v509 = vld [vmem:[%s1 + $0xe10] sm:$0xff]
    %v510 = vld [vmem:[%s1 + $0xe18] sm:$0xff]
    %v511 = vld [vmem:[%s1 + $0xe20] sm:$0xff]
    %v512 = vld [vmem:[%s1 + $0xe28] sm:$0xff]
    %v513 = vld [vmem:[%s1 + $0xe30] sm:$0xff]
    %v514 = vld [vmem:[%s1 + $0xe38] sm:$0xff]
    %v515 = vld [vmem:[%s1 + $0xe40] sm:$0xff]
    %v516 = vld [vmem:[%s1 + $0xe48] sm:$0xff]
    %v517 = vld [vmem:[%s1 + $0xe50] sm:$0xff]
    %v518 = vld [vmem:[%s1 + $0xe58] sm:$0xff]
    %v519 = vld [vmem:[%s1 + $0xe60] sm:$0xff]
    %v520 = vld [vmem:[%s1 + $0xe68] sm:$0xff]
    %v521 = vld [vmem:[%s1 + $0xe70] sm:$0xff]
    %v522 = vld [vmem:[%s1 + $0xe78] sm:$0xff]
    %v523 = vld [vmem:[%s1 + $0xe80] sm:$0xff]
    %v524 = vld [vmem:[%s1 + $0xe88] sm:$0xff]
    %v525 = vld [vmem:[%s1 + $0xe90] sm:$0xff]
    %v526 = vld [vmem:[%s1 + $0xe98] sm:$0xff]
    %v527 = vld [vmem:[%s1 + $0xea0] sm:$0xff]
    %v528 = vld [vmem:[%s1 + $0xea8] sm:$0xff]
    %v529 = vld [vmem:[%s1 + $0xeb0] sm:$0xff]
    %v530 = vld [vmem:[%s1 + $0xeb8] sm:$0xff]
    %v531 = vld [vmem:[%s1 + $0xec0] sm:$0xff]
    %v532 = vld [vmem:[%s1 + $0xec8] sm:$0xff]
    %v533 = vld [vmem:[%s1 + $0xed0] sm:$0xff]
    %v534 = vld [vmem:[%s1 + $0xed8] sm:$0xff]
    %v535 = vld [vmem:[%s1 + $0xee0] sm:$0xff]
    %v536 = vld [vmem:[%s1 + $0xee8] sm:$0xff]
    %v537 = vld [vmem:[%s1 + $0xef0] sm:$0xff]
    %v538 = vld [vmem:[%s1 + $0xef8] sm:$0xff]
    %v539 = vld [vmem:[%s1 + $0xf00] sm:$0xff]
    %v540 = vld [vmem:[%s1 + $0xf08] sm:$0xff]
    %v541 = vld [vmem:[%s1 + $0xf10] sm:$0xff]
    %v542 = vld [vmem:[%s1 + $0xf18] sm:$0xff]
    %v543 = vld [vmem:[%s1 + $0xf20] sm:$0xff]
    %v544 = vld [vmem:[%s1 + $0xf28] sm:$0xff]
    %v545 = vld [vmem:[%s1 + $0xf30] sm:$0xff]
    %v546 = vld [vmem:[%s1 + $0xf38] sm:$0xff]
    %v547 = vld [vmem:[%s1 + $0xf40] sm:$0xff]
    %v548 = vld [vmem:[%s1 + $0xf48] sm:$0xff]
    %v549 = vld [vmem:[%s1 + $0xf50] sm:$0xff]
    %v550 = vld [vmem:[%s1 + $0xf58] sm:$0xff]
    %v551 = vld [vmem:[%s1 + $0xf60] sm:$0xff]
    %v552 = vld [vmem:[%s1 + $0xf68] sm:$0xff]
    %v553 = vld [vmem:[%s1 + $0xf70] sm:$0xff]
    %v554 = vld [vmem:[%s1 + $0xf78] sm:$0xff]
    %v555 = vld [vmem:[%s1 + $0xf80] sm:$0xff]
    %v556 = vld [vmem:[%s1 + $0xf88] sm:$0xff]
    %v557 = vld [vmem:[%s1 + $0xf90] sm:$0xff]
    %v558 = vld [vmem:[%s1 + $0xf98] sm:$0xff]
    %v559 = vld [vmem:[%s1 + $0xfa0] sm:$0xff]
    %v560 = vld [vmem:[%s1 + $0xfa8] sm:$0xff]
    %v561 = vld [vmem:[%s1 + $0xfb0] sm:$0xff]
    %v562 = vld [vmem:[%s1 + $0xfb8] sm:$0xff]
    %v563 = vld [vmem:[%s1 + $0xfc0] sm:$0xff]
    %v564 = vld [vmem:[%s1 + $0xfc8] sm:$0xff]
    %v565 = vld [vmem:[%s1 + $0xfd0] sm:$0xff]
    %v566 = vld [vmem:[%s1 + $0xfd8] sm:$0xff]
    %v567 = vld [vmem:[%s1 + $0xfe0] sm:$0xff]
    %v568 = vld [vmem:[%s1 + $0xfe8] sm:$0xff]
    %v569 = vld [vmem:[%s1 + $0xff0] sm:$0xff]
    %v570 = vld [vmem:[%s1 + $0xff8] sm:$0xff]
    %v571 = vld [vmem:[%s2] sm:$0x1]
    %v573 = vlaneseq
    %v574 = vshrl.u32 %v573, 7
    %v575 = vsub.s32 0, %v574
    %v576 = vrot.slane %v571, %v575
    %578 = vmatprep.subr.mxu0 0.0
    %579 = vmatpush1.msra.mxu0 %v74
    %580 = vmatprep.subr.mxu0 0.0
    %581 = vmatpush1.msra.mxu0 %v73
    %582 = vmatprep.subr.mxu0 0.0
    %583 = vmatpush1.msra.mxu0 %v72
    %584 = vmatprep.subr.mxu0 0.0
    %585 = vmatpush1.msra.mxu0 %v71
    %586 = vmatprep.subr.mxu0 0.0
    %587 = vmatpush1.msra.mxu0 %v70
    %588 = vmatprep.subr.mxu0 0.0
    %589 = vmatpush1.msra.mxu0 %v69
    %590 = vmatprep.subr.mxu0 0.0
    %591 = vmatpush1.msra.mxu0 %v68
    %592 = vmatprep.subr.mxu0 0.0
    %593 = vmatpush1.msra.mxu0 %v67
    %594 = vmatprep.subr.mxu0 0.0
    %595 = vmatpush1.msra.mxu0 %v66
    %596 = vmatprep.subr.mxu0 0.0
    %597 = vmatpush1.msra.mxu0 %v65
    %598 = vmatprep.subr.mxu0 0.0
    %599 = vmatpush1.msra.mxu0 %v64
    %600 = vmatprep.subr.mxu0 0.0
    %601 = vmatpush1.msra.mxu0 %v63
    %602 = vmatprep.subr.mxu0 0.0
    %603 = vmatpush1.msra.mxu0 %v62
    %604 = vmatprep.subr.mxu0 0.0
    %605 = vmatpush1.msra.mxu0 %v61
    %606 = vmatprep.subr.mxu0 0.0
    %607 = vmatpush1.msra.mxu0 %v60
    %608 = vmatprep.subr.mxu0 0.0
    %609 = vmatpush1.msra.mxu0 %v59
    %610 = vmatprep.subr.mxu0 0.0
    %611 = vmatpush2.msra.mxu0 %v90
    %612 = vmatprep.subr.mxu0 0.0
    %613 = vmatpush2.msra.mxu0 %v89
    %614 = vmatprep.subr.mxu0 0.0
    %615 = vmatpush2.msra.mxu0 %v88
    %616 = vmatprep.subr.mxu0 0.0
    %617 = vmatpush2.msra.mxu0 %v87
    %618 = vmatprep.subr.mxu0 0.0
    %619 = vmatpush2.msra.mxu0 %v86
    %620 = vmatprep.subr.mxu0 0.0
    %621 = vmatpush2.msra.mxu0 %v85
    %622 = vmatprep.subr.mxu0 0.0
    %623 = vmatpush2.msra.mxu0 %v84
    %624 = vmatprep.subr.mxu0 0.0
    %625 = vmatpush2.msra.mxu0 %v83
    %626 = vmatprep.subr.mxu0 0.0
    %627 = vmatpush2.msra.mxu0 %v82
    %628 = vmatprep.subr.mxu0 0.0
    %629 = vmatpush2.msra.mxu0 %v81
    %630 = vmatprep.subr.mxu0 0.0
    %631 = vmatpush2.msra.mxu0 %v80
    %632 = vmatprep.subr.mxu0 0.0
    %633 = vmatpush2.msra.mxu0 %v79
    %634 = vmatprep.subr.mxu0 0.0
    %635 = vmatpush2.msra.mxu0 %v78
    %636 = vmatprep.subr.mxu0 0.0
    %637 = vmatpush2.msra.mxu0 %v77
    %638 = vmatprep.subr.mxu0 0.0
    %639 = vmatpush2.msra.mxu0 %v76
    %640 = vmatprep.subr.mxu0 0.0
    %641 = vmatpush2.msra.mxu0 %v75
    %642 = vmatprep.mubr.f32.mxu0 %v28
    %643 = vmatmul.mubr.f32.gmra.mxu0 %v27
    %v644 = vpop.f32.mrf.mxu0
    %v645 = vadd.f32 %v576, %v644
    %v646 = vpop.f32.mrf.mxu0
    %647 = vdwg.mxu0
    %648 = vmatprep.subr.mxu0 0.0
    %649 = vmatpush1.msra.mxu0 %v106
    %650 = vmatprep.subr.mxu0 0.0
    %651 = vmatpush1.msra.mxu0 %v105
    %652 = vmatprep.subr.mxu0 0.0
    %653 = vmatpush1.msra.mxu0 %v104
    %654 = vmatprep.subr.mxu0 0.0
    %655 = vmatpush1.msra.mxu0 %v103
    %656 = vmatprep.subr.mxu0 0.0
    %657 = vmatpush1.msra.mxu0 %v102
    %658 = vmatprep.subr.mxu0 0.0
    %659 = vmatpush1.msra.mxu0 %v101
    %660 = vmatprep.subr.mxu0 0.0
    %661 = vmatpush1.msra.mxu0 %v100
    %662 = vmatprep.subr.mxu0 0.0
    %663 = vmatpush1.msra.mxu0 %v99
    %664 = vmatprep.subr.mxu0 0.0
    %665 = vmatpush1.msra.mxu0 %v98
    %666 = vmatprep.subr.mxu0 0.0
    %667 = vmatpush1.msra.mxu0 %v97
    %668 = vmatprep.subr.mxu0 0.0
    %669 = vmatpush1.msra.mxu0 %v96
    %670 = vmatprep.subr.mxu0 0.0
    %671 = vmatpush1.msra.mxu0 %v95
    %672 = vmatprep.subr.mxu0 0.0
    %673 = vmatpush1.msra.mxu0 %v94
    %674 = vmatprep.subr.mxu0 0.0
    %675 = vmatpush1.msra.mxu0 %v93
    %676 = vmatprep.subr.mxu0 0.0
    %677 = vmatpush1.msra.mxu0 %v92
    %678 = vmatprep.subr.mxu0 0.0
    %679 = vmatpush1.msra.mxu0 %v91
    %680 = vmatprep.subr.mxu0 0.0
    %681 = vmatpush2.msra.mxu0 %v122
    %682 = vmatprep.subr.mxu0 0.0
    %683 = vmatpush2.msra.mxu0 %v121
    %684 = vmatprep.subr.mxu0 0.0
    %685 = vmatpush2.msra.mxu0 %v120
    %686 = vmatprep.subr.mxu0 0.0
    %687 = vmatpush2.msra.mxu0 %v119
    %688 = vmatprep.subr.mxu0 0.0
    %689 = vmatpush2.msra.mxu0 %v118
    %690 = vmatprep.subr.mxu0 0.0
    %691 = vmatpush2.msra.mxu0 %v117
    %692 = vmatprep.subr.mxu0 0.0
    %693 = vmatpush2.msra.mxu0 %v116
    %694 = vmatprep.subr.mxu0 0.0
    %695 = vmatpush2.msra.mxu0 %v115
    %696 = vmatprep.subr.mxu0 0.0
    %697 = vmatpush2.msra.mxu0 %v114
    %698 = vmatprep.subr.mxu0 0.0
    %699 = vmatpush2.msra.mxu0 %v113
    %700 = vmatprep.subr.mxu0 0.0
    %701 = vmatpush2.msra.mxu0 %v112
    %702 = vmatprep.subr.mxu0 0.0
    %703 = vmatpush2.msra.mxu0 %v111
    %704 = vmatprep.subr.mxu0 0.0
    %705 = vmatpush2.msra.mxu0 %v110
    %706 = vmatprep.subr.mxu0 0.0
    %707 = vmatpush2.msra.mxu0 %v109
    %708 = vmatprep.subr.mxu0 0.0
    %709 = vmatpush2.msra.mxu0 %v108
    %710 = vmatprep.subr.mxu0 0.0
    %711 = vmatpush2.msra.mxu0 %v107
    %712 = vmatprep.mubr.f32.mxu0 %v30
    %713 = vmatmul.mubr.f32.gmra.mxu0 %v29
    %v714 = vpop.f32.mrf.mxu0
    %v715 = vadd.f32 %v645, %v714
    %v716 = vpop.f32.mrf.mxu0
    %717 = vdwg.mxu0
    %718 = vmatprep.subr.mxu0 0.0
    %719 = vmatpush1.msra.mxu0 %v138
    %720 = vmatprep.subr.mxu0 0.0
    %721 = vmatpush1.msra.mxu0 %v137
    %722 = vmatprep.subr.mxu0 0.0
    %723 = vmatpush1.msra.mxu0 %v136
    %724 = vmatprep.subr.mxu0 0.0
    %725 = vmatpush1.msra.mxu0 %v135
    %726 = vmatprep.subr.mxu0 0.0
    %727 = vmatpush1.msra.mxu0 %v134
    %728 = vmatprep.subr.mxu0 0.0
    %729 = vmatpush1.msra.mxu0 %v133
    %730 = vmatprep.subr.mxu0 0.0
    %731 = vmatpush1.msra.mxu0 %v132
    %732 = vmatprep.subr.mxu0 0.0
    %733 = vmatpush1.msra.mxu0 %v131
    %734 = vmatprep.subr.mxu0 0.0
    %735 = vmatpush1.msra.mxu0 %v130
    %736 = vmatprep.subr.mxu0 0.0
    %737 = vmatpush1.msra.mxu0 %v129
    %738 = vmatprep.subr.mxu0 0.0
    %739 = vmatpush1.msra.mxu0 %v128
    %740 = vmatprep.subr.mxu0 0.0
    %741 = vmatpush1.msra.mxu0 %v127
    %742 = vmatprep.subr.mxu0 0.0
    %743 = vmatpush1.msra.mxu0 %v126
    %744 = vmatprep.subr.mxu0 0.0
    %745 = vmatpush1.msra.mxu0 %v125
    %746 = vmatprep.subr.mxu0 0.0
    %747 = vmatpush1.msra.mxu0 %v124
    %748 = vmatprep.subr.mxu0 0.0
    %749 = vmatpush1.msra.mxu0 %v123
    %750 = vmatprep.subr.mxu0 0.0
    %751 = vmatpush2.msra.mxu0 %v154
    %752 = vmatprep.subr.mxu0 0.0
    %753 = vmatpush2.msra.mxu0 %v153
    %754 = vmatprep.subr.mxu0 0.0
    %755 = vmatpush2.msra.mxu0 %v152
    %756 = vmatprep.subr.mxu0 0.0
    %757 = vmatpush2.msra.mxu0 %v151
    %758 = vmatprep.subr.mxu0 0.0
    %759 = vmatpush2.msra.mxu0 %v150
    %760 = vmatprep.subr.mxu0 0.0
    %761 = vmatpush2.msra.mxu0 %v149
    %762 = vmatprep.subr.mxu0 0.0
    %763 = vmatpush2.msra.mxu0 %v148
    %764 = vmatprep.subr.mxu0 0.0
    %765 = vmatpush2.msra.mxu0 %v147
    %766 = vmatprep.subr.mxu0 0.0
    %767 = vmatpush2.msra.mxu0 %v146
    %768 = vmatprep.subr.mxu0 0.0
    %769 = vmatpush2.msra.mxu0 %v145
    %770 = vmatprep.subr.mxu0 0.0
    %771 = vmatpush2.msra.mxu0 %v144
    %772 = vmatprep.subr.mxu0 0.0
    %773 = vmatpush2.msra.mxu0 %v143
    %774 = vmatprep.subr.mxu0 0.0
    %775 = vmatpush2.msra.mxu0 %v142
    %776 = vmatprep.subr.mxu0 0.0
    %777 = vmatpush2.msra.mxu0 %v141
    %778 = vmatprep.subr.mxu0 0.0
    %779 = vmatpush2.msra.mxu0 %v140
    %780 = vmatprep.subr.mxu0 0.0
    %781 = vmatpush2.msra.mxu0 %v139
    %782 = vmatprep.mubr.f32.mxu0 %v32
    %783 = vmatmul.mubr.f32.gmra.mxu0 %v31
    %v784 = vpop.f32.mrf.mxu0
    %v785 = vadd.f32 %v715, %v784
    %v786 = vpop.f32.mrf.mxu0
    %787 = vdwg.mxu0
    %788 = vmatprep.subr.mxu0 0.0
    %789 = vmatpush1.msra.mxu0 %v170
    %790 = vmatprep.subr.mxu0 0.0
    %791 = vmatpush1.msra.mxu0 %v169
    %792 = vmatprep.subr.mxu0 0.0
    %793 = vmatpush1.msra.mxu0 %v168
    %794 = vmatprep.subr.mxu0 0.0
    %795 = vmatpush1.msra.mxu0 %v167
    %796 = vmatprep.subr.mxu0 0.0
    %797 = vmatpush1.msra.mxu0 %v166
    %798 = vmatprep.subr.mxu0 0.0
    %799 = vmatpush1.msra.mxu0 %v165
    %800 = vmatprep.subr.mxu0 0.0
    %801 = vmatpush1.msra.mxu0 %v164
    %802 = vmatprep.subr.mxu0 0.0
    %803 = vmatpush1.msra.mxu0 %v163
    %804 = vmatprep.subr.mxu0 0.0
    %805 = vmatpush1.msra.mxu0 %v162
    %806 = vmatprep.subr.mxu0 0.0
    %807 = vmatpush1.msra.mxu0 %v161
    %808 = vmatprep.subr.mxu0 0.0
    %809 = vmatpush1.msra.mxu0 %v160
    %810 = vmatprep.subr.mxu0 0.0
    %811 = vmatpush1.msra.mxu0 %v159
    %812 = vmatprep.subr.mxu0 0.0
    %813 = vmatpush1.msra.mxu0 %v158
    %814 = vmatprep.subr.mxu0 0.0
    %815 = vmatpush1.msra.mxu0 %v157
    %816 = vmatprep.subr.mxu0 0.0
    %817 = vmatpush1.msra.mxu0 %v156
    %818 = vmatprep.subr.mxu0 0.0
    %819 = vmatpush1.msra.mxu0 %v155
    %820 = vmatprep.subr.mxu0 0.0
    %821 = vmatpush2.msra.mxu0 %v186
    %822 = vmatprep.subr.mxu0 0.0
    %823 = vmatpush2.msra.mxu0 %v185
    %824 = vmatprep.subr.mxu0 0.0
    %825 = vmatpush2.msra.mxu0 %v184
    %826 = vmatprep.subr.mxu0 0.0
    %827 = vmatpush2.msra.mxu0 %v183
    %828 = vmatprep.subr.mxu0 0.0
    %829 = vmatpush2.msra.mxu0 %v182
    %830 = vmatprep.subr.mxu0 0.0
    %831 = vmatpush2.msra.mxu0 %v181
    %832 = vmatprep.subr.mxu0 0.0
    %833 = vmatpush2.msra.mxu0 %v180
    %834 = vmatprep.subr.mxu0 0.0
    %835 = vmatpush2.msra.mxu0 %v179
    %836 = vmatprep.subr.mxu0 0.0
    %837 = vmatpush2.msra.mxu0 %v178
    %838 = vmatprep.subr.mxu0 0.0
    %839 = vmatpush2.msra.mxu0 %v177
    %840 = vmatprep.subr.mxu0 0.0
    %841 = vmatpush2.msra.mxu0 %v176
    %842 = vmatprep.subr.mxu0 0.0
    %843 = vmatpush2.msra.mxu0 %v175
    %844 = vmatprep.subr.mxu0 0.0
    %845 = vmatpush2.msra.mxu0 %v174
    %846 = vmatprep.subr.mxu0 0.0
    %847 = vmatpush2.msra.mxu0 %v173
    %848 = vmatprep.subr.mxu0 0.0
    %849 = vmatpush2.msra.mxu0 %v172
    %850 = vmatprep.subr.mxu0 0.0
    %851 = vmatpush2.msra.mxu0 %v171
    %852 = vmatprep.mubr.f32.mxu0 %v34
    %853 = vmatmul.mubr.f32.gmra.mxu0 %v33
    %v854 = vpop.f32.mrf.mxu0
    %v855 = vadd.f32 %v785, %v854
    %v856 = vpop.f32.mrf.mxu0
    %857 = vdwg.mxu0
    %858 = vmatprep.subr.mxu0 0.0
    %859 = vmatpush1.msra.mxu0 %v202
    %860 = vmatprep.subr.mxu0 0.0
    %861 = vmatpush1.msra.mxu0 %v201
    %862 = vmatprep.subr.mxu0 0.0
    %863 = vmatpush1.msra.mxu0 %v200
    %864 = vmatprep.subr.mxu0 0.0
    %865 = vmatpush1.msra.mxu0 %v199
    %866 = vmatprep.subr.mxu0 0.0
    %867 = vmatpush1.msra.mxu0 %v198
    %868 = vmatprep.subr.mxu0 0.0
    %869 = vmatpush1.msra.mxu0 %v197
    %870 = vmatprep.subr.mxu0 0.0
    %871 = vmatpush1.msra.mxu0 %v196
    %872 = vmatprep.subr.mxu0 0.0
    %873 = vmatpush1.msra.mxu0 %v195
    %874 = vmatprep.subr.mxu0 0.0
    %875 = vmatpush1.msra.mxu0 %v194
    %876 = vmatprep.subr.mxu0 0.0
    %877 = vmatpush1.msra.mxu0 %v193
    %878 = vmatprep.subr.mxu0 0.0
    %879 = vmatpush1.msra.mxu0 %v192
    %880 = vmatprep.subr.mxu0 0.0
    %881 = vmatpush1.msra.mxu0 %v191
    %882 = vmatprep.subr.mxu0 0.0
    %883 = vmatpush1.msra.mxu0 %v190
    %884 = vmatprep.subr.mxu0 0.0
    %885 = vmatpush1.msra.mxu0 %v189
    %886 = vmatprep.subr.mxu0 0.0
    %887 = vmatpush1.msra.mxu0 %v188
    %888 = vmatprep.subr.mxu0 0.0
    %889 = vmatpush1.msra.mxu0 %v187
    %890 = vmatprep.subr.mxu0 0.0
    %891 = vmatpush2.msra.mxu0 %v218
    %892 = vmatprep.subr.mxu0 0.0
    %893 = vmatpush2.msra.mxu0 %v217
    %894 = vmatprep.subr.mxu0 0.0
    %895 = vmatpush2.msra.mxu0 %v216
    %896 = vmatprep.subr.mxu0 0.0
    %897 = vmatpush2.msra.mxu0 %v215
    %898 = vmatprep.subr.mxu0 0.0
    %899 = vmatpush2.msra.mxu0 %v214
    %900 = vmatprep.subr.mxu0 0.0
    %901 = vmatpush2.msra.mxu0 %v213
    %902 = vmatprep.subr.mxu0 0.0
    %903 = vmatpush2.msra.mxu0 %v212
    %904 = vmatprep.subr.mxu0 0.0
    %905 = vmatpush2.msra.mxu0 %v211
    %906 = vmatprep.subr.mxu0 0.0
    %907 = vmatpush2.msra.mxu0 %v210
    %908 = vmatprep.subr.mxu0 0.0
    %909 = vmatpush2.msra.mxu0 %v209
    %910 = vmatprep.subr.mxu0 0.0
    %911 = vmatpush2.msra.mxu0 %v208
    %912 = vmatprep.subr.mxu0 0.0
    %913 = vmatpush2.msra.mxu0 %v207
    %914 = vmatprep.subr.mxu0 0.0
    %915 = vmatpush2.msra.mxu0 %v206
    %916 = vmatprep.subr.mxu0 0.0
    %917 = vmatpush2.msra.mxu0 %v205
    %918 = vmatprep.subr.mxu0 0.0
    %919 = vmatpush2.msra.mxu0 %v204
    %920 = vmatprep.subr.mxu0 0.0
    %921 = vmatpush2.msra.mxu0 %v203
    %922 = vmatprep.mubr.f32.mxu0 %v36
    %923 = vmatmul.mubr.f32.gmra.mxu0 %v35
    %v924 = vpop.f32.mrf.mxu0
    %v925 = vadd.f32 %v855, %v924
    %v926 = vpop.f32.mrf.mxu0
    %927 = vdwg.mxu0
    %928 = vmatprep.subr.mxu0 0.0
    %929 = vmatpush1.msra.mxu0 %v234
    %930 = vmatprep.subr.mxu0 0.0
    %931 = vmatpush1.msra.mxu0 %v233
    %932 = vmatprep.subr.mxu0 0.0
    %933 = vmatpush1.msra.mxu0 %v232
    %934 = vmatprep.subr.mxu0 0.0
    %935 = vmatpush1.msra.mxu0 %v231
    %936 = vmatprep.subr.mxu0 0.0
    %937 = vmatpush1.msra.mxu0 %v230
    %938 = vmatprep.subr.mxu0 0.0
    %939 = vmatpush1.msra.mxu0 %v229
    %940 = vmatprep.subr.mxu0 0.0
    %941 = vmatpush1.msra.mxu0 %v228
    %942 = vmatprep.subr.mxu0 0.0
    %943 = vmatpush1.msra.mxu0 %v227
    %944 = vmatprep.subr.mxu0 0.0
    %945 = vmatpush1.msra.mxu0 %v226
    %946 = vmatprep.subr.mxu0 0.0
    %947 = vmatpush1.msra.mxu0 %v225
    %948 = vmatprep.subr.mxu0 0.0
    %949 = vmatpush1.msra.mxu0 %v224
    %950 = vmatprep.subr.mxu0 0.0
    %951 = vmatpush1.msra.mxu0 %v223
    %952 = vmatprep.subr.mxu0 0.0
    %953 = vmatpush1.msra.mxu0 %v222
    %954 = vmatprep.subr.mxu0 0.0
    %955 = vmatpush1.msra.mxu0 %v221
    %956 = vmatprep.subr.mxu0 0.0
    %957 = vmatpush1.msra.mxu0 %v220
    %958 = vmatprep.subr.mxu0 0.0
    %959 = vmatpush1.msra.mxu0 %v219
    %960 = vmatprep.subr.mxu0 0.0
    %961 = vmatpush2.msra.mxu0 %v250
    %962 = vmatprep.subr.mxu0 0.0
    %963 = vmatpush2.msra.mxu0 %v249
    %964 = vmatprep.subr.mxu0 0.0
    %965 = vmatpush2.msra.mxu0 %v248
    %966 = vmatprep.subr.mxu0 0.0
    %967 = vmatpush2.msra.mxu0 %v247
    %968 = vmatprep.subr.mxu0 0.0
    %969 = vmatpush2.msra.mxu0 %v246
    %970 = vmatprep.subr.mxu0 0.0
    %971 = vmatpush2.msra.mxu0 %v245
    %972 = vmatprep.subr.mxu0 0.0
    %973 = vmatpush2.msra.mxu0 %v244
    %974 = vmatprep.subr.mxu0 0.0
    %975 = vmatpush2.msra.mxu0 %v243
    %976 = vmatprep.subr.mxu0 0.0
    %977 = vmatpush2.msra.mxu0 %v242
    %978 = vmatprep.subr.mxu0 0.0
    %979 = vmatpush2.msra.mxu0 %v241
    %980 = vmatprep.subr.mxu0 0.0
    %981 = vmatpush2.msra.mxu0 %v240
    %982 = vmatprep.subr.mxu0 0.0
    %983 = vmatpush2.msra.mxu0 %v239
    %984 = vmatprep.subr.mxu0 0.0
    %985 = vmatpush2.msra.mxu0 %v238
    %986 = vmatprep.subr.mxu0 0.0
    %987 = vmatpush2.msra.mxu0 %v237
    %988 = vmatprep.subr.mxu0 0.0
    %989 = vmatpush2.msra.mxu0 %v236
    %990 = vmatprep.subr.mxu0 0.0
    %991 = vmatpush2.msra.mxu0 %v235
    %992 = vmatprep.mubr.f32.mxu0 %v38
    %993 = vmatmul.mubr.f32.gmra.mxu0 %v37
    %v994 = vpop.f32.mrf.mxu0
    %v995 = vadd.f32 %v925, %v994
    %v996 = vpop.f32.mrf.mxu0
    %997 = vdwg.mxu0
    %998 = vmatprep.subr.mxu0 0.0
    %999 = vmatpush1.msra.mxu0 %v266
    %1000 = vmatprep.subr.mxu0 0.0
    %1001 = vmatpush1.msra.mxu0 %v265
    %1002 = vmatprep.subr.mxu0 0.0
    %1003 = vmatpush1.msra.mxu0 %v264
    %1004 = vmatprep.subr.mxu0 0.0
    %1005 = vmatpush1.msra.mxu0 %v263
    %1006 = vmatprep.subr.mxu0 0.0
    %1007 = vmatpush1.msra.mxu0 %v262
    %1008 = vmatprep.subr.mxu0 0.0
    %1009 = vmatpush1.msra.mxu0 %v261
    %1010 = vmatprep.subr.mxu0 0.0
    %1011 = vmatpush1.msra.mxu0 %v260
    %1012 = vmatprep.subr.mxu0 0.0
    %1013 = vmatpush1.msra.mxu0 %v259
    %1014 = vmatprep.subr.mxu0 0.0
    %1015 = vmatpush1.msra.mxu0 %v258
    %1016 = vmatprep.subr.mxu0 0.0
    %1017 = vmatpush1.msra.mxu0 %v257
    %1018 = vmatprep.subr.mxu0 0.0
    %1019 = vmatpush1.msra.mxu0 %v256
    %1020 = vmatprep.subr.mxu0 0.0
    %1021 = vmatpush1.msra.mxu0 %v255
    %1022 = vmatprep.subr.mxu0 0.0
    %1023 = vmatpush1.msra.mxu0 %v254
    %1024 = vmatprep.subr.mxu0 0.0
    %1025 = vmatpush1.msra.mxu0 %v253
    %1026 = vmatprep.subr.mxu0 0.0
    %1027 = vmatpush1.msra.mxu0 %v252
    %1028 = vmatprep.subr.mxu0 0.0
    %1029 = vmatpush1.msra.mxu0 %v251
    %1030 = vmatprep.subr.mxu0 0.0
    %1031 = vmatpush2.msra.mxu0 %v282
    %1032 = vmatprep.subr.mxu0 0.0
    %1033 = vmatpush2.msra.mxu0 %v281
    %1034 = vmatprep.subr.mxu0 0.0
    %1035 = vmatpush2.msra.mxu0 %v280
    %1036 = vmatprep.subr.mxu0 0.0
    %1037 = vmatpush2.msra.mxu0 %v279
    %1038 = vmatprep.subr.mxu0 0.0
    %1039 = vmatpush2.msra.mxu0 %v278
    %1040 = vmatprep.subr.mxu0 0.0
    %1041 = vmatpush2.msra.mxu0 %v277
    %1042 = vmatprep.subr.mxu0 0.0
    %1043 = vmatpush2.msra.mxu0 %v276
    %1044 = vmatprep.subr.mxu0 0.0
    %1045 = vmatpush2.msra.mxu0 %v275
    %1046 = vmatprep.subr.mxu0 0.0
    %1047 = vmatpush2.msra.mxu0 %v274
    %1048 = vmatprep.subr.mxu0 0.0
    %1049 = vmatpush2.msra.mxu0 %v273
    %1050 = vmatprep.subr.mxu0 0.0
    %1051 = vmatpush2.msra.mxu0 %v272
    %1052 = vmatprep.subr.mxu0 0.0
    %1053 = vmatpush2.msra.mxu0 %v271
    %1054 = vmatprep.subr.mxu0 0.0
    %1055 = vmatpush2.msra.mxu0 %v270
    %1056 = vmatprep.subr.mxu0 0.0
    %1057 = vmatpush2.msra.mxu0 %v269
    %1058 = vmatprep.subr.mxu0 0.0
    %1059 = vmatpush2.msra.mxu0 %v268
    %1060 = vmatprep.subr.mxu0 0.0
    %1061 = vmatpush2.msra.mxu0 %v267
    %1062 = vmatprep.mubr.f32.mxu0 %v40
    %1063 = vmatmul.mubr.f32.gmra.mxu0 %v39
    %v1064 = vpop.f32.mrf.mxu0
    %v1065 = vadd.f32 %v995, %v1064
    %v1066 = vpop.f32.mrf.mxu0
    %1067 = vdwg.mxu0
    %1068 = vmatprep.subr.mxu0 0.0
    %1069 = vmatpush1.msra.mxu0 %v298
    %1070 = vmatprep.subr.mxu0 0.0
    %1071 = vmatpush1.msra.mxu0 %v297
    %1072 = vmatprep.subr.mxu0 0.0
    %1073 = vmatpush1.msra.mxu0 %v296
    %1074 = vmatprep.subr.mxu0 0.0
    %1075 = vmatpush1.msra.mxu0 %v295
    %1076 = vmatprep.subr.mxu0 0.0
    %1077 = vmatpush1.msra.mxu0 %v294
    %1078 = vmatprep.subr.mxu0 0.0
    %1079 = vmatpush1.msra.mxu0 %v293
    %1080 = vmatprep.subr.mxu0 0.0
    %1081 = vmatpush1.msra.mxu0 %v292
    %1082 = vmatprep.subr.mxu0 0.0
    %1083 = vmatpush1.msra.mxu0 %v291
    %1084 = vmatprep.subr.mxu0 0.0
    %1085 = vmatpush1.msra.mxu0 %v290
    %1086 = vmatprep.subr.mxu0 0.0
    %1087 = vmatpush1.msra.mxu0 %v289
    %1088 = vmatprep.subr.mxu0 0.0
    %1089 = vmatpush1.msra.mxu0 %v288
    %1090 = vmatprep.subr.mxu0 0.0
    %1091 = vmatpush1.msra.mxu0 %v287
    %1092 = vmatprep.subr.mxu0 0.0
    %1093 = vmatpush1.msra.mxu0 %v286
    %1094 = vmatprep.subr.mxu0 0.0
    %1095 = vmatpush1.msra.mxu0 %v285
    %1096 = vmatprep.subr.mxu0 0.0
    %1097 = vmatpush1.msra.mxu0 %v284
    %1098 = vmatprep.subr.mxu0 0.0
    %1099 = vmatpush1.msra.mxu0 %v283
    %1100 = vmatprep.subr.mxu0 0.0
    %1101 = vmatpush2.msra.mxu0 %v314
    %1102 = vmatprep.subr.mxu0 0.0
    %1103 = vmatpush2.msra.mxu0 %v313
    %1104 = vmatprep.subr.mxu0 0.0
    %1105 = vmatpush2.msra.mxu0 %v312
    %1106 = vmatprep.subr.mxu0 0.0
    %1107 = vmatpush2.msra.mxu0 %v311
    %1108 = vmatprep.subr.mxu0 0.0
    %1109 = vmatpush2.msra.mxu0 %v310
    %1110 = vmatprep.subr.mxu0 0.0
    %1111 = vmatpush2.msra.mxu0 %v309
    %1112 = vmatprep.subr.mxu0 0.0
    %1113 = vmatpush2.msra.mxu0 %v308
    %1114 = vmatprep.subr.mxu0 0.0
    %1115 = vmatpush2.msra.mxu0 %v307
    %1116 = vmatprep.subr.mxu0 0.0
    %1117 = vmatpush2.msra.mxu0 %v306
    %1118 = vmatprep.subr.mxu0 0.0
    %1119 = vmatpush2.msra.mxu0 %v305
    %1120 = vmatprep.subr.mxu0 0.0
    %1121 = vmatpush2.msra.mxu0 %v304
    %1122 = vmatprep.subr.mxu0 0.0
    %1123 = vmatpush2.msra.mxu0 %v303
    %1124 = vmatprep.subr.mxu0 0.0
    %1125 = vmatpush2.msra.mxu0 %v302
    %1126 = vmatprep.subr.mxu0 0.0
    %1127 = vmatpush2.msra.mxu0 %v301
    %1128 = vmatprep.subr.mxu0 0.0
    %1129 = vmatpush2.msra.mxu0 %v300
    %1130 = vmatprep.subr.mxu0 0.0
    %1131 = vmatpush2.msra.mxu0 %v299
    %1132 = vmatprep.mubr.f32.mxu0 %v42
    %1133 = vmatmul.mubr.f32.gmra.mxu0 %v41
    %v1134 = vpop.f32.mrf.mxu0
    %v1135 = vadd.f32 %v1065, %v1134
    %v1136 = vpop.f32.mrf.mxu0
    %1137 = vdwg.mxu0
    %1138 = vmatprep.subr.mxu0 0.0
    %1139 = vmatpush1.msra.mxu0 %v330
    %1140 = vmatprep.subr.mxu0 0.0
    %1141 = vmatpush1.msra.mxu0 %v329
    %1142 = vmatprep.subr.mxu0 0.0
    %1143 = vmatpush1.msra.mxu0 %v328
    %1144 = vmatprep.subr.mxu0 0.0
    %1145 = vmatpush1.msra.mxu0 %v327
    %1146 = vmatprep.subr.mxu0 0.0
    %1147 = vmatpush1.msra.mxu0 %v326
    %1148 = vmatprep.subr.mxu0 0.0
    %1149 = vmatpush1.msra.mxu0 %v325
    %1150 = vmatprep.subr.mxu0 0.0
    %1151 = vmatpush1.msra.mxu0 %v324
    %1152 = vmatprep.subr.mxu0 0.0
    %1153 = vmatpush1.msra.mxu0 %v323
    %1154 = vmatprep.subr.mxu0 0.0
    %1155 = vmatpush1.msra.mxu0 %v322
    %1156 = vmatprep.subr.mxu0 0.0
    %1157 = vmatpush1.msra.mxu0 %v321
    %1158 = vmatprep.subr.mxu0 0.0
    %1159 = vmatpush1.msra.mxu0 %v320
    %1160 = vmatprep.subr.mxu0 0.0
    %1161 = vmatpush1.msra.mxu0 %v319
    %1162 = vmatprep.subr.mxu0 0.0
    %1163 = vmatpush1.msra.mxu0 %v318
    %1164 = vmatprep.subr.mxu0 0.0
    %1165 = vmatpush1.msra.mxu0 %v317
    %1166 = vmatprep.subr.mxu0 0.0
    %1167 = vmatpush1.msra.mxu0 %v316
    %1168 = vmatprep.subr.mxu0 0.0
    %1169 = vmatpush1.msra.mxu0 %v315
    %1170 = vmatprep.subr.mxu0 0.0
    %1171 = vmatpush2.msra.mxu0 %v346
    %1172 = vmatprep.subr.mxu0 0.0
    %1173 = vmatpush2.msra.mxu0 %v345
    %1174 = vmatprep.subr.mxu0 0.0
    %1175 = vmatpush2.msra.mxu0 %v344
    %1176 = vmatprep.subr.mxu0 0.0
    %1177 = vmatpush2.msra.mxu0 %v343
    %1178 = vmatprep.subr.mxu0 0.0
    %1179 = vmatpush2.msra.mxu0 %v342
    %1180 = vmatprep.subr.mxu0 0.0
    %1181 = vmatpush2.msra.mxu0 %v341
    %1182 = vmatprep.subr.mxu0 0.0
    %1183 = vmatpush2.msra.mxu0 %v340
    %1184 = vmatprep.subr.mxu0 0.0
    %1185 = vmatpush2.msra.mxu0 %v339
    %1186 = vmatprep.subr.mxu0 0.0
    %1187 = vmatpush2.msra.mxu0 %v338
    %1188 = vmatprep.subr.mxu0 0.0
    %1189 = vmatpush2.msra.mxu0 %v337
    %1190 = vmatprep.subr.mxu0 0.0
    %1191 = vmatpush2.msra.mxu0 %v336
    %1192 = vmatprep.subr.mxu0 0.0
    %1193 = vmatpush2.msra.mxu0 %v335
    %1194 = vmatprep.subr.mxu0 0.0
    %1195 = vmatpush2.msra.mxu0 %v334
    %1196 = vmatprep.subr.mxu0 0.0
    %1197 = vmatpush2.msra.mxu0 %v333
    %1198 = vmatprep.subr.mxu0 0.0
    %1199 = vmatpush2.msra.mxu0 %v332
    %1200 = vmatprep.subr.mxu0 0.0
    %1201 = vmatpush2.msra.mxu0 %v331
    %1202 = vmatprep.mubr.f32.mxu0 %v44
    %1203 = vmatmul.mubr.f32.gmra.mxu0 %v43
    %v1204 = vpop.f32.mrf.mxu0
    %v1205 = vadd.f32 %v1135, %v1204
    %v1206 = vpop.f32.mrf.mxu0
    %1207 = vdwg.mxu0
    %1208 = vmatprep.subr.mxu0 0.0
    %1209 = vmatpush1.msra.mxu0 %v362
    %1210 = vmatprep.subr.mxu0 0.0
    %1211 = vmatpush1.msra.mxu0 %v361
    %1212 = vmatprep.subr.mxu0 0.0
    %1213 = vmatpush1.msra.mxu0 %v360
    %1214 = vmatprep.subr.mxu0 0.0
    %1215 = vmatpush1.msra.mxu0 %v359
    %1216 = vmatprep.subr.mxu0 0.0
    %1217 = vmatpush1.msra.mxu0 %v358
    %1218 = vmatprep.subr.mxu0 0.0
    %1219 = vmatpush1.msra.mxu0 %v357
    %1220 = vmatprep.subr.mxu0 0.0
    %1221 = vmatpush1.msra.mxu0 %v356
    %1222 = vmatprep.subr.mxu0 0.0
    %1223 = vmatpush1.msra.mxu0 %v355
    %1224 = vmatprep.subr.mxu0 0.0
    %1225 = vmatpush1.msra.mxu0 %v354
    %1226 = vmatprep.subr.mxu0 0.0
    %1227 = vmatpush1.msra.mxu0 %v353
    %1228 = vmatprep.subr.mxu0 0.0
    %1229 = vmatpush1.msra.mxu0 %v352
    %1230 = vmatprep.subr.mxu0 0.0
    %1231 = vmatpush1.msra.mxu0 %v351
    %1232 = vmatprep.subr.mxu0 0.0
    %1233 = vmatpush1.msra.mxu0 %v350
    %1234 = vmatprep.subr.mxu0 0.0
    %1235 = vmatpush1.msra.mxu0 %v349
    %1236 = vmatprep.subr.mxu0 0.0
    %1237 = vmatpush1.msra.mxu0 %v348
    %1238 = vmatprep.subr.mxu0 0.0
    %1239 = vmatpush1.msra.mxu0 %v347
    %1240 = vmatprep.subr.mxu0 0.0
    %1241 = vmatpush2.msra.mxu0 %v378
    %1242 = vmatprep.subr.mxu0 0.0
    %1243 = vmatpush2.msra.mxu0 %v377
    %1244 = vmatprep.subr.mxu0 0.0
    %1245 = vmatpush2.msra.mxu0 %v376
    %1246 = vmatprep.subr.mxu0 0.0
    %1247 = vmatpush2.msra.mxu0 %v375
    %1248 = vmatprep.subr.mxu0 0.0
    %1249 = vmatpush2.msra.mxu0 %v374
    %1250 = vmatprep.subr.mxu0 0.0
    %1251 = vmatpush2.msra.mxu0 %v373
    %1252 = vmatprep.subr.mxu0 0.0
    %1253 = vmatpush2.msra.mxu0 %v372
    %1254 = vmatprep.subr.mxu0 0.0
    %1255 = vmatpush2.msra.mxu0 %v371
    %1256 = vmatprep.subr.mxu0 0.0
    %1257 = vmatpush2.msra.mxu0 %v370
    %1258 = vmatprep.subr.mxu0 0.0
    %1259 = vmatpush2.msra.mxu0 %v369
    %1260 = vmatprep.subr.mxu0 0.0
    %1261 = vmatpush2.msra.mxu0 %v368
    %1262 = vmatprep.subr.mxu0 0.0
    %1263 = vmatpush2.msra.mxu0 %v367
    %1264 = vmatprep.subr.mxu0 0.0
    %1265 = vmatpush2.msra.mxu0 %v366
    %1266 = vmatprep.subr.mxu0 0.0
    %1267 = vmatpush2.msra.mxu0 %v365
    %1268 = vmatprep.subr.mxu0 0.0
    %1269 = vmatpush2.msra.mxu0 %v364
    %1270 = vmatprep.subr.mxu0 0.0
    %1271 = vmatpush2.msra.mxu0 %v363
    %1272 = vmatprep.mubr.f32.mxu0 %v46
    %1273 = vmatmul.mubr.f32.gmra.mxu0 %v45
    %v1274 = vpop.f32.mrf.mxu0
    %v1275 = vadd.f32 %v1205, %v1274
    %v1276 = vpop.f32.mrf.mxu0
    %1277 = vdwg.mxu0
    %1278 = vmatprep.subr.mxu0 0.0
    %1279 = vmatpush1.msra.mxu0 %v394
    %1280 = vmatprep.subr.mxu0 0.0
    %1281 = vmatpush1.msra.mxu0 %v393
    %1282 = vmatprep.subr.mxu0 0.0
    %1283 = vmatpush1.msra.mxu0 %v392
    %1284 = vmatprep.subr.mxu0 0.0
    %1285 = vmatpush1.msra.mxu0 %v391
    %1286 = vmatprep.subr.mxu0 0.0
    %1287 = vmatpush1.msra.mxu0 %v390
    %1288 = vmatprep.subr.mxu0 0.0
    %1289 = vmatpush1.msra.mxu0 %v389
    %1290 = vmatprep.subr.mxu0 0.0
    %1291 = vmatpush1.msra.mxu0 %v388
    %1292 = vmatprep.subr.mxu0 0.0
    %1293 = vmatpush1.msra.mxu0 %v387
    %1294 = vmatprep.subr.mxu0 0.0
    %1295 = vmatpush1.msra.mxu0 %v386
    %1296 = vmatprep.subr.mxu0 0.0
    %1297 = vmatpush1.msra.mxu0 %v385
    %1298 = vmatprep.subr.mxu0 0.0
    %1299 = vmatpush1.msra.mxu0 %v384
    %1300 = vmatprep.subr.mxu0 0.0
    %1301 = vmatpush1.msra.mxu0 %v383
    %1302 = vmatprep.subr.mxu0 0.0
    %1303 = vmatpush1.msra.mxu0 %v382
    %1304 = vmatprep.subr.mxu0 0.0
    %1305 = vmatpush1.msra.mxu0 %v381
    %1306 = vmatprep.subr.mxu0 0.0
    %1307 = vmatpush1.msra.mxu0 %v380
    %1308 = vmatprep.subr.mxu0 0.0
    %1309 = vmatpush1.msra.mxu0 %v379
    %1310 = vmatprep.subr.mxu0 0.0
    %1311 = vmatpush2.msra.mxu0 %v410
    %1312 = vmatprep.subr.mxu0 0.0
    %1313 = vmatpush2.msra.mxu0 %v409
    %1314 = vmatprep.subr.mxu0 0.0
    %1315 = vmatpush2.msra.mxu0 %v408
    %1316 = vmatprep.subr.mxu0 0.0
    %1317 = vmatpush2.msra.mxu0 %v407
    %1318 = vmatprep.subr.mxu0 0.0
    %1319 = vmatpush2.msra.mxu0 %v406
    %1320 = vmatprep.subr.mxu0 0.0
    %1321 = vmatpush2.msra.mxu0 %v405
    %1322 = vmatprep.subr.mxu0 0.0
    %1323 = vmatpush2.msra.mxu0 %v404
    %1324 = vmatprep.subr.mxu0 0.0
    %1325 = vmatpush2.msra.mxu0 %v403
    %1326 = vmatprep.subr.mxu0 0.0
    %1327 = vmatpush2.msra.mxu0 %v402
    %1328 = vmatprep.subr.mxu0 0.0
    %1329 = vmatpush2.msra.mxu0 %v401
    %1330 = vmatprep.subr.mxu0 0.0
    %1331 = vmatpush2.msra.mxu0 %v400
    %1332 = vmatprep.subr.mxu0 0.0
    %1333 = vmatpush2.msra.mxu0 %v399
    %1334 = vmatprep.subr.mxu0 0.0
    %1335 = vmatpush2.msra.mxu0 %v398
    %1336 = vmatprep.subr.mxu0 0.0
    %1337 = vmatpush2.msra.mxu0 %v397
    %1338 = vmatprep.subr.mxu0 0.0
    %1339 = vmatpush2.msra.mxu0 %v396
    %1340 = vmatprep.subr.mxu0 0.0
    %1341 = vmatpush2.msra.mxu0 %v395
    %1342 = vmatprep.mubr.f32.mxu0 %v48
    %1343 = vmatmul.mubr.f32.gmra.mxu0 %v47
    %v1344 = vpop.f32.mrf.mxu0
    %v1345 = vadd.f32 %v1275, %v1344
    %v1346 = vpop.f32.mrf.mxu0
    %1347 = vdwg.mxu0
    %1348 = vmatprep.subr.mxu0 0.0
    %1349 = vmatpush1.msra.mxu0 %v426
    %1350 = vmatprep.subr.mxu0 0.0
    %1351 = vmatpush1.msra.mxu0 %v425
    %1352 = vmatprep.subr.mxu0 0.0
    %1353 = vmatpush1.msra.mxu0 %v424
    %1354 = vmatprep.subr.mxu0 0.0
    %1355 = vmatpush1.msra.mxu0 %v423
    %1356 = vmatprep.subr.mxu0 0.0
    %1357 = vmatpush1.msra.mxu0 %v422
    %1358 = vmatprep.subr.mxu0 0.0
    %1359 = vmatpush1.msra.mxu0 %v421
    %1360 = vmatprep.subr.mxu0 0.0
    %1361 = vmatpush1.msra.mxu0 %v420
    %1362 = vmatprep.subr.mxu0 0.0
    %1363 = vmatpush1.msra.mxu0 %v419
    %1364 = vmatprep.subr.mxu0 0.0
    %1365 = vmatpush1.msra.mxu0 %v418
    %1366 = vmatprep.subr.mxu0 0.0
    %1367 = vmatpush1.msra.mxu0 %v417
    %1368 = vmatprep.subr.mxu0 0.0
    %1369 = vmatpush1.msra.mxu0 %v416
    %1370 = vmatprep.subr.mxu0 0.0
    %1371 = vmatpush1.msra.mxu0 %v415
    %1372 = vmatprep.subr.mxu0 0.0
    %1373 = vmatpush1.msra.mxu0 %v414
    %1374 = vmatprep.subr.mxu0 0.0
    %1375 = vmatpush1.msra.mxu0 %v413
    %1376 = vmatprep.subr.mxu0 0.0
    %1377 = vmatpush1.msra.mxu0 %v412
    %1378 = vmatprep.subr.mxu0 0.0
    %1379 = vmatpush1.msra.mxu0 %v411
    %1380 = vmatprep.subr.mxu0 0.0
    %1381 = vmatpush2.msra.mxu0 %v442
    %1382 = vmatprep.subr.mxu0 0.0
    %1383 = vmatpush2.msra.mxu0 %v441
    %1384 = vmatprep.subr.mxu0 0.0
    %1385 = vmatpush2.msra.mxu0 %v440
    %1386 = vmatprep.subr.mxu0 0.0
    %1387 = vmatpush2.msra.mxu0 %v439
    %1388 = vmatprep.subr.mxu0 0.0
    %1389 = vmatpush2.msra.mxu0 %v438
    %1390 = vmatprep.subr.mxu0 0.0
    %1391 = vmatpush2.msra.mxu0 %v437
    %1392 = vmatprep.subr.mxu0 0.0
    %1393 = vmatpush2.msra.mxu0 %v436
    %1394 = vmatprep.subr.mxu0 0.0
    %1395 = vmatpush2.msra.mxu0 %v435
    %1396 = vmatprep.subr.mxu0 0.0
    %1397 = vmatpush2.msra.mxu0 %v434
    %1398 = vmatprep.subr.mxu0 0.0
    %1399 = vmatpush2.msra.mxu0 %v433
    %1400 = vmatprep.subr.mxu0 0.0
    %1401 = vmatpush2.msra.mxu0 %v432
    %1402 = vmatprep.subr.mxu0 0.0
    %1403 = vmatpush2.msra.mxu0 %v431
    %1404 = vmatprep.subr.mxu0 0.0
    %1405 = vmatpush2.msra.mxu0 %v430
    %1406 = vmatprep.subr.mxu0 0.0
    %1407 = vmatpush2.msra.mxu0 %v429
    %1408 = vmatprep.subr.mxu0 0.0
    %1409 = vmatpush2.msra.mxu0 %v428
    %1410 = vmatprep.subr.mxu0 0.0
    %1411 = vmatpush2.msra.mxu0 %v427
    %1412 = vmatprep.mubr.f32.mxu0 %v50
    %1413 = vmatmul.mubr.f32.gmra.mxu0 %v49
    %v1414 = vpop.f32.mrf.mxu0
    %v1415 = vadd.f32 %v1345, %v1414
    %v1416 = vpop.f32.mrf.mxu0
    %1417 = vdwg.mxu0
    %1418 = vmatprep.subr.mxu0 0.0
    %1419 = vmatpush1.msra.mxu0 %v458
    %1420 = vmatprep.subr.mxu0 0.0
    %1421 = vmatpush1.msra.mxu0 %v457
    %1422 = vmatprep.subr.mxu0 0.0
    %1423 = vmatpush1.msra.mxu0 %v456
    %1424 = vmatprep.subr.mxu0 0.0
    %1425 = vmatpush1.msra.mxu0 %v455
    %1426 = vmatprep.subr.mxu0 0.0
    %1427 = vmatpush1.msra.mxu0 %v454
    %1428 = vmatprep.subr.mxu0 0.0
    %1429 = vmatpush1.msra.mxu0 %v453
    %1430 = vmatprep.subr.mxu0 0.0
    %1431 = vmatpush1.msra.mxu0 %v452
    %1432 = vmatprep.subr.mxu0 0.0
    %1433 = vmatpush1.msra.mxu0 %v451
    %1434 = vmatprep.subr.mxu0 0.0
    %1435 = vmatpush1.msra.mxu0 %v450
    %1436 = vmatprep.subr.mxu0 0.0
    %1437 = vmatpush1.msra.mxu0 %v449
    %1438 = vmatprep.subr.mxu0 0.0
    %1439 = vmatpush1.msra.mxu0 %v448
    %1440 = vmatprep.subr.mxu0 0.0
    %1441 = vmatpush1.msra.mxu0 %v447
    %1442 = vmatprep.subr.mxu0 0.0
    %1443 = vmatpush1.msra.mxu0 %v446
    %1444 = vmatprep.subr.mxu0 0.0
    %1445 = vmatpush1.msra.mxu0 %v445
    %1446 = vmatprep.subr.mxu0 0.0
    %1447 = vmatpush1.msra.mxu0 %v444
    %1448 = vmatprep.subr.mxu0 0.0
    %1449 = vmatpush1.msra.mxu0 %v443
    %1450 = vmatprep.subr.mxu0 0.0
    %1451 = vmatpush2.msra.mxu0 %v474
    %1452 = vmatprep.subr.mxu0 0.0
    %1453 = vmatpush2.msra.mxu0 %v473
    %1454 = vmatprep.subr.mxu0 0.0
    %1455 = vmatpush2.msra.mxu0 %v472
    %1456 = vmatprep.subr.mxu0 0.0
    %1457 = vmatpush2.msra.mxu0 %v471
    %1458 = vmatprep.subr.mxu0 0.0
    %1459 = vmatpush2.msra.mxu0 %v470
    %1460 = vmatprep.subr.mxu0 0.0
    %1461 = vmatpush2.msra.mxu0 %v469
    %1462 = vmatprep.subr.mxu0 0.0
    %1463 = vmatpush2.msra.mxu0 %v468
    %1464 = vmatprep.subr.mxu0 0.0
    %1465 = vmatpush2.msra.mxu0 %v467
    %1466 = vmatprep.subr.mxu0 0.0
    %1467 = vmatpush2.msra.mxu0 %v466
    %1468 = vmatprep.subr.mxu0 0.0
    %1469 = vmatpush2.msra.mxu0 %v465
    %1470 = vmatprep.subr.mxu0 0.0
    %1471 = vmatpush2.msra.mxu0 %v464
    %1472 = vmatprep.subr.mxu0 0.0
    %1473 = vmatpush2.msra.mxu0 %v463
    %1474 = vmatprep.subr.mxu0 0.0
    %1475 = vmatpush2.msra.mxu0 %v462
    %1476 = vmatprep.subr.mxu0 0.0
    %1477 = vmatpush2.msra.mxu0 %v461
    %1478 = vmatprep.subr.mxu0 0.0
    %1479 = vmatpush2.msra.mxu0 %v460
    %1480 = vmatprep.subr.mxu0 0.0
    %1481 = vmatpush2.msra.mxu0 %v459
    %1482 = vmatprep.mubr.f32.mxu0 %v52
    %1483 = vmatmul.mubr.f32.gmra.mxu0 %v51
    %v1484 = vpop.f32.mrf.mxu0
    %v1485 = vadd.f32 %v1415, %v1484
    %v1486 = vpop.f32.mrf.mxu0
    %1487 = vdwg.mxu0
    %1488 = vmatprep.subr.mxu0 0.0
    %1489 = vmatpush1.msra.mxu0 %v490
    %1490 = vmatprep.subr.mxu0 0.0
    %1491 = vmatpush1.msra.mxu0 %v489
    %1492 = vmatprep.subr.mxu0 0.0
    %1493 = vmatpush1.msra.mxu0 %v488
    %1494 = vmatprep.subr.mxu0 0.0
    %1495 = vmatpush1.msra.mxu0 %v487
    %1496 = vmatprep.subr.mxu0 0.0
    %1497 = vmatpush1.msra.mxu0 %v486
    %1498 = vmatprep.subr.mxu0 0.0
    %1499 = vmatpush1.msra.mxu0 %v485
    %1500 = vmatprep.subr.mxu0 0.0
    %1501 = vmatpush1.msra.mxu0 %v484
    %1502 = vmatprep.subr.mxu0 0.0
    %1503 = vmatpush1.msra.mxu0 %v483
    %1504 = vmatprep.subr.mxu0 0.0
    %1505 = vmatpush1.msra.mxu0 %v482
    %1506 = vmatprep.subr.mxu0 0.0
    %1507 = vmatpush1.msra.mxu0 %v481
    %1508 = vmatprep.subr.mxu0 0.0
    %1509 = vmatpush1.msra.mxu0 %v480
    %1510 = vmatprep.subr.mxu0 0.0
    %1511 = vmatpush1.msra.mxu0 %v479
    %1512 = vmatprep.subr.mxu0 0.0
    %1513 = vmatpush1.msra.mxu0 %v478
    %1514 = vmatprep.subr.mxu0 0.0
    %1515 = vmatpush1.msra.mxu0 %v477
    %1516 = vmatprep.subr.mxu0 0.0
    %1517 = vmatpush1.msra.mxu0 %v476
    %1518 = vmatprep.subr.mxu0 0.0
    %1519 = vmatpush1.msra.mxu0 %v475
    %1520 = vmatprep.subr.mxu0 0.0
    %1521 = vmatpush2.msra.mxu0 %v506
    %1522 = vmatprep.subr.mxu0 0.0
    %1523 = vmatpush2.msra.mxu0 %v505
    %1524 = vmatprep.subr.mxu0 0.0
    %1525 = vmatpush2.msra.mxu0 %v504
    %1526 = vmatprep.subr.mxu0 0.0
    %1527 = vmatpush2.msra.mxu0 %v503
    %1528 = vmatprep.subr.mxu0 0.0
    %1529 = vmatpush2.msra.mxu0 %v502
    %1530 = vmatprep.subr.mxu0 0.0
    %1531 = vmatpush2.msra.mxu0 %v501
    %1532 = vmatprep.subr.mxu0 0.0
    %1533 = vmatpush2.msra.mxu0 %v500
    %1534 = vmatprep.subr.mxu0 0.0
    %1535 = vmatpush2.msra.mxu0 %v499
    %1536 = vmatprep.subr.mxu0 0.0
    %1537 = vmatpush2.msra.mxu0 %v498
    %1538 = vmatprep.subr.mxu0 0.0
    %1539 = vmatpush2.msra.mxu0 %v497
    %1540 = vmatprep.subr.mxu0 0.0
    %1541 = vmatpush2.msra.mxu0 %v496
    %1542 = vmatprep.subr.mxu0 0.0
    %1543 = vmatpush2.msra.mxu0 %v495
    %1544 = vmatprep.subr.mxu0 0.0
    %1545 = vmatpush2.msra.mxu0 %v494
    %1546 = vmatprep.subr.mxu0 0.0
    %1547 = vmatpush2.msra.mxu0 %v493
    %1548 = vmatprep.subr.mxu0 0.0
    %1549 = vmatpush2.msra.mxu0 %v492
    %1550 = vmatprep.subr.mxu0 0.0
    %1551 = vmatpush2.msra.mxu0 %v491
    %1552 = vmatprep.mubr.f32.mxu0 %v54
    %1553 = vmatmul.mubr.f32.gmra.mxu0 %v53
    %v1554 = vpop.f32.mrf.mxu0
    %v1555 = vadd.f32 %v1485, %v1554
    %v1556 = vpop.f32.mrf.mxu0
    %1557 = vdwg.mxu0
    %1558 = vmatprep.subr.mxu0 0.0
    %1559 = vmatpush1.msra.mxu0 %v522
    %1560 = vmatprep.subr.mxu0 0.0
    %1561 = vmatpush1.msra.mxu0 %v521
    %1562 = vmatprep.subr.mxu0 0.0
    %1563 = vmatpush1.msra.mxu0 %v520
    %1564 = vmatprep.subr.mxu0 0.0
    %1565 = vmatpush1.msra.mxu0 %v519
    %1566 = vmatprep.subr.mxu0 0.0
    %1567 = vmatpush1.msra.mxu0 %v518
    %1568 = vmatprep.subr.mxu0 0.0
    %1569 = vmatpush1.msra.mxu0 %v517
    %1570 = vmatprep.subr.mxu0 0.0
    %1571 = vmatpush1.msra.mxu0 %v516
    %1572 = vmatprep.subr.mxu0 0.0
    %1573 = vmatpush1.msra.mxu0 %v515
    %1574 = vmatprep.subr.mxu0 0.0
    %1575 = vmatpush1.msra.mxu0 %v514
    %1576 = vmatprep.subr.mxu0 0.0
    %1577 = vmatpush1.msra.mxu0 %v513
    %1578 = vmatprep.subr.mxu0 0.0
    %1579 = vmatpush1.msra.mxu0 %v512
    %1580 = vmatprep.subr.mxu0 0.0
    %1581 = vmatpush1.msra.mxu0 %v511
    %1582 = vmatprep.subr.mxu0 0.0
    %1583 = vmatpush1.msra.mxu0 %v510
    %1584 = vmatprep.subr.mxu0 0.0
    %1585 = vmatpush1.msra.mxu0 %v509
    %1586 = vmatprep.subr.mxu0 0.0
    %1587 = vmatpush1.msra.mxu0 %v508
    %1588 = vmatprep.subr.mxu0 0.0
    %1589 = vmatpush1.msra.mxu0 %v507
    %1590 = vmatprep.subr.mxu0 0.0
    %1591 = vmatpush2.msra.mxu0 %v538
    %1592 = vmatprep.subr.mxu0 0.0
    %1593 = vmatpush2.msra.mxu0 %v537
    %1594 = vmatprep.subr.mxu0 0.0
    %1595 = vmatpush2.msra.mxu0 %v536
    %1596 = vmatprep.subr.mxu0 0.0
    %1597 = vmatpush2.msra.mxu0 %v535
    %1598 = vmatprep.subr.mxu0 0.0
    %1599 = vmatpush2.msra.mxu0 %v534
    %1600 = vmatprep.subr.mxu0 0.0
    %1601 = vmatpush2.msra.mxu0 %v533
    %1602 = vmatprep.subr.mxu0 0.0
    %1603 = vmatpush2.msra.mxu0 %v532
    %1604 = vmatprep.subr.mxu0 0.0
    %1605 = vmatpush2.msra.mxu0 %v531
    %1606 = vmatprep.subr.mxu0 0.0
    %1607 = vmatpush2.msra.mxu0 %v530
    %1608 = vmatprep.subr.mxu0 0.0
    %1609 = vmatpush2.msra.mxu0 %v529
    %1610 = vmatprep.subr.mxu0 0.0
    %1611 = vmatpush2.msra.mxu0 %v528
    %1612 = vmatprep.subr.mxu0 0.0
    %1613 = vmatpush2.msra.mxu0 %v527
    %1614 = vmatprep.subr.mxu0 0.0
    %1615 = vmatpush2.msra.mxu0 %v526
    %1616 = vmatprep.subr.mxu0 0.0
    %1617 = vmatpush2.msra.mxu0 %v525
    %1618 = vmatprep.subr.mxu0 0.0
    %1619 = vmatpush2.msra.mxu0 %v524
    %1620 = vmatprep.subr.mxu0 0.0
    %1621 = vmatpush2.msra.mxu0 %v523
    %1622 = vmatprep.mubr.f32.mxu0 %v56
    %1623 = vmatmul.mubr.f32.gmra.mxu0 %v55
    %v1624 = vpop.f32.mrf.mxu0
    %v1625 = vadd.f32 %v1555, %v1624
    %v1626 = vpop.f32.mrf.mxu0
    %1627 = vdwg.mxu0
    %1628 = vmatprep.subr.mxu0 0.0
    %1629 = vmatpush1.msra.mxu0 %v554
    %1630 = vmatprep.subr.mxu0 0.0
    %1631 = vmatpush1.msra.mxu0 %v553
    %1632 = vmatprep.subr.mxu0 0.0
    %1633 = vmatpush1.msra.mxu0 %v552
    %1634 = vmatprep.subr.mxu0 0.0
    %1635 = vmatpush1.msra.mxu0 %v551
    %1636 = vmatprep.subr.mxu0 0.0
    %1637 = vmatpush1.msra.mxu0 %v550
    %1638 = vmatprep.subr.mxu0 0.0
    %1639 = vmatpush1.msra.mxu0 %v549
    %1640 = vmatprep.subr.mxu0 0.0
    %1641 = vmatpush1.msra.mxu0 %v548
    %1642 = vmatprep.subr.mxu0 0.0
    %1643 = vmatpush1.msra.mxu0 %v547
    %1644 = vmatprep.subr.mxu0 0.0
    %1645 = vmatpush1.msra.mxu0 %v546
    %1646 = vmatprep.subr.mxu0 0.0
    %1647 = vmatpush1.msra.mxu0 %v545
    %1648 = vmatprep.subr.mxu0 0.0
    %1649 = vmatpush1.msra.mxu0 %v544
    %1650 = vmatprep.subr.mxu0 0.0
    %1651 = vmatpush1.msra.mxu0 %v543
    %1652 = vmatprep.subr.mxu0 0.0
    %1653 = vmatpush1.msra.mxu0 %v542
    %1654 = vmatprep.subr.mxu0 0.0
    %1655 = vmatpush1.msra.mxu0 %v541
    %1656 = vmatprep.subr.mxu0 0.0
    %1657 = vmatpush1.msra.mxu0 %v540
    %1658 = vmatprep.subr.mxu0 0.0
    %1659 = vmatpush1.msra.mxu0 %v539
    %1660 = vmatprep.subr.mxu0 0.0
    %1661 = vmatpush2.msra.mxu0 %v570
    %1662 = vmatprep.subr.mxu0 0.0
    %1663 = vmatpush2.msra.mxu0 %v569
    %1664 = vmatprep.subr.mxu0 0.0
    %1665 = vmatpush2.msra.mxu0 %v568
    %1666 = vmatprep.subr.mxu0 0.0
    %1667 = vmatpush2.msra.mxu0 %v567
    %1668 = vmatprep.subr.mxu0 0.0
    %1669 = vmatpush2.msra.mxu0 %v566
    %1670 = vmatprep.subr.mxu0 0.0
    %1671 = vmatpush2.msra.mxu0 %v565
    %1672 = vmatprep.subr.mxu0 0.0
    %1673 = vmatpush2.msra.mxu0 %v564
    %1674 = vmatprep.subr.mxu0 0.0
    %1675 = vmatpush2.msra.mxu0 %v563
    %1676 = vmatprep.subr.mxu0 0.0
    %1677 = vmatpush2.msra.mxu0 %v562
    %1678 = vmatprep.subr.mxu0 0.0
    %1679 = vmatpush2.msra.mxu0 %v561
    %1680 = vmatprep.subr.mxu0 0.0
    %1681 = vmatpush2.msra.mxu0 %v560
    %1682 = vmatprep.subr.mxu0 0.0
    %1683 = vmatpush2.msra.mxu0 %v559
    %1684 = vmatprep.subr.mxu0 0.0
    %1685 = vmatpush2.msra.mxu0 %v558
    %1686 = vmatprep.subr.mxu0 0.0
    %1687 = vmatpush2.msra.mxu0 %v557
    %1688 = vmatprep.subr.mxu0 0.0
    %1689 = vmatpush2.msra.mxu0 %v556
    %1690 = vmatprep.subr.mxu0 0.0
    %1691 = vmatpush2.msra.mxu0 %v555
    %1692 = vmatprep.mubr.f32.mxu0 %v58
    %1693 = vmatmul.mubr.f32.gmra.mxu0 %v57
    %v1694 = vpop.f32.mrf.mxu0
    %v1695 = vadd.f32 %v1625, %v1694
    %v1696 = vpop.f32.mrf.mxu0
    %1697 = vdwg.mxu0
    %v1698 = vmax.f32 %v1695, 0.0
    %v1699 = vld [vmem:[%s3] sm:$0xff]
    %v1700 = vld [vmem:[%s3 + $0x8] sm:$0xff]
    %v1701 = vld [vmem:[%s3 + $0x10] sm:$0xff]
    %v1702 = vld [vmem:[%s3 + $0x18] sm:$0xff]
    %v1703 = vld [vmem:[%s4] sm:$0x1]
    %v1705 = vlaneseq
    %v1706 = vshrl.u32 %v1705, 7
    %v1707 = vsub.s32 0, %v1706
    %v1708 = vrot.slane %v1703, %v1707
    %vm1710 = vcmask 261120
    %v1712 = vsel %vm1710, %v1698, 0
    %1714 = vmatprep.subr.mxu0 0.0
    %1715 = vmatpush1.msra.mxu0 0.0
    %1716 = vmatprep.subr.mxu0 0.0
    %1717 = vmatpush1.msra.mxu0 0.0
    %1718 = vmatprep.subr.mxu0 0.0
    %1719 = vmatpush1.msra.mxu0 0.0
    %1720 = vmatprep.subr.mxu0 0.0
    %1721 = vmatpush1.msra.mxu0 0.0
    %1722 = vmatprep.subr.mxu0 0.0
    %1723 = vmatpush1.msra.mxu0 0.0
    %1724 = vmatprep.subr.mxu0 0.0
    %1725 = vmatpush1.msra.mxu0 0.0
    %1726 = vmatprep.subr.mxu0 0.0
    %1727 = vmatpush1.msra.mxu0 0.0
    %1728 = vmatprep.subr.mxu0 0.0
    %1729 = vmatpush1.msra.mxu0 0.0
    %1730 = vmatprep.subr.mxu0 0.0
    %1731 = vmatpush1.msra.mxu0 0.0
    %1732 = vmatprep.subr.mxu0 0.0
    %1733 = vmatpush1.msra.mxu0 0.0
    %1734 = vmatprep.subr.mxu0 0.0
    %1735 = vmatpush1.msra.mxu0 0.0
    %1736 = vmatprep.subr.mxu0 0.0
    %1737 = vmatpush1.msra.mxu0 0.0
    %1738 = vmatprep.subr.mxu0 0.0
    %1739 = vmatpush1.msra.mxu0 %v1702
    %1740 = vmatprep.subr.mxu0 0.0
    %1741 = vmatpush1.msra.mxu0 %v1701
    %1742 = vmatprep.subr.mxu0 0.0
    %1743 = vmatpush1.msra.mxu0 %v1700
    %1744 = vmatprep.subr.mxu0 0.0
    %1745 = vmatpush1.msra.mxu0 %v1699
    %1746 = vmatprep.subr.mxu0 0.0
    %1747 = vmatpush2.msra.mxu0 0.0
    %1748 = vmatprep.subr.mxu0 0.0
    %1749 = vmatpush2.msra.mxu0 0.0
    %1750 = vmatprep.subr.mxu0 0.0
    %1751 = vmatpush2.msra.mxu0 0.0
    %1752 = vmatprep.subr.mxu0 0.0
    %1753 = vmatpush2.msra.mxu0 0.0
    %1754 = vmatprep.subr.mxu0 0.0
    %1755 = vmatpush2.msra.mxu0 0.0
    %1756 = vmatprep.subr.mxu0 0.0
    %1757 = vmatpush2.msra.mxu0 0.0
    %1758 = vmatprep.subr.mxu0 0.0
    %1759 = vmatpush2.msra.mxu0 0.0
    %1760 = vmatprep.subr.mxu0 0.0
    %1761 = vmatpush2.msra.mxu0 0.0
    %1762 = vmatprep.subr.mxu0 0.0
    %1763 = vmatpush2.msra.mxu0 0.0
    %1764 = vmatprep.subr.mxu0 0.0
    %1765 = vmatpush2.msra.mxu0 0.0
    %1766 = vmatprep.subr.mxu0 0.0
    %1767 = vmatpush2.msra.mxu0 0.0
    %1768 = vmatprep.subr.mxu0 0.0
    %1769 = vmatpush2.msra.mxu0 0.0
    %1770 = vmatprep.subr.mxu0 0.0
    %1771 = vmatpush2.msra.mxu0 0.0
    %1772 = vmatprep.subr.mxu0 0.0
    %1773 = vmatpush2.msra.mxu0 0.0
    %1774 = vmatprep.subr.mxu0 0.0
    %1775 = vmatpush2.msra.mxu0 0.0
    %1776 = vmatprep.subr.mxu0 0.0
    %1777 = vmatpush2.msra.mxu0 0.0
    %1778 = vmatprep.mubr.f32.mxu0 0.0
    %1779 = vmatmul.mubr.f32.gmra.mxu0 %v1712
    %v1780 = vpop.f32.mrf.mxu0
    %v1781 = vadd.f32 %v1708, %v1780
    %v1782 = vpop.f32.mrf.mxu0
    %1783 = vdwg.mxu0
    %v1784 = vmax.f32 %v1781, 0.0
    %v1785 = vld [vmem:[%s5] sm:$0xff]
    %v1786 = vld [vmem:[%s5 + $0x8] sm:$0xff]
    %v1787 = vld [vmem:[%s5 + $0x10] sm:$0xff]
    %v1788 = vld [vmem:[%s5 + $0x18] sm:$0xff]
    %v1789 = vld [vmem:[%s6] sm:$0x1]
    %v1791 = vlaneseq
    %v1792 = vshrl.u32 %v1791, 7
    %v1793 = vsub.s32 0, %v1792
    %v1794 = vrot.slane %v1789, %v1793
    %v1797 = vsel %vm1710, %v1784, 0
    %1799 = vmatprep.subr.mxu0 0.0
    %1800 = vmatpush1.msra.mxu0 0.0
    %1801 = vmatprep.subr.mxu0 0.0
    %1802 = vmatpush1.msra.mxu0 0.0
    %1803 = vmatprep.subr.mxu0 0.0
    %1804 = vmatpush1.msra.mxu0 0.0
    %1805 = vmatprep.subr.mxu0 0.0
    %1806 = vmatpush1.msra.mxu0 0.0
    %1807 = vmatprep.subr.mxu0 0.0
    %1808 = vmatpush1.msra.mxu0 0.0
    %1809 = vmatprep.subr.mxu0 0.0
    %1810 = vmatpush1.msra.mxu0 0.0
    %1811 = vmatprep.subr.mxu0 0.0
    %1812 = vmatpush1.msra.mxu0 0.0
    %1813 = vmatprep.subr.mxu0 0.0
    %1814 = vmatpush1.msra.mxu0 0.0
    %1815 = vmatprep.subr.mxu0 0.0
    %1816 = vmatpush1.msra.mxu0 0.0
    %1817 = vmatprep.subr.mxu0 0.0
    %1818 = vmatpush1.msra.mxu0 0.0
    %1819 = vmatprep.subr.mxu0 0.0
    %1820 = vmatpush1.msra.mxu0 0.0
    %1821 = vmatprep.subr.mxu0 0.0
    %1822 = vmatpush1.msra.mxu0 0.0
    %1823 = vmatprep.subr.mxu0 0.0
    %1824 = vmatpush1.msra.mxu0 %v1788
    %1825 = vmatprep.subr.mxu0 0.0
    %1826 = vmatpush1.msra.mxu0 %v1787
    %1827 = vmatprep.subr.mxu0 0.0
    %1828 = vmatpush1.msra.mxu0 %v1786
    %1829 = vmatprep.subr.mxu0 0.0
    %1830 = vmatpush1.msra.mxu0 %v1785
    %1831 = vmatprep.subr.mxu0 0.0
    %1832 = vmatpush2.msra.mxu0 0.0
    %1833 = vmatprep.subr.mxu0 0.0
    %1834 = vmatpush2.msra.mxu0 0.0
    %1835 = vmatprep.subr.mxu0 0.0
    %1836 = vmatpush2.msra.mxu0 0.0
    %1837 = vmatprep.subr.mxu0 0.0
    %1838 = vmatpush2.msra.mxu0 0.0
    %1839 = vmatprep.subr.mxu0 0.0
    %1840 = vmatpush2.msra.mxu0 0.0
    %1841 = vmatprep.subr.mxu0 0.0
    %1842 = vmatpush2.msra.mxu0 0.0
    %1843 = vmatprep.subr.mxu0 0.0
    %1844 = vmatpush2.msra.mxu0 0.0
    %1845 = vmatprep.subr.mxu0 0.0
    %1846 = vmatpush2.msra.mxu0 0.0
    %1847 = vmatprep.subr.mxu0 0.0
    %1848 = vmatpush2.msra.mxu0 0.0
    %1849 = vmatprep.subr.mxu0 0.0
    %1850 = vmatpush2.msra.mxu0 0.0
    %1851 = vmatprep.subr.mxu0 0.0
    %1852 = vmatpush2.msra.mxu0 0.0
    %1853 = vmatprep.subr.mxu0 0.0
    %1854 = vmatpush2.msra.mxu0 0.0
    %1855 = vmatprep.subr.mxu0 0.0
    %1856 = vmatpush2.msra.mxu0 0.0
    %1857 = vmatprep.subr.mxu0 0.0
    %1858 = vmatpush2.msra.mxu0 0.0
    %1859 = vmatprep.subr.mxu0 0.0
    %1860 = vmatpush2.msra.mxu0 0.0
    %1861 = vmatprep.subr.mxu0 0.0
    %1862 = vmatpush2.msra.mxu0 0.0
    %1863 = vmatprep.mubr.f32.mxu0 0.0
    %1864 = vmatmul.mubr.f32.gmra.mxu0 %v1797
    %v1865 = vpop.f32.mrf.mxu0
    %v1866 = vadd.f32 %v1794, %v1865
    %v1867 = vpop.f32.mrf.mxu0
    %1868 = vdwg.mxu0
    %1869 = vst [vmem:[#allocation2] sm:$0xff] %v1866
    // Predicated region
    $region30: #{tpu_custom_call.1} parent=1 // pred_check
      _
    $region31: #{tpu_custom_call.1} parent=1 // pred_check_branch
      %1871 = sbr.rel (0) target = $region33
    $region32: #{tpu_custom_call.1} parent=1 // pred_region
      %s1873 = ssub.s32 128, 128
      %1874 = vsyncadd [#allocation3], %s1873
      %s1876 = sshll.u32 [#allocation2], 4
      %s1877 = int_to_ptr.vmem [resolvable:$true] %s1876
      %1879 = dma.vmem_to_hbm [thread:$0]  %s1877, 128, %s7, [#allocation3]
    $region33: #{tpu_custom_call.1} parent=1 // pred_fallthru
      _
    // Predicated region
    $region34: #{tpu_custom_call.1} parent=1 // pred_check
      _
    $region35: #{tpu_custom_call.1} parent=1 // pred_check_branch
      %1881 = sbr.rel (0) target = $region37
    $region36: #{tpu_custom_call.1} parent=1 // pred_region
      %1882 = dma.done [#allocation3], 128
    $region37: #{tpu_custom_call.1} parent=1 // pred_fallthru
      _
    %1883 = vsyncpa [#allocation3], 1

// kernel: tpu_custom_call.1
$region0: #{tpu_custom_call.1}
  #allocation0 [shape = 'u32[]', space=smem, size = 0x4, offset = 0x4, fixed_abs, tag = 'smem constant byte address 0x4 - core index']
  #allocation1 [shape = 'u32[144,128]{1,0:T(1,128)}', space=vmem, size = 0x12000, scoped, tag = 'internal scratch']
  %s0 = inlined_call_operand.vmem [shape: f32[8,4096], index: 0, kind: input, shape index: {}]
  %s1 = inlined_call_operand.vmem [shape: f32[4096,32], index: 1, kind: input, shape index: {}]
  %s2 = inlined_call_operand.vmem [shape: f32[1,32], index: 2, kind: input, shape index: {}]
  %s3 = inlined_call_operand.vmem [shape: f32[32,32], index: 3, kind: input, shape index: {}]
  %s4 = inlined_call_operand.vmem [shape: f32[1,32], index: 4, kind: input, shape index: {}]
  %s5 = inlined_call_operand.vmem [shape: f32[32,128], index: 5, kind: input, shape index: {}]
  %s6 = inlined_call_operand.vmem [shape: f32[1,128], index: 6, kind: input, shape index: {}]
  %s7 = inlined_call_operand.hbm [shape: f32[8,128], index: 7, kind: output, shape index: {}]
  %s8 = sld [smem:[#allocation0]]
  $region38: #{tpu_custom_call.1} parent=0
    _
  %s10 = ssub.s32 1, %s8
  %s11 = scalar_select 0, %s10, %s8
  $region1: #{tpu_custom_call.1} parent=0
    #allocation2 [shape = 'u8[4096]{0}', space=vmem, size = 0x1000, scoped, tag = 'output window, operand 0, single buffered']
    #allocation3 [shape = 's32[1]{0}', space=sflag, size = 0x4, scoped, tag = 'scoped memory for tpu_custom_call.1']
    %12 = vsyncpa [#allocation3], 0
    // Predicated region
    $region2: #{tpu_custom_call.1} parent=1 // pred_check
      _
    $region3: #{tpu_custom_call.1} parent=1 // pred_check_branch
      %14 = sbr.rel (0) target = $region5
    $region4: #{tpu_custom_call.1} parent=1 // pred_region
      _
    $region5: #{tpu_custom_call.1} parent=1 // pred_fallthru
      _
    // Predicated region
    $region6: #{tpu_custom_call.1} parent=1 // pred_check
      _
    $region7: #{tpu_custom_call.1} parent=1 // pred_check_branch
      %16 = sbr.rel (0) target = $region9
    $region8: #{tpu_custom_call.1} parent=1 // pred_region
      _
    $region9: #{tpu_custom_call.1} parent=1 // pred_fallthru
      _
    // Predicated region
    $region10: #{tpu_custom_call.1} parent=1 // pred_check
      _
    $region11: #{tpu_custom_call.1} parent=1 // pred_check_branch
      %18 = sbr.rel (0) target = $region13
    $region12: #{tpu_custom_call.1} parent=1 // pred_region
      _
    $region13: #{tpu_custom_call.1} parent=1 // pred_fallthru
      _
    // Predicated region
    $region14: #{tpu_custom_call.1} parent=1 // pred_check
      _
    $region15: #{tpu_custom_call.1} parent=1 // pred_check_branch
      %20 = sbr.rel (0) target = $region17
    $region16: #{tpu_custom_call.1} parent=1 // pred_region
      _
    $region17: #{tpu_custom_call.1} parent=1 // pred_fallthru
      _
    // Predicated region
    $region18: #{tpu_custom_call.1} parent=1 // pred_check
      _
    $region19: #{tpu_custom_call.1} parent=1 // pred_check_branch
      %22 = sbr.rel (0) target = $region21
    $region20: #{tpu_custom_call.1} parent=1 // pred_region
      _
    $region21: #{tpu_custom_call.1} parent=1 // pred_fallthru
      _
    // Predicated region
    $region22: #{tpu_custom_call.1} parent=1 // pred_check
      _
    $region23: #{tpu_custom_call.1} parent=1 // pred_check_branch
      %24 = sbr.rel (0) target = $region25
    $region24: #{tpu_custom_call.1} parent=1 // pred_region
      _
    $region25: #{tpu_custom_call.1} parent=1 // pred_fallthru
      _
    // Predicated region
    $region26: #{tpu_custom_call.1} parent=1 // pred_check
      _
    $region27: #{tpu_custom_call.1} parent=1 // pred_check_branch
      %26 = sbr.rel (0) target = $region29
    $region28: #{tpu_custom_call.1} parent=1 // pred_region
      _
    $region29: #{tpu_custom_call.1} parent=1 // pred_fallthru
      _
    %v27 = vld [vmem:[%s0] sm:$0xff]
    %v28 = vld [vmem:[%s0 + $0x8] sm:$0xff]
    %v29 = vld [vmem:[%s0 + $0x10] sm:$0xff]
    %v30 = vld [vmem:[%s0 + $0x18] sm:$0xff]
    %v31 = vld [vmem:[%s0 + $0x20] sm:$0xff]
    %v32 = vld [vmem:[%s0 + $0x28] sm:$0xff]
    %v33 = vld [vmem:[%s0 + $0x30] sm:$0xff]
    %v34 = vld [vmem:[%s0 + $0x38] sm:$0xff]
    %v35 = vld [vmem:[%s0 + $0x40] sm:$0xff]
    %v36 = vld [vmem:[%s0 + $0x48] sm:$0xff]
    %v37 = vld [vmem:[%s0 + $0x50] sm:$0xff]
    %v38 = vld [vmem:[%s0 + $0x58] sm:$0xff]
    %v39 = vld [vmem:[%s0 + $0x60] sm:$0xff]
    %v40 = vld [vmem:[%s0 + $0x68] sm:$0xff]
    %v41 = vld [vmem:[%s0 + $0x70] sm:$0xff]
    %v42 = vld [vmem:[%s0 + $0x78] sm:$0xff]
    %v43 = vld [vmem:[%s0 + $0x80] sm:$0xff]
    %v44 = vld [vmem:[%s0 + $0x88] sm:$0xff]
    %v45 = vld [vmem:[%s0 + $0x90] sm:$0xff]
    %v46 = vld [vmem:[%s0 + $0x98] sm:$0xff]
    %v47 = vld [vmem:[%s0 + $0xa0] sm:$0xff]
    %v48 = vld [vmem:[%s0 + $0xa8] sm:$0xff]
    %v49 = vld [vmem:[%s0 + $0xb0] sm:$0xff]
    %v50 = vld [vmem:[%s0 + $0xb8] sm:$0xff]
    %v51 = vld [vmem:[%s0 + $0xc0] sm:$0xff]
    %v52 = vld [vmem:[%s0 + $0xc8] sm:$0xff]
    %v53 = vld [vmem:[%s0 + $0xd0] sm:$0xff]
    %v54 = vld [vmem:[%s0 + $0xd8] sm:$0xff]
    %v55 = vld [vmem:[%s0 + $0xe0] sm:$0xff]
    %v56 = vld [vmem:[%s0 + $0xe8] sm:$0xff]
    %v57 = vld [vmem:[%s0 + $0xf0] sm:$0xff]
    %v58 = vld [vmem:[%s0 + $0xf8] sm:$0xff]
    %v59 = vld [vmem:[%s1] sm:$0xff]
    %v60 = vld [vmem:[%s1 + $0x8] sm:$0xff]
    %v61 = vld [vmem:[%s1 + $0x10] sm:$0xff]
    %v62 = vld [vmem:[%s1 + $0x18] sm:$0xff]
    %v63 = vld [vmem:[%s1 + $0x20] sm:$0xff]
    %v64 = vld [vmem:[%s1 + $0x28] sm:$0xff]
    %v65 = vld [vmem:[%s1 + $0x30] sm:$0xff]
    %v66 = vld [vmem:[%s1 + $0x38] sm:$0xff]
    %v67 = vld [vmem:[%s1 + $0x40] sm:$0xff]
    %v68 = vld [vmem:[%s1 + $0x48] sm:$0xff]
    %v69 = vld [vmem:[%s1 + $0x50] sm:$0xff]
    %v70 = vld [vmem:[%s1 + $0x58] sm:$0xff]
    %v71 = vld [vmem:[%s1 + $0x60] sm:$0xff]
    %v72 = vld [vmem:[%s1 + $0x68] sm:$0xff]
    %v73 = vld [vmem:[%s1 + $0x70] sm:$0xff]
    %v74 = vld [vmem:[%s1 + $0x78] sm:$0xff]
    %v75 = vld [vmem:[%s1 + $0x80] sm:$0xff]
    %v76 = vld [vmem:[%s1 + $0x88] sm:$0xff]
    %v77 = vld [vmem:[%s1 + $0x90] sm:$0xff]
    %v78 = vld [vmem:[%s1 + $0x98] sm:$0xff]
    %v79 = vld [vmem:[%s1 + $0xa0] sm:$0xff]
    %v80 = vld [vmem:[%s1 + $0xa8] sm:$0xff]
    %v81 = vld [vmem:[%s1 + $0xb0] sm:$0xff]
    %v82 = vld [vmem:[%s1 + $0xb8] sm:$0xff]
    %v83 = vld [vmem:[%s1 + $0xc0] sm:$0xff]
    %v84 = vld [vmem:[%s1 + $0xc8] sm:$0xff]
    %v85 = vld [vmem:[%s1 + $0xd0] sm:$0xff]
    %v86 = vld [vmem:[%s1 + $0xd8] sm:$0xff]
    %v87 = vld [vmem:[%s1 + $0xe0] sm:$0xff]
    %v88 = vld [vmem:[%s1 + $0xe8] sm:$0xff]
    %v89 = vld [vmem:[%s1 + $0xf0] sm:$0xff]
    %v90 = vld [vmem:[%s1 + $0xf8] sm:$0xff]
    %v91 = vld [vmem:[%s1 + $0x100] sm:$0xff]
    %v92 = vld [vmem:[%s1 + $0x108] sm:$0xff]
    %v93 = vld [vmem:[%s1 + $0x110] sm:$0xff]
    %v94 = vld [vmem:[%s1 + $0x118] sm:$0xff]
    %v95 = vld [vmem:[%s1 + $0x120] sm:$0xff]
    %v96 = vld [vmem:[%s1 + $0x128] sm:$0xff]
    %v97 = vld [vmem:[%s1 + $0x130] sm:$0xff]
    %v98 = vld [vmem:[%s1 + $0x138] sm:$0xff]
    %v99 = vld [vmem:[%s1 + $0x140] sm:$0xff]
    %v100 = vld [vmem:[%s1 + $0x148] sm:$0xff]
    %v101 = vld [vmem:[%s1 + $0x150] sm:$0xff]
    %v102 = vld [vmem:[%s1 + $0x158] sm:$0xff]
    %v103 = vld [vmem:[%s1 + $0x160] sm:$0xff]
    %v104 = vld [vmem:[%s1 + $0x168] sm:$0xff]
    %v105 = vld [vmem:[%s1 + $0x170] sm:$0xff]
    %v106 = vld [vmem:[%s1 + $0x178] sm:$0xff]
    %v107 = vld [vmem:[%s1 + $0x180] sm:$0xff]
    %v108 = vld [vmem:[%s1 + $0x188] sm:$0xff]
    %v109 = vld [vmem:[%s1 + $0x190] sm:$0xff]
    %v110 = vld [vmem:[%s1 + $0x198] sm:$0xff]
    %v111 = vld [vmem:[%s1 + $0x1a0] sm:$0xff]
    %v112 = vld [vmem:[%s1 + $0x1a8] sm:$0xff]
    %v113 = vld [vmem:[%s1 + $0x1b0] sm:$0xff]
    %v114 = vld [vmem:[%s1 + $0x1b8] sm:$0xff]
    %v115 = vld [vmem:[%s1 + $0x1c0] sm:$0xff]
    %v116 = vld [vmem:[%s1 + $0x1c8] sm:$0xff]
    %v117 = vld [vmem:[%s1 + $0x1d0] sm:$0xff]
    %v118 = vld [vmem:[%s1 + $0x1d8] sm:$0xff]
    %v119 = vld [vmem:[%s1 + $0x1e0] sm:$0xff]
    %v120 = vld [vmem:[%s1 + $0x1e8] sm:$0xff]
    %v121 = vld [vmem:[%s1 + $0x1f0] sm:$0xff]
    %v122 = vld [vmem:[%s1 + $0x1f8] sm:$0xff]
    %v123 = vld [vmem:[%s1 + $0x200] sm:$0xff]
    %v124 = vld [vmem:[%s1 + $0x208] sm:$0xff]
    %v125 = vld [vmem:[%s1 + $0x210] sm:$0xff]
    %v126 = vld [vmem:[%s1 + $0x218] sm:$0xff]
    %v127 = vld [vmem:[%s1 + $0x220] sm:$0xff]
    %v128 = vld [vmem:[%s1 + $0x228] sm:$0xff]
    %v129 = vld [vmem:[%s1 + $0x230] sm:$0xff]
    %v130 = vld [vmem:[%s1 + $0x238] sm:$0xff]
    %v131 = vld [vmem:[%s1 + $0x240] sm:$0xff]
    %v132 = vld [vmem:[%s1 + $0x248] sm:$0xff]
    %v133 = vld [vmem:[%s1 + $0x250] sm:$0xff]
    %v134 = vld [vmem:[%s1 + $0x258] sm:$0xff]
    %v135 = vld [vmem:[%s1 + $0x260] sm:$0xff]
    %v136 = vld [vmem:[%s1 + $0x268] sm:$0xff]
    %v137 = vld [vmem:[%s1 + $0x270] sm:$0xff]
    %v138 = vld [vmem:[%s1 + $0x278] sm:$0xff]
    %v139 = vld [vmem:[%s1 + $0x280] sm:$0xff]
    %v140 = vld [vmem:[%s1 + $0x288] sm:$0xff]
    %v141 = vld [vmem:[%s1 + $0x290] sm:$0xff]
    %v142 = vld [vmem:[%s1 + $0x298] sm:$0xff]
    %v143 = vld [vmem:[%s1 + $0x2a0] sm:$0xff]
    %v144 = vld [vmem:[%s1 + $0x2a8] sm:$0xff]
    %v145 = vld [vmem:[%s1 + $0x2b0] sm:$0xff]
    %v146 = vld [vmem:[%s1 + $0x2b8] sm:$0xff]
    %v147 = vld [vmem:[%s1 + $0x2c0] sm:$0xff]
    %v148 = vld [vmem:[%s1 + $0x2c8] sm:$0xff]
    %v149 = vld [vmem:[%s1 + $0x2d0] sm:$0xff]
    %v150 = vld [vmem:[%s1 + $0x2d8] sm:$0xff]
    %v151 = vld [vmem:[%s1 + $0x2e0] sm:$0xff]
    %v152 = vld [vmem:[%s1 + $0x2e8] sm:$0xff]
    %v153 = vld [vmem:[%s1 + $0x2f0] sm:$0xff]
    %v154 = vld [vmem:[%s1 + $0x2f8] sm:$0xff]
    %v155 = vld [vmem:[%s1 + $0x300] sm:$0xff]
    %v156 = vld [vmem:[%s1 + $0x308] sm:$0xff]
    %v157 = vld [vmem:[%s1 + $0x310] sm:$0xff]
    %v158 = vld [vmem:[%s1 + $0x318] sm:$0xff]
    %v159 = vld [vmem:[%s1 + $0x320] sm:$0xff]
    %v160 = vld [vmem:[%s1 + $0x328] sm:$0xff]
    %v161 = vld [vmem:[%s1 + $0x330] sm:$0xff]
    %v162 = vld [vmem:[%s1 + $0x338] sm:$0xff]
    %v163 = vld [vmem:[%s1 + $0x340] sm:$0xff]
    %v164 = vld [vmem:[%s1 + $0x348] sm:$0xff]
    %v165 = vld [vmem:[%s1 + $0x350] sm:$0xff]
    %v166 = vld [vmem:[%s1 + $0x358] sm:$0xff]
    %v167 = vld [vmem:[%s1 + $0x360] sm:$0xff]
    %v168 = vld [vmem:[%s1 + $0x368] sm:$0xff]
    %v169 = vld [vmem:[%s1 + $0x370] sm:$0xff]
    %v170 = vld [vmem:[%s1 + $0x378] sm:$0xff]
    %v171 = vld [vmem:[%s1 + $0x380] sm:$0xff]
    %v172 = vld [vmem:[%s1 + $0x388] sm:$0xff]
    %v173 = vld [vmem:[%s1 + $0x390] sm:$0xff]
    %v174 = vld [vmem:[%s1 + $0x398] sm:$0xff]
    %v175 = vld [vmem:[%s1 + $0x3a0] sm:$0xff]
    %v176 = vld [vmem:[%s1 + $0x3a8] sm:$0xff]
    %v177 = vld [vmem:[%s1 + $0x3b0] sm:$0xff]
    %v178 = vld [vmem:[%s1 + $0x3b8] sm:$0xff]
    %v179 = vld [vmem:[%s1 + $0x3c0] sm:$0xff]
    %v180 = vld [vmem:[%s1 + $0x3c8] sm:$0xff]
    %v181 = vld [vmem:[%s1 + $0x3d0] sm:$0xff]
    %v182 = vld [vmem:[%s1 + $0x3d8] sm:$0xff]
    %v183 = vld [vmem:[%s1 + $0x3e0] sm:$0xff]
    %v184 = vld [vmem:[%s1 + $0x3e8] sm:$0xff]
    %v185 = vld [vmem:[%s1 + $0x3f0] sm:$0xff]
    %v186 = vld [vmem:[%s1 + $0x3f8] sm:$0xff]
    %v187 = vld [vmem:[%s1 + $0x400] sm:$0xff]
    %v188 = vld [vmem:[%s1 + $0x408] sm:$0xff]
    %v189 = vld [vmem:[%s1 + $0x410] sm:$0xff]
    %v190 = vld [vmem:[%s1 + $0x418] sm:$0xff]
    %v191 = vld [vmem:[%s1 + $0x420] sm:$0xff]
    %v192 = vld [vmem:[%s1 + $0x428] sm:$0xff]
    %v193 = vld [vmem:[%s1 + $0x430] sm:$0xff]
    %v194 = vld [vmem:[%s1 + $0x438] sm:$0xff]
    %v195 = vld [vmem:[%s1 + $0x440] sm:$0xff]
    %v196 = vld [vmem:[%s1 + $0x448] sm:$0xff]
    %v197 = vld [vmem:[%s1 + $0x450] sm:$0xff]
    %v198 = vld [vmem:[%s1 + $0x458] sm:$0xff]
    %v199 = vld [vmem:[%s1 + $0x460] sm:$0xff]
    %v200 = vld [vmem:[%s1 + $0x468] sm:$0xff]
    %v201 = vld [vmem:[%s1 + $0x470] sm:$0xff]
    %v202 = vld [vmem:[%s1 + $0x478] sm:$0xff]
    %v203 = vld [vmem:[%s1 + $0x480] sm:$0xff]
    %v204 = vld [vmem:[%s1 + $0x488] sm:$0xff]
    %v205 = vld [vmem:[%s1 + $0x490] sm:$0xff]
    %v206 = vld [vmem:[%s1 + $0x498] sm:$0xff]
    %v207 = vld [vmem:[%s1 + $0x4a0] sm:$0xff]
    %v208 = vld [vmem:[%s1 + $0x4a8] sm:$0xff]
    %v209 = vld [vmem:[%s1 + $0x4b0] sm:$0xff]
    %v210 = vld [vmem:[%s1 + $0x4b8] sm:$0xff]
    %v211 = vld [vmem:[%s1 + $0x4c0] sm:$0xff]
    %v212 = vld [vmem:[%s1 + $0x4c8] sm:$0xff]
    %v213 = vld [vmem:[%s1 + $0x4d0] sm:$0xff]
    %v214 = vld [vmem:[%s1 + $0x4d8] sm:$0xff]
    %v215 = vld [vmem:[%s1 + $0x4e0] sm:$0xff]
    %v216 = vld [vmem:[%s1 + $0x4e8] sm:$0xff]
    %v217 = vld [vmem:[%s1 + $0x4f0] sm:$0xff]
    %v218 = vld [vmem:[%s1 + $0x4f8] sm:$0xff]
    %v219 = vld [vmem:[%s1 + $0x500] sm:$0xff]
    %v220 = vld [vmem:[%s1 + $0x508] sm:$0xff]
    %v221 = vld [vmem:[%s1 + $0x510] sm:$0xff]
    %v222 = vld [vmem:[%s1 + $0x518] sm:$0xff]
    %v223 = vld [vmem:[%s1 + $0x520] sm:$0xff]
    %v224 = vld [vmem:[%s1 + $0x528] sm:$0xff]
    %v225 = vld [vmem:[%s1 + $0x530] sm:$0xff]
    %v226 = vld [vmem:[%s1 + $0x538] sm:$0xff]
    %v227 = vld [vmem:[%s1 + $0x540] sm:$0xff]
    %v228 = vld [vmem:[%s1 + $0x548] sm:$0xff]
    %v229 = vld [vmem:[%s1 + $0x550] sm:$0xff]
    %v230 = vld [vmem:[%s1 + $0x558] sm:$0xff]
    %v231 = vld [vmem:[%s1 + $0x560] sm:$0xff]
    %v232 = vld [vmem:[%s1 + $0x568] sm:$0xff]
    %v233 = vld [vmem:[%s1 + $0x570] sm:$0xff]
    %v234 = vld [vmem:[%s1 + $0x578] sm:$0xff]
    %v235 = vld [vmem:[%s1 + $0x580] sm:$0xff]
    %v236 = vld [vmem:[%s1 + $0x588] sm:$0xff]
    %v237 = vld [vmem:[%s1 + $0x590] sm:$0xff]
    %v238 = vld [vmem:[%s1 + $0x598] sm:$0xff]
    %v239 = vld [vmem:[%s1 + $0x5a0] sm:$0xff]
    %v240 = vld [vmem:[%s1 + $0x5a8] sm:$0xff]
    %v241 = vld [vmem:[%s1 + $0x5b0] sm:$0xff]
    %v242 = vld [vmem:[%s1 + $0x5b8] sm:$0xff]
    %v243 = vld [vmem:[%s1 + $0x5c0] sm:$0xff]
    %v244 = vld [vmem:[%s1 + $0x5c8] sm:$0xff]
    %v245 = vld [vmem:[%s1 + $0x5d0] sm:$0xff]
    %v246 = vld [vmem:[%s1 + $0x5d8] sm:$0xff]
    %v247 = vld [vmem:[%s1 + $0x5e0] sm:$0xff]
    %v248 = vld [vmem:[%s1 + $0x5e8] sm:$0xff]
    %v249 = vld [vmem:[%s1 + $0x5f0] sm:$0xff]
    %v250 = vld [vmem:[%s1 + $0x5f8] sm:$0xff]
    %v251 = vld [vmem:[%s1 + $0x600] sm:$0xff]
    %v252 = vld [vmem:[%s1 + $0x608] sm:$0xff]
    %v253 = vld [vmem:[%s1 + $0x610] sm:$0xff]
    %v254 = vld [vmem:[%s1 + $0x618] sm:$0xff]
    %v255 = vld [vmem:[%s1 + $0x620] sm:$0xff]
    %v256 = vld [vmem:[%s1 + $0x628] sm:$0xff]
    %v257 = vld [vmem:[%s1 + $0x630] sm:$0xff]
    %v258 = vld [vmem:[%s1 + $0x638] sm:$0xff]
    %v259 = vld [vmem:[%s1 + $0x640] sm:$0xff]
    %v260 = vld [vmem:[%s1 + $0x648] sm:$0xff]
    %v261 = vld [vmem:[%s1 + $0x650] sm:$0xff]
    %v262 = vld [vmem:[%s1 + $0x658] sm:$0xff]
    %v263 = vld [vmem:[%s1 + $0x660] sm:$0xff]
    %v264 = vld [vmem:[%s1 + $0x668] sm:$0xff]
    %v265 = vld [vmem:[%s1 + $0x670] sm:$0xff]
    %v266 = vld [vmem:[%s1 + $0x678] sm:$0xff]
    %v267 = vld [vmem:[%s1 + $0x680] sm:$0xff]
    %v268 = vld [vmem:[%s1 + $0x688] sm:$0xff]
    %v269 = vld [vmem:[%s1 + $0x690] sm:$0xff]
    %v270 = vld [vmem:[%s1 + $0x698] sm:$0xff]
    %v271 = vld [vmem:[%s1 + $0x6a0] sm:$0xff]
    %v272 = vld [vmem:[%s1 + $0x6a8] sm:$0xff]
    %v273 = vld [vmem:[%s1 + $0x6b0] sm:$0xff]
    %v274 = vld [vmem:[%s1 + $0x6b8] sm:$0xff]
    %v275 = vld [vmem:[%s1 + $0x6c0] sm:$0xff]
    %v276 = vld [vmem:[%s1 + $0x6c8] sm:$0xff]
    %v277 = vld [vmem:[%s1 + $0x6d0] sm:$0xff]
    %v278 = vld [vmem:[%s1 + $0x6d8] sm:$0xff]
    %v279 = vld [vmem:[%s1 + $0x6e0] sm:$0xff]
    %v280 = vld [vmem:[%s1 + $0x6e8] sm:$0xff]
    %v281 = vld [vmem:[%s1 + $0x6f0] sm:$0xff]
    %v282 = vld [vmem:[%s1 + $0x6f8] sm:$0xff]
    %v283 = vld [vmem:[%s1 + $0x700] sm:$0xff]
    %v284 = vld [vmem:[%s1 + $0x708] sm:$0xff]
    %v285 = vld [vmem:[%s1 + $0x710] sm:$0xff]
    %v286 = vld [vmem:[%s1 + $0x718] sm:$0xff]
    %v287 = vld [vmem:[%s1 + $0x720] sm:$0xff]
    %v288 = vld [vmem:[%s1 + $0x728] sm:$0xff]
    %v289 = vld [vmem:[%s1 + $0x730] sm:$0xff]
    %v290 = vld [vmem:[%s1 + $0x738] sm:$0xff]
    %v291 = vld [vmem:[%s1 + $0x740] sm:$0xff]
    %v292 = vld [vmem:[%s1 + $0x748] sm:$0xff]
    %v293 = vld [vmem:[%s1 + $0x750] sm:$0xff]
    %v294 = vld [vmem:[%s1 + $0x758] sm:$0xff]
    %v295 = vld [vmem:[%s1 + $0x760] sm:$0xff]
    %v296 = vld [vmem:[%s1 + $0x768] sm:$0xff]
    %v297 = vld [vmem:[%s1 + $0x770] sm:$0xff]
    %v298 = vld [vmem:[%s1 + $0x778] sm:$0xff]
    %v299 = vld [vmem:[%s1 + $0x780] sm:$0xff]
    %v300 = vld [vmem:[%s1 + $0x788] sm:$0xff]
    %v301 = vld [vmem:[%s1 + $0x790] sm:$0xff]
    %v302 = vld [vmem:[%s1 + $0x798] sm:$0xff]
    %v303 = vld [vmem:[%s1 + $0x7a0] sm:$0xff]
    %v304 = vld [vmem:[%s1 + $0x7a8] sm:$0xff]
    %v305 = vld [vmem:[%s1 + $0x7b0] sm:$0xff]
    %v306 = vld [vmem:[%s1 + $0x7b8] sm:$0xff]
    %v307 = vld [vmem:[%s1 + $0x7c0] sm:$0xff]
    %v308 = vld [vmem:[%s1 + $0x7c8] sm:$0xff]
    %v309 = vld [vmem:[%s1 + $0x7d0] sm:$0xff]
    %v310 = vld [vmem:[%s1 + $0x7d8] sm:$0xff]
    %v311 = vld [vmem:[%s1 + $0x7e0] sm:$0xff]
    %v312 = vld [vmem:[%s1 + $0x7e8] sm:$0xff]
    %v313 = vld [vmem:[%s1 + $0x7f0] sm:$0xff]
    %v314 = vld [vmem:[%s1 + $0x7f8] sm:$0xff]
    %v315 = vld [vmem:[%s1 + $0x800] sm:$0xff]
    %v316 = vld [vmem:[%s1 + $0x808] sm:$0xff]
    %v317 = vld [vmem:[%s1 + $0x810] sm:$0xff]
    %v318 = vld [vmem:[%s1 + $0x818] sm:$0xff]
    %v319 = vld [vmem:[%s1 + $0x820] sm:$0xff]
    %v320 = vld [vmem:[%s1 + $0x828] sm:$0xff]
    %v321 = vld [vmem:[%s1 + $0x830] sm:$0xff]
    %v322 = vld [vmem:[%s1 + $0x838] sm:$0xff]
    %v323 = vld [vmem:[%s1 + $0x840] sm:$0xff]
    %v324 = vld [vmem:[%s1 + $0x848] sm:$0xff]
    %v325 = vld [vmem:[%s1 + $0x850] sm:$0xff]
    %v326 = vld [vmem:[%s1 + $0x858] sm:$0xff]
    %v327 = vld [vmem:[%s1 + $0x860] sm:$0xff]
    %v328 = vld [vmem:[%s1 + $0x868] sm:$0xff]
    %v329 = vld [vmem:[%s1 + $0x870] sm:$0xff]
    %v330 = vld [vmem:[%s1 + $0x878] sm:$0xff]
    %v331 = vld [vmem:[%s1 + $0x880] sm:$0xff]
    %v332 = vld [vmem:[%s1 + $0x888] sm:$0xff]
    %v333 = vld [vmem:[%s1 + $0x890] sm:$0xff]
    %v334 = vld [vmem:[%s1 + $0x898] sm:$0xff]
    %v335 = vld [vmem:[%s1 + $0x8a0] sm:$0xff]
    %v336 = vld [vmem:[%s1 + $0x8a8] sm:$0xff]
    %v337 = vld [vmem:[%s1 + $0x8b0] sm:$0xff]
    %v338 = vld [vmem:[%s1 + $0x8b8] sm:$0xff]
    %v339 = vld [vmem:[%s1 + $0x8c0] sm:$0xff]
    %v340 = vld [vmem:[%s1 + $0x8c8] sm:$0xff]
    %v341 = vld [vmem:[%s1 + $0x8d0] sm:$0xff]
    %v342 = vld [vmem:[%s1 + $0x8d8] sm:$0xff]
    %v343 = vld [vmem:[%s1 + $0x8e0] sm:$0xff]
    %v344 = vld [vmem:[%s1 + $0x8e8] sm:$0xff]
    %v345 = vld [vmem:[%s1 + $0x8f0] sm:$0xff]
    %v346 = vld [vmem:[%s1 + $0x8f8] sm:$0xff]
    %v347 = vld [vmem:[%s1 + $0x900] sm:$0xff]
    %v348 = vld [vmem:[%s1 + $0x908] sm:$0xff]
    %v349 = vld [vmem:[%s1 + $0x910] sm:$0xff]
    %v350 = vld [vmem:[%s1 + $0x918] sm:$0xff]
    %v351 = vld [vmem:[%s1 + $0x920] sm:$0xff]
    %v352 = vld [vmem:[%s1 + $0x928] sm:$0xff]
    %v353 = vld [vmem:[%s1 + $0x930] sm:$0xff]
    %v354 = vld [vmem:[%s1 + $0x938] sm:$0xff]
    %v355 = vld [vmem:[%s1 + $0x940] sm:$0xff]
    %v356 = vld [vmem:[%s1 + $0x948] sm:$0xff]
    %v357 = vld [vmem:[%s1 + $0x950] sm:$0xff]
    %v358 = vld [vmem:[%s1 + $0x958] sm:$0xff]
    %v359 = vld [vmem:[%s1 + $0x960] sm:$0xff]
    %v360 = vld [vmem:[%s1 + $0x968] sm:$0xff]
    %v361 = vld [vmem:[%s1 + $0x970] sm:$0xff]
    %v362 = vld [vmem:[%s1 + $0x978] sm:$0xff]
    %v363 = vld [vmem:[%s1 + $0x980] sm:$0xff]
    %v364 = vld [vmem:[%s1 + $0x988] sm:$0xff]
    %v365 = vld [vmem:[%s1 + $0x990] sm:$0xff]
    %v366 = vld [vmem:[%s1 + $0x998] sm:$0xff]
    %v367 = vld [vmem:[%s1 + $0x9a0] sm:$0xff]
    %v368 = vld [vmem:[%s1 + $0x9a8] sm:$0xff]
    %v369 = vld [vmem:[%s1 + $0x9b0] sm:$0xff]
    %v370 = vld [vmem:[%s1 + $0x9b8] sm:$0xff]
    %v371 = vld [vmem:[%s1 + $0x9c0] sm:$0xff]
    %v372 = vld [vmem:[%s1 + $0x9c8] sm:$0xff]
    %v373 = vld [vmem:[%s1 + $0x9d0] sm:$0xff]
    %v374 = vld [vmem:[%s1 + $0x9d8] sm:$0xff]
    %v375 = vld [vmem:[%s1 + $0x9e0] sm:$0xff]
    %v376 = vld [vmem:[%s1 + $0x9e8] sm:$0xff]
    %v377 = vld [vmem:[%s1 + $0x9f0] sm:$0xff]
    %v378 = vld [vmem:[%s1 + $0x9f8] sm:$0xff]
    %v379 = vld [vmem:[%s1 + $0xa00] sm:$0xff]
    %v380 = vld [vmem:[%s1 + $0xa08] sm:$0xff]
    %v381 = vld [vmem:[%s1 + $0xa10] sm:$0xff]
    %v382 = vld [vmem:[%s1 + $0xa18] sm:$0xff]
    %v383 = vld [vmem:[%s1 + $0xa20] sm:$0xff]
    %v384 = vld [vmem:[%s1 + $0xa28] sm:$0xff]
    %v385 = vld [vmem:[%s1 + $0xa30] sm:$0xff]
    %v386 = vld [vmem:[%s1 + $0xa38] sm:$0xff]
    %v387 = vld [vmem:[%s1 + $0xa40] sm:$0xff]
    %v388 = vld [vmem:[%s1 + $0xa48] sm:$0xff]
    %v389 = vld [vmem:[%s1 + $0xa50] sm:$0xff]
    %v390 = vld [vmem:[%s1 + $0xa58] sm:$0xff]
    %v391 = vld [vmem:[%s1 + $0xa60] sm:$0xff]
    %v392 = vld [vmem:[%s1 + $0xa68] sm:$0xff]
    %v393 = vld [vmem:[%s1 + $0xa70] sm:$0xff]
    %v394 = vld [vmem:[%s1 + $0xa78] sm:$0xff]
    %v395 = vld [vmem:[%s1 + $0xa80] sm:$0xff]
    %v396 = vld [vmem:[%s1 + $0xa88] sm:$0xff]
    %v397 = vld [vmem:[%s1 + $0xa90] sm:$0xff]
    %v398 = vld [vmem:[%s1 + $0xa98] sm:$0xff]
    %v399 = vld [vmem:[%s1 + $0xaa0] sm:$0xff]
    %v400 = vld [vmem:[%s1 + $0xaa8] sm:$0xff]
    %v401 = vld [vmem:[%s1 + $0xab0] sm:$0xff]
    %v402 = vld [vmem:[%s1 + $0xab8] sm:$0xff]
    %v403 = vld [vmem:[%s1 + $0xac0] sm:$0xff]
    %v404 = vld [vmem:[%s1 + $0xac8] sm:$0xff]
    %v405 = vld [vmem:[%s1 + $0xad0] sm:$0xff]
    %v406 = vld [vmem:[%s1 + $0xad8] sm:$0xff]
    %v407 = vld [vmem:[%s1 + $0xae0] sm:$0xff]
    %v408 = vld [vmem:[%s1 + $0xae8] sm:$0xff]
    %v409 = vld [vmem:[%s1 + $0xaf0] sm:$0xff]
    %v410 = vld [vmem:[%s1 + $0xaf8] sm:$0xff]
    %v411 = vld [vmem:[%s1 + $0xb00] sm:$0xff]
    %v412 = vld [vmem:[%s1 + $0xb08] sm:$0xff]
    %v413 = vld [vmem:[%s1 + $0xb10] sm:$0xff]
    %v414 = vld [vmem:[%s1 + $0xb18] sm:$0xff]
    %v415 = vld [vmem:[%s1 + $0xb20] sm:$0xff]
    %v416 = vld [vmem:[%s1 + $0xb28] sm:$0xff]
    %v417 = vld [vmem:[%s1 + $0xb30] sm:$0xff]
    %v418 = vld [vmem:[%s1 + $0xb38] sm:$0xff]
    %v419 = vld [vmem:[%s1 + $0xb40] sm:$0xff]
    %v420 = vld [vmem:[%s1 + $0xb48] sm:$0xff]
    %v421 = vld [vmem:[%s1 + $0xb50] sm:$0xff]
    %v422 = vld [vmem:[%s1 + $0xb58] sm:$0xff]
    %v423 = vld [vmem:[%s1 + $0xb60] sm:$0xff]
    %v424 = vld [vmem:[%s1 + $0xb68] sm:$0xff]
    %v425 = vld [vmem:[%s1 + $0xb70] sm:$0xff]
    %v426 = vld [vmem:[%s1 + $0xb78] sm:$0xff]
    %v427 = vld [vmem:[%s1 + $0xb80] sm:$0xff]
    %v428 = vld [vmem:[%s1 + $0xb88] sm:$0xff]
    %v429 = vld [vmem:[%s1 + $0xb90] sm:$0xff]
    %v430 = vld [vmem:[%s1 + $0xb98] sm:$0xff]
    %v431 = vld [vmem:[%s1 + $0xba0] sm:$0xff]
    %v432 = vld [vmem:[%s1 + $0xba8] sm:$0xff]
    %v433 = vld [vmem:[%s1 + $0xbb0] sm:$0xff]
    %v434 = vld [vmem:[%s1 + $0xbb8] sm:$0xff]
    %v435 = vld [vmem:[%s1 + $0xbc0] sm:$0xff]
    %v436 = vld [vmem:[%s1 + $0xbc8] sm:$0xff]
    %v437 = vld [vmem:[%s1 + $0xbd0] sm:$0xff]
    %v438 = vld [vmem:[%s1 + $0xbd8] sm:$0xff]
    %v439 = vld [vmem:[%s1 + $0xbe0] sm:$0xff]
    %v440 = vld [vmem:[%s1 + $0xbe8] sm:$0xff]
    %v441 = vld [vmem:[%s1 + $0xbf0] sm:$0xff]
    %v442 = vld [vmem:[%s1 + $0xbf8] sm:$0xff]
    %v443 = vld [vmem:[%s1 + $0xc00] sm:$0xff]
    %v444 = vld [vmem:[%s1 + $0xc08] sm:$0xff]
    %v445 = vld [vmem:[%s1 + $0xc10] sm:$0xff]
    %v446 = vld [vmem:[%s1 + $0xc18] sm:$0xff]
    %v447 = vld [vmem:[%s1 + $0xc20] sm:$0xff]
    %v448 = vld [vmem:[%s1 + $0xc28] sm:$0xff]
    %v449 = vld [vmem:[%s1 + $0xc30] sm:$0xff]
    %v450 = vld [vmem:[%s1 + $0xc38] sm:$0xff]
    %v451 = vld [vmem:[%s1 + $0xc40] sm:$0xff]
    %v452 = vld [vmem:[%s1 + $0xc48] sm:$0xff]
    %v453 = vld [vmem:[%s1 + $0xc50] sm:$0xff]
    %v454 = vld [vmem:[%s1 + $0xc58] sm:$0xff]
    %v455 = vld [vmem:[%s1 + $0xc60] sm:$0xff]
    %v456 = vld [vmem:[%s1 + $0xc68] sm:$0xff]
    %v457 = vld [vmem:[%s1 + $0xc70] sm:$0xff]
    %v458 = vld [vmem:[%s1 + $0xc78] sm:$0xff]
    %v459 = vld [vmem:[%s1 + $0xc80] sm:$0xff]
    %v460 = vld [vmem:[%s1 + $0xc88] sm:$0xff]
    %v461 = vld [vmem:[%s1 + $0xc90] sm:$0xff]
    %v462 = vld [vmem:[%s1 + $0xc98] sm:$0xff]
    %v463 = vld [vmem:[%s1 + $0xca0] sm:$0xff]
    %v464 = vld [vmem:[%s1 + $0xca8] sm:$0xff]
    %v465 = vld [vmem:[%s1 + $0xcb0] sm:$0xff]
    %v466 = vld [vmem:[%s1 + $0xcb8] sm:$0xff]
    %v467 = vld [vmem:[%s1 + $0xcc0] sm:$0xff]
    %v468 = vld [vmem:[%s1 + $0xcc8] sm:$0xff]
    %v469 = vld [vmem:[%s1 + $0xcd0] sm:$0xff]
    %v470 = vld [vmem:[%s1 + $0xcd8] sm:$0xff]
    %v471 = vld [vmem:[%s1 + $0xce0] sm:$0xff]
    %v472 = vld [vmem:[%s1 + $0xce8] sm:$0xff]
    %v473 = vld [vmem:[%s1 + $0xcf0] sm:$0xff]
    %v474 = vld [vmem:[%s1 + $0xcf8] sm:$0xff]
    %v475 = vld [vmem:[%s1 + $0xd00] sm:$0xff]
    %v476 = vld [vmem:[%s1 + $0xd08] sm:$0xff]
    %v477 = vld [vmem:[%s1 + $0xd10] sm:$0xff]
    %v478 = vld [vmem:[%s1 + $0xd18] sm:$0xff]
    %v479 = vld [vmem:[%s1 + $0xd20] sm:$0xff]
    %v480 = vld [vmem:[%s1 + $0xd28] sm:$0xff]
    %v481 = vld [vmem:[%s1 + $0xd30] sm:$0xff]
    %v482 = vld [vmem:[%s1 + $0xd38] sm:$0xff]
    %v483 = vld [vmem:[%s1 + $0xd40] sm:$0xff]
    %v484 = vld [vmem:[%s1 + $0xd48] sm:$0xff]
    %v485 = vld [vmem:[%s1 + $0xd50] sm:$0xff]
    %v486 = vld [vmem:[%s1 + $0xd58] sm:$0xff]
    %v487 = vld [vmem:[%s1 + $0xd60] sm:$0xff]
    %v488 = vld [vmem:[%s1 + $0xd68] sm:$0xff]
    %v489 = vld [vmem:[%s1 + $0xd70] sm:$0xff]
    %v490 = vld [vmem:[%s1 + $0xd78] sm:$0xff]
    %v491 = vld [vmem:[%s1 + $0xd80] sm:$0xff]
    %v492 = vld [vmem:[%s1 + $0xd88] sm:$0xff]
    %v493 = vld [vmem:[%s1 + $0xd90] sm:$0xff]
    %v494 = vld [vmem:[%s1 + $0xd98] sm:$0xff]
    %v495 = vld [vmem:[%s1 + $0xda0] sm:$0xff]
    %v496 = vld [vmem:[%s1 + $0xda8] sm:$0xff]
    %v497 = vld [vmem:[%s1 + $0xdb0] sm:$0xff]
    %v498 = vld [vmem:[%s1 + $0xdb8] sm:$0xff]
    %v499 = vld [vmem:[%s1 + $0xdc0] sm:$0xff]
    %v500 = vld [vmem:[%s1 + $0xdc8] sm:$0xff]
    %v501 = vld [vmem:[%s1 + $0xdd0] sm:$0xff]
    %v502 = vld [vmem:[%s1 + $0xdd8] sm:$0xff]
    %v503 = vld [vmem:[%s1 + $0xde0] sm:$0xff]
    %v504 = vld [vmem:[%s1 + $0xde8] sm:$0xff]
    %v505 = vld [vmem:[%s1 + $0xdf0] sm:$0xff]
    %v506 = vld [vmem:[%s1 + $0xdf8] sm:$0xff]
    %v507 = vld [vmem:[%s1 + $0xe00] sm:$0xff]
    %v508 = vld [vmem:[%s1 + $0xe08] sm:$0xff]
    %v509 = vld [vmem:[%s1 + $0xe10] sm:$0xff]
    %v510 = vld [vmem:[%s1 + $0xe18] sm:$0xff]
    %v511 = vld [vmem:[%s1 + $0xe20] sm:$0xff]
    %v512 = vld [vmem:[%s1 + $0xe28] sm:$0xff]
    %v513 = vld [vmem:[%s1 + $0xe30] sm:$0xff]
    %v514 = vld [vmem:[%s1 + $0xe38] sm:$0xff]
    %v515 = vld [vmem:[%s1 + $0xe40] sm:$0xff]
    %v516 = vld [vmem:[%s1 + $0xe48] sm:$0xff]
    %v517 = vld [vmem:[%s1 + $0xe50] sm:$0xff]
    %v518 = vld [vmem:[%s1 + $0xe58] sm:$0xff]
    %v519 = vld [vmem:[%s1 + $0xe60] sm:$0xff]
    %v520 = vld [vmem:[%s1 + $0xe68] sm:$0xff]
    %v521 = vld [vmem:[%s1 + $0xe70] sm:$0xff]
    %v522 = vld [vmem:[%s1 + $0xe78] sm:$0xff]
    %v523 = vld [vmem:[%s1 + $0xe80] sm:$0xff]
    %v524 = vld [vmem:[%s1 + $0xe88] sm:$0xff]
    %v525 = vld [vmem:[%s1 + $0xe90] sm:$0xff]
    %v526 = vld [vmem:[%s1 + $0xe98] sm:$0xff]
    %v527 = vld [vmem:[%s1 + $0xea0] sm:$0xff]
    %v528 = vld [vmem:[%s1 + $0xea8] sm:$0xff]
    %v529 = vld [vmem:[%s1 + $0xeb0] sm:$0xff]
    %v530 = vld [vmem:[%s1 + $0xeb8] sm:$0xff]
    %v531 = vld [vmem:[%s1 + $0xec0] sm:$0xff]
    %v532 = vld [vmem:[%s1 + $0xec8] sm:$0xff]
    %v533 = vld [vmem:[%s1 + $0xed0] sm:$0xff]
    %v534 = vld [vmem:[%s1 + $0xed8] sm:$0xff]
    %v535 = vld [vmem:[%s1 + $0xee0] sm:$0xff]
    %v536 = vld [vmem:[%s1 + $0xee8] sm:$0xff]
    %v537 = vld [vmem:[%s1 + $0xef0] sm:$0xff]
    %v538 = vld [vmem:[%s1 + $0xef8] sm:$0xff]
    %v539 = vld [vmem:[%s1 + $0xf00] sm:$0xff]
    %v540 = vld [vmem:[%s1 + $0xf08] sm:$0xff]
    %v541 = vld [vmem:[%s1 + $0xf10] sm:$0xff]
    %v542 = vld [vmem:[%s1 + $0xf18] sm:$0xff]
    %v543 = vld [vmem:[%s1 + $0xf20] sm:$0xff]
    %v544 = vld [vmem:[%s1 + $0xf28] sm:$0xff]
    %v545 = vld [vmem:[%s1 + $0xf30] sm:$0xff]
    %v546 = vld [vmem:[%s1 + $0xf38] sm:$0xff]
    %v547 = vld [vmem:[%s1 + $0xf40] sm:$0xff]
    %v548 = vld [vmem:[%s1 + $0xf48] sm:$0xff]
    %v549 = vld [vmem:[%s1 + $0xf50] sm:$0xff]
    %v550 = vld [vmem:[%s1 + $0xf58] sm:$0xff]
    %v551 = vld [vmem:[%s1 + $0xf60] sm:$0xff]
    %v552 = vld [vmem:[%s1 + $0xf68] sm:$0xff]
    %v553 = vld [vmem:[%s1 + $0xf70] sm:$0xff]
    %v554 = vld [vmem:[%s1 + $0xf78] sm:$0xff]
    %v555 = vld [vmem:[%s1 + $0xf80] sm:$0xff]
    %v556 = vld [vmem:[%s1 + $0xf88] sm:$0xff]
    %v557 = vld [vmem:[%s1 + $0xf90] sm:$0xff]
    %v558 = vld [vmem:[%s1 + $0xf98] sm:$0xff]
    %v559 = vld [vmem:[%s1 + $0xfa0] sm:$0xff]
    %v560 = vld [vmem:[%s1 + $0xfa8] sm:$0xff]
    %v561 = vld [vmem:[%s1 + $0xfb0] sm:$0xff]
    %v562 = vld [vmem:[%s1 + $0xfb8] sm:$0xff]
    %v563 = vld [vmem:[%s1 + $0xfc0] sm:$0xff]
    %v564 = vld [vmem:[%s1 + $0xfc8] sm:$0xff]
    %v565 = vld [vmem:[%s1 + $0xfd0] sm:$0xff]
    %v566 = vld [vmem:[%s1 + $0xfd8] sm:$0xff]
    %v567 = vld [vmem:[%s1 + $0xfe0] sm:$0xff]
    %v568 = vld [vmem:[%s1 + $0xfe8] sm:$0xff]
    %v569 = vld [vmem:[%s1 + $0xff0] sm:$0xff]
    %v570 = vld [vmem:[%s1 + $0xff8] sm:$0xff]
    %v571 = vld [vmem:[%s2] sm:$0x1]
    %v573 = vlaneseq
    %v574 = vshrl.u32 %v573, 7
    %v575 = vsub.s32 0, %v574
    %v576 = vrot.slane %v571, %v575
    %578 = vmatprep.subr.mxu0 0.0
    %579 = vmatpush1.msra.mxu0 %v74
    %580 = vmatprep.subr.mxu0 0.0
    %581 = vmatpush1.msra.mxu0 %v73
    %582 = vmatprep.subr.mxu0 0.0
    %583 = vmatpush1.msra.mxu0 %v72
    %584 = vmatprep.subr.mxu0 0.0
    %585 = vmatpush1.msra.mxu0 %v71
    %586 = vmatprep.subr.mxu0 0.0
    %587 = vmatpush1.msra.mxu0 %v70
    %588 = vmatprep.subr.mxu0 0.0
    %589 = vmatpush1.msra.mxu0 %v69
    %590 = vmatprep.subr.mxu0 0.0
    %591 = vmatpush1.msra.mxu0 %v68
    %592 = vmatprep.subr.mxu0 0.0
    %593 = vmatpush1.msra.mxu0 %v67
    %594 = vmatprep.subr.mxu0 0.0
    %595 = vmatpush1.msra.mxu0 %v66
    %596 = vmatprep.subr.mxu0 0.0
    %597 = vmatpush1.msra.mxu0 %v65
    %598 = vmatprep.subr.mxu0 0.0
    %599 = vmatpush1.msra.mxu0 %v64
    %600 = vmatprep.subr.mxu0 0.0
    %601 = vmatpush1.msra.mxu0 %v63
    %602 = vmatprep.subr.mxu0 0.0
    %603 = vmatpush1.msra.mxu0 %v62
    %604 = vmatprep.subr.mxu0 0.0
    %605 = vmatpush1.msra.mxu0 %v61
    %606 = vmatprep.subr.mxu0 0.0
    %607 = vmatpush1.msra.mxu0 %v60
    %608 = vmatprep.subr.mxu0 0.0
    %609 = vmatpush1.msra.mxu0 %v59
    %610 = vmatprep.subr.mxu0 0.0
    %611 = vmatpush2.msra.mxu0 %v90
    %612 = vmatprep.subr.mxu0 0.0
    %613 = vmatpush2.msra.mxu0 %v89
    %614 = vmatprep.subr.mxu0 0.0
    %615 = vmatpush2.msra.mxu0 %v88
    %616 = vmatprep.subr.mxu0 0.0
    %617 = vmatpush2.msra.mxu0 %v87
    %618 = vmatprep.subr.mxu0 0.0
    %619 = vmatpush2.msra.mxu0 %v86
    %620 = vmatprep.subr.mxu0 0.0
    %621 = vmatpush2.msra.mxu0 %v85
    %622 = vmatprep.subr.mxu0 0.0
    %623 = vmatpush2.msra.mxu0 %v84
    %624 = vmatprep.subr.mxu0 0.0
    %625 = vmatpush2.msra.mxu0 %v83
    %626 = vmatprep.subr.mxu0 0.0
    %627 = vmatpush2.msra.mxu0 %v82
    %628 = vmatprep.subr.mxu0 0.0
    %629 = vmatpush2.msra.mxu0 %v81
    %630 = vmatprep.subr.mxu0 0.0
    %631 = vmatpush2.msra.mxu0 %v80
    %632 = vmatprep.subr.mxu0 0.0
    %633 = vmatpush2.msra.mxu0 %v79
    %634 = vmatprep.subr.mxu0 0.0
    %635 = vmatpush2.msra.mxu0 %v78
    %636 = vmatprep.subr.mxu0 0.0
    %637 = vmatpush2.msra.mxu0 %v77
    %638 = vmatprep.subr.mxu0 0.0
    %639 = vmatpush2.msra.mxu0 %v76
    %640 = vmatprep.subr.mxu0 0.0
    %641 = vmatpush2.msra.mxu0 %v75
    %642 = vmatprep.mubr.f32.mxu0 %v28
    %643 = vmatmul.mubr.f32.gmra.mxu0 %v27
    %v644 = vpop.f32.mrf.mxu0
    %v645 = vadd.f32 %v576, %v644
    %v646 = vpop.f32.mrf.mxu0
    %647 = vdwg.mxu0
    %648 = vmatprep.subr.mxu0 0.0
    %649 = vmatpush1.msra.mxu0 %v106
    %650 = vmatprep.subr.mxu0 0.0
    %651 = vmatpush1.msra.mxu0 %v105
    %652 = vmatprep.subr.mxu0 0.0
    %653 = vmatpush1.msra.mxu0 %v104
    %654 = vmatprep.subr.mxu0 0.0
    %655 = vmatpush1.msra.mxu0 %v103
    %656 = vmatprep.subr.mxu0 0.0
    %657 = vmatpush1.msra.mxu0 %v102
    %658 = vmatprep.subr.mxu0 0.0
    %659 = vmatpush1.msra.mxu0 %v101
    %660 = vmatprep.subr.mxu0 0.0
    %661 = vmatpush1.msra.mxu0 %v100
    %662 = vmatprep.subr.mxu0 0.0
    %663 = vmatpush1.msra.mxu0 %v99
    %664 = vmatprep.subr.mxu0 0.0
    %665 = vmatpush1.msra.mxu0 %v98
    %666 = vmatprep.subr.mxu0 0.0
    %667 = vmatpush1.msra.mxu0 %v97
    %668 = vmatprep.subr.mxu0 0.0
    %669 = vmatpush1.msra.mxu0 %v96
    %670 = vmatprep.subr.mxu0 0.0
    %671 = vmatpush1.msra.mxu0 %v95
    %672 = vmatprep.subr.mxu0 0.0
    %673 = vmatpush1.msra.mxu0 %v94
    %674 = vmatprep.subr.mxu0 0.0
    %675 = vmatpush1.msra.mxu0 %v93
    %676 = vmatprep.subr.mxu0 0.0
    %677 = vmatpush1.msra.mxu0 %v92
    %678 = vmatprep.subr.mxu0 0.0
    %679 = vmatpush1.msra.mxu0 %v91
    %680 = vmatprep.subr.mxu0 0.0
    %681 = vmatpush2.msra.mxu0 %v122
    %682 = vmatprep.subr.mxu0 0.0
    %683 = vmatpush2.msra.mxu0 %v121
    %684 = vmatprep.subr.mxu0 0.0
    %685 = vmatpush2.msra.mxu0 %v120
    %686 = vmatprep.subr.mxu0 0.0
    %687 = vmatpush2.msra.mxu0 %v119
    %688 = vmatprep.subr.mxu0 0.0
    %689 = vmatpush2.msra.mxu0 %v118
    %690 = vmatprep.subr.mxu0 0.0
    %691 = vmatpush2.msra.mxu0 %v117
    %692 = vmatprep.subr.mxu0 0.0
    %693 = vmatpush2.msra.mxu0 %v116
    %694 = vmatprep.subr.mxu0 0.0
    %695 = vmatpush2.msra.mxu0 %v115
    %696 = vmatprep.subr.mxu0 0.0
    %697 = vmatpush2.msra.mxu0 %v114
    %698 = vmatprep.subr.mxu0 0.0
    %699 = vmatpush2.msra.mxu0 %v113
    %700 = vmatprep.subr.mxu0 0.0
    %701 = vmatpush2.msra.mxu0 %v112
    %702 = vmatprep.subr.mxu0 0.0
    %703 = vmatpush2.msra.mxu0 %v111
    %704 = vmatprep.subr.mxu0 0.0
    %705 = vmatpush2.msra.mxu0 %v110
    %706 = vmatprep.subr.mxu0 0.0
    %707 = vmatpush2.msra.mxu0 %v109
    %708 = vmatprep.subr.mxu0 0.0
    %709 = vmatpush2.msra.mxu0 %v108
    %710 = vmatprep.subr.mxu0 0.0
    %711 = vmatpush2.msra.mxu0 %v107
    %712 = vmatprep.mubr.f32.mxu0 %v30
    %713 = vmatmul.mubr.f32.gmra.mxu0 %v29
    %v714 = vpop.f32.mrf.mxu0
    %v715 = vadd.f32 %v645, %v714
    %v716 = vpop.f32.mrf.mxu0
    %717 = vdwg.mxu0
    %718 = vmatprep.subr.mxu0 0.0
    %719 = vmatpush1.msra.mxu0 %v138
    %720 = vmatprep.subr.mxu0 0.0
    %721 = vmatpush1.msra.mxu0 %v137
    %722 = vmatprep.subr.mxu0 0.0
    %723 = vmatpush1.msra.mxu0 %v136
    %724 = vmatprep.subr.mxu0 0.0
    %725 = vmatpush1.msra.mxu0 %v135
    %726 = vmatprep.subr.mxu0 0.0
    %727 = vmatpush1.msra.mxu0 %v134
    %728 = vmatprep.subr.mxu0 0.0
    %729 = vmatpush1.msra.mxu0 %v133
    %730 = vmatprep.subr.mxu0 0.0
    %731 = vmatpush1.msra.mxu0 %v132
    %732 = vmatprep.subr.mxu0 0.0
    %733 = vmatpush1.msra.mxu0 %v131
    %734 = vmatprep.subr.mxu0 0.0
    %735 = vmatpush1.msra.mxu0 %v130
    %736 = vmatprep.subr.mxu0 0.0
    %737 = vmatpush1.msra.mxu0 %v129
    %738 = vmatprep.subr.mxu0 0.0
    %739 = vmatpush1.msra.mxu0 %v128
    %740 = vmatprep.subr.mxu0 0.0
    %741 = vmatpush1.msra.mxu0 %v127
    %742 = vmatprep.subr.mxu0 0.0
    %743 = vmatpush1.msra.mxu0 %v126
    %744 = vmatprep.subr.mxu0 0.0
    %745 = vmatpush1.msra.mxu0 %v125
    %746 = vmatprep.subr.mxu0 0.0
    %747 = vmatpush1.msra.mxu0 %v124
    %748 = vmatprep.subr.mxu0 0.0
    %749 = vmatpush1.msra.mxu0 %v123
    %750 = vmatprep.subr.mxu0 0.0
    %751 = vmatpush2.msra.mxu0 %v154
    %752 = vmatprep.subr.mxu0 0.0
    %753 = vmatpush2.msra.mxu0 %v153
    %754 = vmatprep.subr.mxu0 0.0
    %755 = vmatpush2.msra.mxu0 %v152
    %756 = vmatprep.subr.mxu0 0.0
    %757 = vmatpush2.msra.mxu0 %v151
    %758 = vmatprep.subr.mxu0 0.0
    %759 = vmatpush2.msra.mxu0 %v150
    %760 = vmatprep.subr.mxu0 0.0
    %761 = vmatpush2.msra.mxu0 %v149
    %762 = vmatprep.subr.mxu0 0.0
    %763 = vmatpush2.msra.mxu0 %v148
    %764 = vmatprep.subr.mxu0 0.0
    %765 = vmatpush2.msra.mxu0 %v147
    %766 = vmatprep.subr.mxu0 0.0
    %767 = vmatpush2.msra.mxu0 %v146
    %768 = vmatprep.subr.mxu0 0.0
    %769 = vmatpush2.msra.mxu0 %v145
    %770 = vmatprep.subr.mxu0 0.0
    %771 = vmatpush2.msra.mxu0 %v144
    %772 = vmatprep.subr.mxu0 0.0
    %773 = vmatpush2.msra.mxu0 %v143
    %774 = vmatprep.subr.mxu0 0.0
    %775 = vmatpush2.msra.mxu0 %v142
    %776 = vmatprep.subr.mxu0 0.0
    %777 = vmatpush2.msra.mxu0 %v141
    %778 = vmatprep.subr.mxu0 0.0
    %779 = vmatpush2.msra.mxu0 %v140
    %780 = vmatprep.subr.mxu0 0.0
    %781 = vmatpush2.msra.mxu0 %v139
    %782 = vmatprep.mubr.f32.mxu0 %v32
    %783 = vmatmul.mubr.f32.gmra.mxu0 %v31
    %v784 = vpop.f32.mrf.mxu0
    %v785 = vadd.f32 %v715, %v784
    %v786 = vpop.f32.mrf.mxu0
    %787 = vdwg.mxu0
    %788 = vmatprep.subr.mxu0 0.0
    %789 = vmatpush1.msra.mxu0 %v170
    %790 = vmatprep.subr.mxu0 0.0
    %791 = vmatpush1.msra.mxu0 %v169
    %792 = vmatprep.subr.mxu0 0.0
    %793 = vmatpush1.msra.mxu0 %v168
    %794 = vmatprep.subr.mxu0 0.0
    %795 = vmatpush1.msra.mxu0 %v167
    %796 = vmatprep.subr.mxu0 0.0
    %797 = vmatpush1.msra.mxu0 %v166
    %798 = vmatprep.subr.mxu0 0.0
    %799 = vmatpush1.msra.mxu0 %v165
    %800 = vmatprep.subr.mxu0 0.0
    %801 = vmatpush1.msra.mxu0 %v164
    %802 = vmatprep.subr.mxu0 0.0
    %803 = vmatpush1.msra.mxu0 %v163
    %804 = vmatprep.subr.mxu0 0.0
    %805 = vmatpush1.msra.mxu0 %v162
    %806 = vmatprep.subr.mxu0 0.0
    %807 = vmatpush1.msra.mxu0 %v161
    %808 = vmatprep.subr.mxu0 0.0
    %809 = vmatpush1.msra.mxu0 %v160
    %810 = vmatprep.subr.mxu0 0.0
    %811 = vmatpush1.msra.mxu0 %v159
    %812 = vmatprep.subr.mxu0 0.0
    %813 = vmatpush1.msra.mxu0 %v158
    %814 = vmatprep.subr.mxu0 0.0
    %815 = vmatpush1.msra.mxu0 %v157
    %816 = vmatprep.subr.mxu0 0.0
    %817 = vmatpush1.msra.mxu0 %v156
    %818 = vmatprep.subr.mxu0 0.0
    %819 = vmatpush1.msra.mxu0 %v155
    %820 = vmatprep.subr.mxu0 0.0
    %821 = vmatpush2.msra.mxu0 %v186
    %822 = vmatprep.subr.mxu0 0.0
    %823 = vmatpush2.msra.mxu0 %v185
    %824 = vmatprep.subr.mxu0 0.0
    %825 = vmatpush2.msra.mxu0 %v184
    %826 = vmatprep.subr.mxu0 0.0
    %827 = vmatpush2.msra.mxu0 %v183
    %828 = vmatprep.subr.mxu0 0.0
    %829 = vmatpush2.msra.mxu0 %v182
    %830 = vmatprep.subr.mxu0 0.0
    %831 = vmatpush2.msra.mxu0 %v181
    %832 = vmatprep.subr.mxu0 0.0
    %833 = vmatpush2.msra.mxu0 %v180
    %834 = vmatprep.subr.mxu0 0.0
    %835 = vmatpush2.msra.mxu0 %v179
    %836 = vmatprep.subr.mxu0 0.0
    %837 = vmatpush2.msra.mxu0 %v178
    %838 = vmatprep.subr.mxu0 0.0
    %839 = vmatpush2.msra.mxu0 %v177
    %840 = vmatprep.subr.mxu0 0.0
    %841 = vmatpush2.msra.mxu0 %v176
    %842 = vmatprep.subr.mxu0 0.0
    %843 = vmatpush2.msra.mxu0 %v175
    %844 = vmatprep.subr.mxu0 0.0
    %845 = vmatpush2.msra.mxu0 %v174
    %846 = vmatprep.subr.mxu0 0.0
    %847 = vmatpush2.msra.mxu0 %v173
    %848 = vmatprep.subr.mxu0 0.0
    %849 = vmatpush2.msra.mxu0 %v172
    %850 = vmatprep.subr.mxu0 0.0
    %851 = vmatpush2.msra.mxu0 %v171
    %852 = vmatprep.mubr.f32.mxu0 %v34
    %853 = vmatmul.mubr.f32.gmra.mxu0 %v33
    %v854 = vpop.f32.mrf.mxu0
    %v855 = vadd.f32 %v785, %v854
    %v856 = vpop.f32.mrf.mxu0
    %857 = vdwg.mxu0
    %858 = vmatprep.subr.mxu0 0.0
    %859 = vmatpush1.msra.mxu0 %v202
    %860 = vmatprep.subr.mxu0 0.0
    %861 = vmatpush1.msra.mxu0 %v201
    %862 = vmatprep.subr.mxu0 0.0
    %863 = vmatpush1.msra.mxu0 %v200
    %864 = vmatprep.subr.mxu0 0.0
    %865 = vmatpush1.msra.mxu0 %v199
    %866 = vmatprep.subr.mxu0 0.0
    %867 = vmatpush1.msra.mxu0 %v198
    %868 = vmatprep.subr.mxu0 0.0
    %869 = vmatpush1.msra.mxu0 %v197
    %870 = vmatprep.subr.mxu0 0.0
    %871 = vmatpush1.msra.mxu0 %v196
    %872 = vmatprep.subr.mxu0 0.0
    %873 = vmatpush1.msra.mxu0 %v195
    %874 = vmatprep.subr.mxu0 0.0
    %875 = vmatpush1.msra.mxu0 %v194
    %876 = vmatprep.subr.mxu0 0.0
    %877 = vmatpush1.msra.mxu0 %v193
    %878 = vmatprep.subr.mxu0 0.0
    %879 = vmatpush1.msra.mxu0 %v192
    %880 = vmatprep.subr.mxu0 0.0
    %881 = vmatpush1.msra.mxu0 %v191
    %882 = vmatprep.subr.mxu0 0.0
    %883 = vmatpush1.msra.mxu0 %v190
    %884 = vmatprep.subr.mxu0 0.0
    %885 = vmatpush1.msra.mxu0 %v189
    %886 = vmatprep.subr.mxu0 0.0
    %887 = vmatpush1.msra.mxu0 %v188
    %888 = vmatprep.subr.mxu0 0.0
    %889 = vmatpush1.msra.mxu0 %v187
    %890 = vmatprep.subr.mxu0 0.0
    %891 = vmatpush2.msra.mxu0 %v218
    %892 = vmatprep.subr.mxu0 0.0
    %893 = vmatpush2.msra.mxu0 %v217
    %894 = vmatprep.subr.mxu0 0.0
    %895 = vmatpush2.msra.mxu0 %v216
    %896 = vmatprep.subr.mxu0 0.0
    %897 = vmatpush2.msra.mxu0 %v215
    %898 = vmatprep.subr.mxu0 0.0
    %899 = vmatpush2.msra.mxu0 %v214
    %900 = vmatprep.subr.mxu0 0.0
    %901 = vmatpush2.msra.mxu0 %v213
    %902 = vmatprep.subr.mxu0 0.0
    %903 = vmatpush2.msra.mxu0 %v212
    %904 = vmatprep.subr.mxu0 0.0
    %905 = vmatpush2.msra.mxu0 %v211
    %906 = vmatprep.subr.mxu0 0.0
    %907 = vmatpush2.msra.mxu0 %v210
    %908 = vmatprep.subr.mxu0 0.0
    %909 = vmatpush2.msra.mxu0 %v209
    %910 = vmatprep.subr.mxu0 0.0
    %911 = vmatpush2.msra.mxu0 %v208
    %912 = vmatprep.subr.mxu0 0.0
    %913 = vmatpush2.msra.mxu0 %v207
    %914 = vmatprep.subr.mxu0 0.0
    %915 = vmatpush2.msra.mxu0 %v206
    %916 = vmatprep.subr.mxu0 0.0
    %917 = vmatpush2.msra.mxu0 %v205
    %918 = vmatprep.subr.mxu0 0.0
    %919 = vmatpush2.msra.mxu0 %v204
    %920 = vmatprep.subr.mxu0 0.0
    %921 = vmatpush2.msra.mxu0 %v203
    %922 = vmatprep.mubr.f32.mxu0 %v36
    %923 = vmatmul.mubr.f32.gmra.mxu0 %v35
    %v924 = vpop.f32.mrf.mxu0
    %v925 = vadd.f32 %v855, %v924
    %v926 = vpop.f32.mrf.mxu0
    %927 = vdwg.mxu0
    %928 = vmatprep.subr.mxu0 0.0
    %929 = vmatpush1.msra.mxu0 %v234
    %930 = vmatprep.subr.mxu0 0.0
    %931 = vmatpush1.msra.mxu0 %v233
    %932 = vmatprep.subr.mxu0 0.0
    %933 = vmatpush1.msra.mxu0 %v232
    %934 = vmatprep.subr.mxu0 0.0
    %935 = vmatpush1.msra.mxu0 %v231
    %936 = vmatprep.subr.mxu0 0.0
    %937 = vmatpush1.msra.mxu0 %v230
    %938 = vmatprep.subr.mxu0 0.0
    %939 = vmatpush1.msra.mxu0 %v229
    %940 = vmatprep.subr.mxu0 0.0
    %941 = vmatpush1.msra.mxu0 %v228
    %942 = vmatprep.subr.mxu0 0.0
    %943 = vmatpush1.msra.mxu0 %v227
    %944 = vmatprep.subr.mxu0 0.0
    %945 = vmatpush1.msra.mxu0 %v226
    %946 = vmatprep.subr.mxu0 0.0
    %947 = vmatpush1.msra.mxu0 %v225
    %948 = vmatprep.subr.mxu0 0.0
    %949 = vmatpush1.msra.mxu0 %v224
    %950 = vmatprep.subr.mxu0 0.0
    %951 = vmatpush1.msra.mxu0 %v223
    %952 = vmatprep.subr.mxu0 0.0
    %953 = vmatpush1.msra.mxu0 %v222
    %954 = vmatprep.subr.mxu0 0.0
    %955 = vmatpush1.msra.mxu0 %v221
    %956 = vmatprep.subr.mxu0 0.0
    %957 = vmatpush1.msra.mxu0 %v220
    %958 = vmatprep.subr.mxu0 0.0
    %959 = vmatpush1.msra.mxu0 %v219
    %960 = vmatprep.subr.mxu0 0.0
    %961 = vmatpush2.msra.mxu0 %v250
    %962 = vmatprep.subr.mxu0 0.0
    %963 = vmatpush2.msra.mxu0 %v249
    %964 = vmatprep.subr.mxu0 0.0
    %965 = vmatpush2.msra.mxu0 %v248
    %966 = vmatprep.subr.mxu0 0.0
    %967 = vmatpush2.msra.mxu0 %v247
    %968 = vmatprep.subr.mxu0 0.0
    %969 = vmatpush2.msra.mxu0 %v246
    %970 = vmatprep.subr.mxu0 0.0
    %971 = vmatpush2.msra.mxu0 %v245
    %972 = vmatprep.subr.mxu0 0.0
    %973 = vmatpush2.msra.mxu0 %v244
    %974 = vmatprep.subr.mxu0 0.0
    %975 = vmatpush2.msra.mxu0 %v243
    %976 = vmatprep.subr.mxu0 0.0
    %977 = vmatpush2.msra.mxu0 %v242
    %978 = vmatprep.subr.mxu0 0.0
    %979 = vmatpush2.msra.mxu0 %v241
    %980 = vmatprep.subr.mxu0 0.0
    %981 = vmatpush2.msra.mxu0 %v240
    %982 = vmatprep.subr.mxu0 0.0
    %983 = vmatpush2.msra.mxu0 %v239
    %984 = vmatprep.subr.mxu0 0.0
    %985 = vmatpush2.msra.mxu0 %v238
    %986 = vmatprep.subr.mxu0 0.0
    %987 = vmatpush2.msra.mxu0 %v237
    %988 = vmatprep.subr.mxu0 0.0
    %989 = vmatpush2.msra.mxu0 %v236
    %990 = vmatprep.subr.mxu0 0.0
    %991 = vmatpush2.msra.mxu0 %v235
    %992 = vmatprep.mubr.f32.mxu0 %v38
    %993 = vmatmul.mubr.f32.gmra.mxu0 %v37
    %v994 = vpop.f32.mrf.mxu0
    %v995 = vadd.f32 %v925, %v994
    %v996 = vpop.f32.mrf.mxu0
    %997 = vdwg.mxu0
    %998 = vmatprep.subr.mxu0 0.0
    %999 = vmatpush1.msra.mxu0 %v266
    %1000 = vmatprep.subr.mxu0 0.0
    %1001 = vmatpush1.msra.mxu0 %v265
    %1002 = vmatprep.subr.mxu0 0.0
    %1003 = vmatpush1.msra.mxu0 %v264
    %1004 = vmatprep.subr.mxu0 0.0
    %1005 = vmatpush1.msra.mxu0 %v263
    %1006 = vmatprep.subr.mxu0 0.0
    %1007 = vmatpush1.msra.mxu0 %v262
    %1008 = vmatprep.subr.mxu0 0.0
    %1009 = vmatpush1.msra.mxu0 %v261
    %1010 = vmatprep.subr.mxu0 0.0
    %1011 = vmatpush1.msra.mxu0 %v260
    %1012 = vmatprep.subr.mxu0 0.0
    %1013 = vmatpush1.msra.mxu0 %v259
    %1014 = vmatprep.subr.mxu0 0.0
    %1015 = vmatpush1.msra.mxu0 %v258
    %1016 = vmatprep.subr.mxu0 0.0
    %1017 = vmatpush1.msra.mxu0 %v257
    %1018 = vmatprep.subr.mxu0 0.0
    %1019 = vmatpush1.msra.mxu0 %v256
    %1020 = vmatprep.subr.mxu0 0.0
    %1021 = vmatpush1.msra.mxu0 %v255
    %1022 = vmatprep.subr.mxu0 0.0
    %1023 = vmatpush1.msra.mxu0 %v254
    %1024 = vmatprep.subr.mxu0 0.0
    %1025 = vmatpush1.msra.mxu0 %v253
    %1026 = vmatprep.subr.mxu0 0.0
    %1027 = vmatpush1.msra.mxu0 %v252
    %1028 = vmatprep.subr.mxu0 0.0
    %1029 = vmatpush1.msra.mxu0 %v251
    %1030 = vmatprep.subr.mxu0 0.0
    %1031 = vmatpush2.msra.mxu0 %v282
    %1032 = vmatprep.subr.mxu0 0.0
    %1033 = vmatpush2.msra.mxu0 %v281
    %1034 = vmatprep.subr.mxu0 0.0
    %1035 = vmatpush2.msra.mxu0 %v280
    %1036 = vmatprep.subr.mxu0 0.0
    %1037 = vmatpush2.msra.mxu0 %v279
    %1038 = vmatprep.subr.mxu0 0.0
    %1039 = vmatpush2.msra.mxu0 %v278
    %1040 = vmatprep.subr.mxu0 0.0
    %1041 = vmatpush2.msra.mxu0 %v277
    %1042 = vmatprep.subr.mxu0 0.0
    %1043 = vmatpush2.msra.mxu0 %v276
    %1044 = vmatprep.subr.mxu0 0.0
    %1045 = vmatpush2.msra.mxu0 %v275
    %1046 = vmatprep.subr.mxu0 0.0
    %1047 = vmatpush2.msra.mxu0 %v274
    %1048 = vmatprep.subr.mxu0 0.0
    %1049 = vmatpush2.msra.mxu0 %v273
    %1050 = vmatprep.subr.mxu0 0.0
    %1051 = vmatpush2.msra.mxu0 %v272
    %1052 = vmatprep.subr.mxu0 0.0
    %1053 = vmatpush2.msra.mxu0 %v271
    %1054 = vmatprep.subr.mxu0 0.0
    %1055 = vmatpush2.msra.mxu0 %v270
    %1056 = vmatprep.subr.mxu0 0.0
    %1057 = vmatpush2.msra.mxu0 %v269
    %1058 = vmatprep.subr.mxu0 0.0
    %1059 = vmatpush2.msra.mxu0 %v268
    %1060 = vmatprep.subr.mxu0 0.0
    %1061 = vmatpush2.msra.mxu0 %v267
    %1062 = vmatprep.mubr.f32.mxu0 %v40
    %1063 = vmatmul.mubr.f32.gmra.mxu0 %v39
    %v1064 = vpop.f32.mrf.mxu0
    %v1065 = vadd.f32 %v995, %v1064
    %v1066 = vpop.f32.mrf.mxu0
    %1067 = vdwg.mxu0
    %1068 = vmatprep.subr.mxu0 0.0
    %1069 = vmatpush1.msra.mxu0 %v298
    %1070 = vmatprep.subr.mxu0 0.0
    %1071 = vmatpush1.msra.mxu0 %v297
    %1072 = vmatprep.subr.mxu0 0.0
    %1073 = vmatpush1.msra.mxu0 %v296
    %1074 = vmatprep.subr.mxu0 0.0
    %1075 = vmatpush1.msra.mxu0 %v295
    %1076 = vmatprep.subr.mxu0 0.0
    %1077 = vmatpush1.msra.mxu0 %v294
    %1078 = vmatprep.subr.mxu0 0.0
    %1079 = vmatpush1.msra.mxu0 %v293
    %1080 = vmatprep.subr.mxu0 0.0
    %1081 = vmatpush1.msra.mxu0 %v292
    %1082 = vmatprep.subr.mxu0 0.0
    %1083 = vmatpush1.msra.mxu0 %v291
    %1084 = vmatprep.subr.mxu0 0.0
    %1085 = vmatpush1.msra.mxu0 %v290
    %1086 = vmatprep.subr.mxu0 0.0
    %1087 = vmatpush1.msra.mxu0 %v289
    %1088 = vmatprep.subr.mxu0 0.0
    %1089 = vmatpush1.msra.mxu0 %v288
    %1090 = vmatprep.subr.mxu0 0.0
    %1091 = vmatpush1.msra.mxu0 %v287
    %1092 = vmatprep.subr.mxu0 0.0
    %1093 = vmatpush1.msra.mxu0 %v286
    %1094 = vmatprep.subr.mxu0 0.0
    %1095 = vmatpush1.msra.mxu0 %v285
    %1096 = vmatprep.subr.mxu0 0.0
    %1097 = vmatpush1.msra.mxu0 %v284
    %1098 = vmatprep.subr.mxu0 0.0
    %1099 = vmatpush1.msra.mxu0 %v283
    %1100 = vmatprep.subr.mxu0 0.0
    %1101 = vmatpush2.msra.mxu0 %v314
    %1102 = vmatprep.subr.mxu0 0.0
    %1103 = vmatpush2.msra.mxu0 %v313
    %1104 = vmatprep.subr.mxu0 0.0
    %1105 = vmatpush2.msra.mxu0 %v312
    %1106 = vmatprep.subr.mxu0 0.0
    %1107 = vmatpush2.msra.mxu0 %v311
    %1108 = vmatprep.subr.mxu0 0.0
    %1109 = vmatpush2.msra.mxu0 %v310
    %1110 = vmatprep.subr.mxu0 0.0
    %1111 = vmatpush2.msra.mxu0 %v309
    %1112 = vmatprep.subr.mxu0 0.0
    %1113 = vmatpush2.msra.mxu0 %v308
    %1114 = vmatprep.subr.mxu0 0.0
    %1115 = vmatpush2.msra.mxu0 %v307
    %1116 = vmatprep.subr.mxu0 0.0
    %1117 = vmatpush2.msra.mxu0 %v306
    %1118 = vmatprep.subr.mxu0 0.0
    %1119 = vmatpush2.msra.mxu0 %v305
    %1120 = vmatprep.subr.mxu0 0.0
    %1121 = vmatpush2.msra.mxu0 %v304
    %1122 = vmatprep.subr.mxu0 0.0
    %1123 = vmatpush2.msra.mxu0 %v303
    %1124 = vmatprep.subr.mxu0 0.0
    %1125 = vmatpush2.msra.mxu0 %v302
    %1126 = vmatprep.subr.mxu0 0.0
    %1127 = vmatpush2.msra.mxu0 %v301
    %1128 = vmatprep.subr.mxu0 0.0
    %1129 = vmatpush2.msra.mxu0 %v300
    %1130 = vmatprep.subr.mxu0 0.0
    %1131 = vmatpush2.msra.mxu0 %v299
    %1132 = vmatprep.mubr.f32.mxu0 %v42
    %1133 = vmatmul.mubr.f32.gmra.mxu0 %v41
    %v1134 = vpop.f32.mrf.mxu0
    %v1135 = vadd.f32 %v1065, %v1134
    %v1136 = vpop.f32.mrf.mxu0
    %1137 = vdwg.mxu0
    %1138 = vmatprep.subr.mxu0 0.0
    %1139 = vmatpush1.msra.mxu0 %v330
    %1140 = vmatprep.subr.mxu0 0.0
    %1141 = vmatpush1.msra.mxu0 %v329
    %1142 = vmatprep.subr.mxu0 0.0
    %1143 = vmatpush1.msra.mxu0 %v328
    %1144 = vmatprep.subr.mxu0 0.0
    %1145 = vmatpush1.msra.mxu0 %v327
    %1146 = vmatprep.subr.mxu0 0.0
    %1147 = vmatpush1.msra.mxu0 %v326
    %1148 = vmatprep.subr.mxu0 0.0
    %1149 = vmatpush1.msra.mxu0 %v325
    %1150 = vmatprep.subr.mxu0 0.0
    %1151 = vmatpush1.msra.mxu0 %v324
    %1152 = vmatprep.subr.mxu0 0.0
    %1153 = vmatpush1.msra.mxu0 %v323
    %1154 = vmatprep.subr.mxu0 0.0
    %1155 = vmatpush1.msra.mxu0 %v322
    %1156 = vmatprep.subr.mxu0 0.0
    %1157 = vmatpush1.msra.mxu0 %v321
    %1158 = vmatprep.subr.mxu0 0.0
    %1159 = vmatpush1.msra.mxu0 %v320
    %1160 = vmatprep.subr.mxu0 0.0
    %1161 = vmatpush1.msra.mxu0 %v319
    %1162 = vmatprep.subr.mxu0 0.0
    %1163 = vmatpush1.msra.mxu0 %v318
    %1164 = vmatprep.subr.mxu0 0.0
    %1165 = vmatpush1.msra.mxu0 %v317
    %1166 = vmatprep.subr.mxu0 0.0
    %1167 = vmatpush1.msra.mxu0 %v316
    %1168 = vmatprep.subr.mxu0 0.0
    %1169 = vmatpush1.msra.mxu0 %v315
    %1170 = vmatprep.subr.mxu0 0.0
    %1171 = vmatpush2.msra.mxu0 %v346
    %1172 = vmatprep.subr.mxu0 0.0
    %1173 = vmatpush2.msra.mxu0 %v345
    %1174 = vmatprep.subr.mxu0 0.0
    %1175 = vmatpush2.msra.mxu0 %v344
    %1176 = vmatprep.subr.mxu0 0.0
    %1177 = vmatpush2.msra.mxu0 %v343
    %1178 = vmatprep.subr.mxu0 0.0
    %1179 = vmatpush2.msra.mxu0 %v342
    %1180 = vmatprep.subr.mxu0 0.0
    %1181 = vmatpush2.msra.mxu0 %v341
    %1182 = vmatprep.subr.mxu0 0.0
    %1183 = vmatpush2.msra.mxu0 %v340
    %1184 = vmatprep.subr.mxu0 0.0
    %1185 = vmatpush2.msra.mxu0 %v339
    %1186 = vmatprep.subr.mxu0 0.0
    %1187 = vmatpush2.msra.mxu0 %v338
    %1188 = vmatprep.subr.mxu0 0.0
    %1189 = vmatpush2.msra.mxu0 %v337
    %1190 = vmatprep.subr.mxu0 0.0
    %1191 = vmatpush2.msra.mxu0 %v336
    %1192 = vmatprep.subr.mxu0 0.0
    %1193 = vmatpush2.msra.mxu0 %v335
    %1194 = vmatprep.subr.mxu0 0.0
    %1195 = vmatpush2.msra.mxu0 %v334
    %1196 = vmatprep.subr.mxu0 0.0
    %1197 = vmatpush2.msra.mxu0 %v333
    %1198 = vmatprep.subr.mxu0 0.0
    %1199 = vmatpush2.msra.mxu0 %v332
    %1200 = vmatprep.subr.mxu0 0.0
    %1201 = vmatpush2.msra.mxu0 %v331
    %1202 = vmatprep.mubr.f32.mxu0 %v44
    %1203 = vmatmul.mubr.f32.gmra.mxu0 %v43
    %v1204 = vpop.f32.mrf.mxu0
    %v1205 = vadd.f32 %v1135, %v1204
    %v1206 = vpop.f32.mrf.mxu0
    %1207 = vdwg.mxu0
    %1208 = vmatprep.subr.mxu0 0.0
    %1209 = vmatpush1.msra.mxu0 %v362
    %1210 = vmatprep.subr.mxu0 0.0
    %1211 = vmatpush1.msra.mxu0 %v361
    %1212 = vmatprep.subr.mxu0 0.0
    %1213 = vmatpush1.msra.mxu0 %v360
    %1214 = vmatprep.subr.mxu0 0.0
    %1215 = vmatpush1.msra.mxu0 %v359
    %1216 = vmatprep.subr.mxu0 0.0
    %1217 = vmatpush1.msra.mxu0 %v358
    %1218 = vmatprep.subr.mxu0 0.0
    %1219 = vmatpush1.msra.mxu0 %v357
    %1220 = vmatprep.subr.mxu0 0.0
    %1221 = vmatpush1.msra.mxu0 %v356
    %1222 = vmatprep.subr.mxu0 0.0
    %1223 = vmatpush1.msra.mxu0 %v355
    %1224 = vmatprep.subr.mxu0 0.0
    %1225 = vmatpush1.msra.mxu0 %v354
    %1226 = vmatprep.subr.mxu0 0.0
    %1227 = vmatpush1.msra.mxu0 %v353
    %1228 = vmatprep.subr.mxu0 0.0
    %1229 = vmatpush1.msra.mxu0 %v352
    %1230 = vmatprep.subr.mxu0 0.0
    %1231 = vmatpush1.msra.mxu0 %v351
    %1232 = vmatprep.subr.mxu0 0.0
    %1233 = vmatpush1.msra.mxu0 %v350
    %1234 = vmatprep.subr.mxu0 0.0
    %1235 = vmatpush1.msra.mxu0 %v349
    %1236 = vmatprep.subr.mxu0 0.0
    %1237 = vmatpush1.msra.mxu0 %v348
    %1238 = vmatprep.subr.mxu0 0.0
    %1239 = vmatpush1.msra.mxu0 %v347
    %1240 = vmatprep.subr.mxu0 0.0
    %1241 = vmatpush2.msra.mxu0 %v378
    %1242 = vmatprep.subr.mxu0 0.0
    %1243 = vmatpush2.msra.mxu0 %v377
    %1244 = vmatprep.subr.mxu0 0.0
    %1245 = vmatpush2.msra.mxu0 %v376
    %1246 = vmatprep.subr.mxu0 0.0
    %1247 = vmatpush2.msra.mxu0 %v375
    %1248 = vmatprep.subr.mxu0 0.0
    %1249 = vmatpush2.msra.mxu0 %v374
    %1250 = vmatprep.subr.mxu0 0.0
    %1251 = vmatpush2.msra.mxu0 %v373
    %1252 = vmatprep.subr.mxu0 0.0
    %1253 = vmatpush2.msra.mxu0 %v372
    %1254 = vmatprep.subr.mxu0 0.0
    %1255 = vmatpush2.msra.mxu0 %v371
    %1256 = vmatprep.subr.mxu0 0.0
    %1257 = vmatpush2.msra.mxu0 %v370
    %1258 = vmatprep.subr.mxu0 0.0
    %1259 = vmatpush2.msra.mxu0 %v369
    %1260 = vmatprep.subr.mxu0 0.0
    %1261 = vmatpush2.msra.mxu0 %v368
    %1262 = vmatprep.subr.mxu0 0.0
    %1263 = vmatpush2.msra.mxu0 %v367
    %1264 = vmatprep.subr.mxu0 0.0
    %1265 = vmatpush2.msra.mxu0 %v366
    %1266 = vmatprep.subr.mxu0 0.0
    %1267 = vmatpush2.msra.mxu0 %v365
    %1268 = vmatprep.subr.mxu0 0.0
    %1269 = vmatpush2.msra.mxu0 %v364
    %1270 = vmatprep.subr.mxu0 0.0
    %1271 = vmatpush2.msra.mxu0 %v363
    %1272 = vmatprep.mubr.f32.mxu0 %v46
    %1273 = vmatmul.mubr.f32.gmra.mxu0 %v45
    %v1274 = vpop.f32.mrf.mxu0
    %v1275 = vadd.f32 %v1205, %v1274
    %v1276 = vpop.f32.mrf.mxu0
    %1277 = vdwg.mxu0
    %1278 = vmatprep.subr.mxu0 0.0
    %1279 = vmatpush1.msra.mxu0 %v394
    %1280 = vmatprep.subr.mxu0 0.0
    %1281 = vmatpush1.msra.mxu0 %v393
    %1282 = vmatprep.subr.mxu0 0.0
    %1283 = vmatpush1.msra.mxu0 %v392
    %1284 = vmatprep.subr.mxu0 0.0
    %1285 = vmatpush1.msra.mxu0 %v391
    %1286 = vmatprep.subr.mxu0 0.0
    %1287 = vmatpush1.msra.mxu0 %v390
    %1288 = vmatprep.subr.mxu0 0.0
    %1289 = vmatpush1.msra.mxu0 %v389
    %1290 = vmatprep.subr.mxu0 0.0
    %1291 = vmatpush1.msra.mxu0 %v388
    %1292 = vmatprep.subr.mxu0 0.0
    %1293 = vmatpush1.msra.mxu0 %v387
    %1294 = vmatprep.subr.mxu0 0.0
    %1295 = vmatpush1.msra.mxu0 %v386
    %1296 = vmatprep.subr.mxu0 0.0
    %1297 = vmatpush1.msra.mxu0 %v385
    %1298 = vmatprep.subr.mxu0 0.0
    %1299 = vmatpush1.msra.mxu0 %v384
    %1300 = vmatprep.subr.mxu0 0.0
    %1301 = vmatpush1.msra.mxu0 %v383
    %1302 = vmatprep.subr.mxu0 0.0
    %1303 = vmatpush1.msra.mxu0 %v382
    %1304 = vmatprep.subr.mxu0 0.0
    %1305 = vmatpush1.msra.mxu0 %v381
    %1306 = vmatprep.subr.mxu0 0.0
    %1307 = vmatpush1.msra.mxu0 %v380
    %1308 = vmatprep.subr.mxu0 0.0
    %1309 = vmatpush1.msra.mxu0 %v379
    %1310 = vmatprep.subr.mxu0 0.0
    %1311 = vmatpush2.msra.mxu0 %v410
    %1312 = vmatprep.subr.mxu0 0.0
    %1313 = vmatpush2.msra.mxu0 %v409
    %1314 = vmatprep.subr.mxu0 0.0
    %1315 = vmatpush2.msra.mxu0 %v408
    %1316 = vmatprep.subr.mxu0 0.0
    %1317 = vmatpush2.msra.mxu0 %v407
    %1318 = vmatprep.subr.mxu0 0.0
    %1319 = vmatpush2.msra.mxu0 %v406
    %1320 = vmatprep.subr.mxu0 0.0
    %1321 = vmatpush2.msra.mxu0 %v405
    %1322 = vmatprep.subr.mxu0 0.0
    %1323 = vmatpush2.msra.mxu0 %v404
    %1324 = vmatprep.subr.mxu0 0.0
    %1325 = vmatpush2.msra.mxu0 %v403
    %1326 = vmatprep.subr.mxu0 0.0
    %1327 = vmatpush2.msra.mxu0 %v402
    %1328 = vmatprep.subr.mxu0 0.0
    %1329 = vmatpush2.msra.mxu0 %v401
    %1330 = vmatprep.subr.mxu0 0.0
    %1331 = vmatpush2.msra.mxu0 %v400
    %1332 = vmatprep.subr.mxu0 0.0
    %1333 = vmatpush2.msra.mxu0 %v399
    %1334 = vmatprep.subr.mxu0 0.0
    %1335 = vmatpush2.msra.mxu0 %v398
    %1336 = vmatprep.subr.mxu0 0.0
    %1337 = vmatpush2.msra.mxu0 %v397
    %1338 = vmatprep.subr.mxu0 0.0
    %1339 = vmatpush2.msra.mxu0 %v396
    %1340 = vmatprep.subr.mxu0 0.0
    %1341 = vmatpush2.msra.mxu0 %v395
    %1342 = vmatprep.mubr.f32.mxu0 %v48
    %1343 = vmatmul.mubr.f32.gmra.mxu0 %v47
    %v1344 = vpop.f32.mrf.mxu0
    %v1345 = vadd.f32 %v1275, %v1344
    %v1346 = vpop.f32.mrf.mxu0
    %1347 = vdwg.mxu0
    %1348 = vmatprep.subr.mxu0 0.0
    %1349 = vmatpush1.msra.mxu0 %v426
    %1350 = vmatprep.subr.mxu0 0.0
    %1351 = vmatpush1.msra.mxu0 %v425
    %1352 = vmatprep.subr.mxu0 0.0
    %1353 = vmatpush1.msra.mxu0 %v424
    %1354 = vmatprep.subr.mxu0 0.0
    %1355 = vmatpush1.msra.mxu0 %v423
    %1356 = vmatprep.subr.mxu0 0.0
    %1357 = vmatpush1.msra.mxu0 %v422
    %1358 = vmatprep.subr.mxu0 0.0
    %1359 = vmatpush1.msra.mxu0 %v421
    %1360 = vmatprep.subr.mxu0 0.0
    %1361 = vmatpush1.msra.mxu0 %v420
    %1362 = vmatprep.subr.mxu0 0.0
    %1363 = vmatpush1.msra.mxu0 %v419
    %1364 = vmatprep.subr.mxu0 0.0
    %1365 = vmatpush1.msra.mxu0 %v418
    %1366 = vmatprep.subr.mxu0 0.0
    %1367 = vmatpush1.msra.mxu0 %v417
    %1368 = vmatprep.subr.mxu0 0.0
    %1369 = vmatpush1.msra.mxu0 %v416
    %1370 = vmatprep.subr.mxu0 0.0
    %1371 = vmatpush1.msra.mxu0 %v415
    %1372 = vmatprep.subr.mxu0 0.0
    %1373 = vmatpush1.msra.mxu0 %v414
    %1374 = vmatprep.subr.mxu0 0.0
    %1375 = vmatpush1.msra.mxu0 %v413
    %1376 = vmatprep.subr.mxu0 0.0
    %1377 = vmatpush1.msra.mxu0 %v412
    %1378 = vmatprep.subr.mxu0 0.0
    %1379 = vmatpush1.msra.mxu0 %v411
    %1380 = vmatprep.subr.mxu0 0.0
    %1381 = vmatpush2.msra.mxu0 %v442
    %1382 = vmatprep.subr.mxu0 0.0
    %1383 = vmatpush2.msra.mxu0 %v441
    %1384 = vmatprep.subr.mxu0 0.0
    %1385 = vmatpush2.msra.mxu0 %v440
    %1386 = vmatprep.subr.mxu0 0.0
    %1387 = vmatpush2.msra.mxu0 %v439
    %1388 = vmatprep.subr.mxu0 0.0
    %1389 = vmatpush2.msra.mxu0 %v438
    %1390 = vmatprep.subr.mxu0 0.0
    %1391 = vmatpush2.msra.mxu0 %v437
    %1392 = vmatprep.subr.mxu0 0.0
    %1393 = vmatpush2.msra.mxu0 %v436
    %1394 = vmatprep.subr.mxu0 0.0
    %1395 = vmatpush2.msra.mxu0 %v435
    %1396 = vmatprep.subr.mxu0 0.0
    %1397 = vmatpush2.msra.mxu0 %v434
    %1398 = vmatprep.subr.mxu0 0.0
    %1399 = vmatpush2.msra.mxu0 %v433
    %1400 = vmatprep.subr.mxu0 0.0
    %1401 = vmatpush2.msra.mxu0 %v432
    %1402 = vmatprep.subr.mxu0 0.0
    %1403 = vmatpush2.msra.mxu0 %v431
    %1404 = vmatprep.subr.mxu0 0.0
    %1405 = vmatpush2.msra.mxu0 %v430
    %1406 = vmatprep.subr.mxu0 0.0
    %1407 = vmatpush2.msra.mxu0 %v429
    %1408 = vmatprep.subr.mxu0 0.0
    %1409 = vmatpush2.msra.mxu0 %v428
    %1410 = vmatprep.subr.mxu0 0.0
    %1411 = vmatpush2.msra.mxu0 %v427
    %1412 = vmatprep.mubr.f32.mxu0 %v50
    %1413 = vmatmul.mubr.f32.gmra.mxu0 %v49
    %v1414 = vpop.f32.mrf.mxu0
    %v1415 = vadd.f32 %v1345, %v1414
    %v1416 = vpop.f32.mrf.mxu0
    %1417 = vdwg.mxu0
    %1418 = vmatprep.subr.mxu0 0.0
    %1419 = vmatpush1.msra.mxu0 %v458
    %1420 = vmatprep.subr.mxu0 0.0
    %1421 = vmatpush1.msra.mxu0 %v457
    %1422 = vmatprep.subr.mxu0 0.0
    %1423 = vmatpush1.msra.mxu0 %v456
    %1424 = vmatprep.subr.mxu0 0.0
    %1425 = vmatpush1.msra.mxu0 %v455
    %1426 = vmatprep.subr.mxu0 0.0
    %1427 = vmatpush1.msra.mxu0 %v454
    %1428 = vmatprep.subr.mxu0 0.0
    %1429 = vmatpush1.msra.mxu0 %v453
    %1430 = vmatprep.subr.mxu0 0.0
    %1431 = vmatpush1.msra.mxu0 %v452
    %1432 = vmatprep.subr.mxu0 0.0
    %1433 = vmatpush1.msra.mxu0 %v451
    %1434 = vmatprep.subr.mxu0 0.0
    %1435 = vmatpush1.msra.mxu0 %v450
    %1436 = vmatprep.subr.mxu0 0.0
    %1437 = vmatpush1.msra.mxu0 %v449
    %1438 = vmatprep.subr.mxu0 0.0
    %1439 = vmatpush1.msra.mxu0 %v448
    %1440 = vmatprep.subr.mxu0 0.0
    %1441 = vmatpush1.msra.mxu0 %v447
    %1442 = vmatprep.subr.mxu0 0.0
    %1443 = vmatpush1.msra.mxu0 %v446
    %1444 = vmatprep.subr.mxu0 0.0
    %1445 = vmatpush1.msra.mxu0 %v445
    %1446 = vmatprep.subr.mxu0 0.0
    %1447 = vmatpush1.msra.mxu0 %v444
    %1448 = vmatprep.subr.mxu0 0.0
    %1449 = vmatpush1.msra.mxu0 %v443
    %1450 = vmatprep.subr.mxu0 0.0
    %1451 = vmatpush2.msra.mxu0 %v474
    %1452 = vmatprep.subr.mxu0 0.0
    %1453 = vmatpush2.msra.mxu0 %v473
    %1454 = vmatprep.subr.mxu0 0.0
    %1455 = vmatpush2.msra.mxu0 %v472
    %1456 = vmatprep.subr.mxu0 0.0
    %1457 = vmatpush2.msra.mxu0 %v471
    %1458 = vmatprep.subr.mxu0 0.0
    %1459 = vmatpush2.msra.mxu0 %v470
    %1460 = vmatprep.subr.mxu0 0.0
    %1461 = vmatpush2.msra.mxu0 %v469
    %1462 = vmatprep.subr.mxu0 0.0
    %1463 = vmatpush2.msra.mxu0 %v468
    %1464 = vmatprep.subr.mxu0 0.0
    %1465 = vmatpush2.msra.mxu0 %v467
    %1466 = vmatprep.subr.mxu0 0.0
    %1467 = vmatpush2.msra.mxu0 %v466
    %1468 = vmatprep.subr.mxu0 0.0
    %1469 = vmatpush2.msra.mxu0 %v465
    %1470 = vmatprep.subr.mxu0 0.0
    %1471 = vmatpush2.msra.mxu0 %v464
    %1472 = vmatprep.subr.mxu0 0.0
    %1473 = vmatpush2.msra.mxu0 %v463
    %1474 = vmatprep.subr.mxu0 0.0
    %1475 = vmatpush2.msra.mxu0 %v462
    %1476 = vmatprep.subr.mxu0 0.0
    %1477 = vmatpush2.msra.mxu0 %v461
    %1478 = vmatprep.subr.mxu0 0.0
    %1479 = vmatpush2.msra.mxu0 %v460
    %1480 = vmatprep.subr.mxu0 0.0
    %1481 = vmatpush2.msra.mxu0 %v459
    %1482 = vmatprep.mubr.f32.mxu0 %v52
    %1483 = vmatmul.mubr.f32.gmra.mxu0 %v51
    %v1484 = vpop.f32.mrf.mxu0
    %v1485 = vadd.f32 %v1415, %v1484
    %v1486 = vpop.f32.mrf.mxu0
    %1487 = vdwg.mxu0
    %1488 = vmatprep.subr.mxu0 0.0
    %1489 = vmatpush1.msra.mxu0 %v490
    %1490 = vmatprep.subr.mxu0 0.0
    %1491 = vmatpush1.msra.mxu0 %v489
    %1492 = vmatprep.subr.mxu0 0.0
    %1493 = vmatpush1.msra.mxu0 %v488
    %1494 = vmatprep.subr.mxu0 0.0
    %1495 = vmatpush1.msra.mxu0 %v487
    %1496 = vmatprep.subr.mxu0 0.0
    %1497 = vmatpush1.msra.mxu0 %v486
    %1498 = vmatprep.subr.mxu0 0.0
    %1499 = vmatpush1.msra.mxu0 %v485
    %1500 = vmatprep.subr.mxu0 0.0
    %1501 = vmatpush1.msra.mxu0 %v484
    %1502 = vmatprep.subr.mxu0 0.0
    %1503 = vmatpush1.msra.mxu0 %v483
    %1504 = vmatprep.subr.mxu0 0.0
    %1505 = vmatpush1.msra.mxu0 %v482
    %1506 = vmatprep.subr.mxu0 0.0
    %1507 = vmatpush1.msra.mxu0 %v481
    %1508 = vmatprep.subr.mxu0 0.0
    %1509 = vmatpush1.msra.mxu0 %v480
    %1510 = vmatprep.subr.mxu0 0.0
    %1511 = vmatpush1.msra.mxu0 %v479
    %1512 = vmatprep.subr.mxu0 0.0
    %1513 = vmatpush1.msra.mxu0 %v478
    %1514 = vmatprep.subr.mxu0 0.0
    %1515 = vmatpush1.msra.mxu0 %v477
    %1516 = vmatprep.subr.mxu0 0.0
    %1517 = vmatpush1.msra.mxu0 %v476
    %1518 = vmatprep.subr.mxu0 0.0
    %1519 = vmatpush1.msra.mxu0 %v475
    %1520 = vmatprep.subr.mxu0 0.0
    %1521 = vmatpush2.msra.mxu0 %v506
    %1522 = vmatprep.subr.mxu0 0.0
    %1523 = vmatpush2.msra.mxu0 %v505
    %1524 = vmatprep.subr.mxu0 0.0
    %1525 = vmatpush2.msra.mxu0 %v504
    %1526 = vmatprep.subr.mxu0 0.0
    %1527 = vmatpush2.msra.mxu0 %v503
    %1528 = vmatprep.subr.mxu0 0.0
    %1529 = vmatpush2.msra.mxu0 %v502
    %1530 = vmatprep.subr.mxu0 0.0
    %1531 = vmatpush2.msra.mxu0 %v501
    %1532 = vmatprep.subr.mxu0 0.0
    %1533 = vmatpush2.msra.mxu0 %v500
    %1534 = vmatprep.subr.mxu0 0.0
    %1535 = vmatpush2.msra.mxu0 %v499
    %1536 = vmatprep.subr.mxu0 0.0
    %1537 = vmatpush2.msra.mxu0 %v498
    %1538 = vmatprep.subr.mxu0 0.0
    %1539 = vmatpush2.msra.mxu0 %v497
    %1540 = vmatprep.subr.mxu0 0.0
    %1541 = vmatpush2.msra.mxu0 %v496
    %1542 = vmatprep.subr.mxu0 0.0
    %1543 = vmatpush2.msra.mxu0 %v495
    %1544 = vmatprep.subr.mxu0 0.0
    %1545 = vmatpush2.msra.mxu0 %v494
    %1546 = vmatprep.subr.mxu0 0.0
    %1547 = vmatpush2.msra.mxu0 %v493
    %1548 = vmatprep.subr.mxu0 0.0
    %1549 = vmatpush2.msra.mxu0 %v492
    %1550 = vmatprep.subr.mxu0 0.0
    %1551 = vmatpush2.msra.mxu0 %v491
    %1552 = vmatprep.mubr.f32.mxu0 %v54
    %1553 = vmatmul.mubr.f32.gmra.mxu0 %v53
    %v1554 = vpop.f32.mrf.mxu0
    %v1555 = vadd.f32 %v1485, %v1554
    %v1556 = vpop.f32.mrf.mxu0
    %1557 = vdwg.mxu0
    %1558 = vmatprep.subr.mxu0 0.0
    %1559 = vmatpush1.msra.mxu0 %v522
    %1560 = vmatprep.subr.mxu0 0.0
    %1561 = vmatpush1.msra.mxu0 %v521
    %1562 = vmatprep.subr.mxu0 0.0
    %1563 = vmatpush1.msra.mxu0 %v520
    %1564 = vmatprep.subr.mxu0 0.0
    %1565 = vmatpush1.msra.mxu0 %v519
    %1566 = vmatprep.subr.mxu0 0.0
    %1567 = vmatpush1.msra.mxu0 %v518
    %1568 = vmatprep.subr.mxu0 0.0
    %1569 = vmatpush1.msra.mxu0 %v517
    %1570 = vmatprep.subr.mxu0 0.0
    %1571 = vmatpush1.msra.mxu0 %v516
    %1572 = vmatprep.subr.mxu0 0.0
    %1573 = vmatpush1.msra.mxu0 %v515
    %1574 = vmatprep.subr.mxu0 0.0
    %1575 = vmatpush1.msra.mxu0 %v514
    %1576 = vmatprep.subr.mxu0 0.0
    %1577 = vmatpush1.msra.mxu0 %v513
    %1578 = vmatprep.subr.mxu0 0.0
    %1579 = vmatpush1.msra.mxu0 %v512
    %1580 = vmatprep.subr.mxu0 0.0
    %1581 = vmatpush1.msra.mxu0 %v511
    %1582 = vmatprep.subr.mxu0 0.0
    %1583 = vmatpush1.msra.mxu0 %v510
    %1584 = vmatprep.subr.mxu0 0.0
    %1585 = vmatpush1.msra.mxu0 %v509
    %1586 = vmatprep.subr.mxu0 0.0
    %1587 = vmatpush1.msra.mxu0 %v508
    %1588 = vmatprep.subr.mxu0 0.0
    %1589 = vmatpush1.msra.mxu0 %v507
    %1590 = vmatprep.subr.mxu0 0.0
    %1591 = vmatpush2.msra.mxu0 %v538
    %1592 = vmatprep.subr.mxu0 0.0
    %1593 = vmatpush2.msra.mxu0 %v537
    %1594 = vmatprep.subr.mxu0 0.0
    %1595 = vmatpush2.msra.mxu0 %v536
    %1596 = vmatprep.subr.mxu0 0.0
    %1597 = vmatpush2.msra.mxu0 %v535
    %1598 = vmatprep.subr.mxu0 0.0
    %1599 = vmatpush2.msra.mxu0 %v534
    %1600 = vmatprep.subr.mxu0 0.0
    %1601 = vmatpush2.msra.mxu0 %v533
    %1602 = vmatprep.subr.mxu0 0.0
    %1603 = vmatpush2.msra.mxu0 %v532
    %1604 = vmatprep.subr.mxu0 0.0
    %1605 = vmatpush2.msra.mxu0 %v531
    %1606 = vmatprep.subr.mxu0 0.0
    %1607 = vmatpush2.msra.mxu0 %v530
    %1608 = vmatprep.subr.mxu0 0.0
    %1609 = vmatpush2.msra.mxu0 %v529
    %1610 = vmatprep.subr.mxu0 0.0
    %1611 = vmatpush2.msra.mxu0 %v528
    %1612 = vmatprep.subr.mxu0 0.0
    %1613 = vmatpush2.msra.mxu0 %v527
    %1614 = vmatprep.subr.mxu0 0.0
    %1615 = vmatpush2.msra.mxu0 %v526
    %1616 = vmatprep.subr.mxu0 0.0
    %1617 = vmatpush2.msra.mxu0 %v525
    %1618 = vmatprep.subr.mxu0 0.0
    %1619 = vmatpush2.msra.mxu0 %v524
    %1620 = vmatprep.subr.mxu0 0.0
    %1621 = vmatpush2.msra.mxu0 %v523
    %1622 = vmatprep.mubr.f32.mxu0 %v56
    %1623 = vmatmul.mubr.f32.gmra.mxu0 %v55
    %v1624 = vpop.f32.mrf.mxu0
    %v1625 = vadd.f32 %v1555, %v1624
    %v1626 = vpop.f32.mrf.mxu0
    %1627 = vdwg.mxu0
    %1628 = vmatprep.subr.mxu0 0.0
    %1629 = vmatpush1.msra.mxu0 %v554
    %1630 = vmatprep.subr.mxu0 0.0
    %1631 = vmatpush1.msra.mxu0 %v553
    %1632 = vmatprep.subr.mxu0 0.0
    %1633 = vmatpush1.msra.mxu0 %v552
    %1634 = vmatprep.subr.mxu0 0.0
    %1635 = vmatpush1.msra.mxu0 %v551
    %1636 = vmatprep.subr.mxu0 0.0
    %1637 = vmatpush1.msra.mxu0 %v550
    %1638 = vmatprep.subr.mxu0 0.0
    %1639 = vmatpush1.msra.mxu0 %v549
    %1640 = vmatprep.subr.mxu0 0.0
    %1641 = vmatpush1.msra.mxu0 %v548
    %1642 = vmatprep.subr.mxu0 0.0
    %1643 = vmatpush1.msra.mxu0 %v547
    %1644 = vmatprep.subr.mxu0 0.0
    %1645 = vmatpush1.msra.mxu0 %v546
    %1646 = vmatprep.subr.mxu0 0.0
    %1647 = vmatpush1.msra.mxu0 %v545
    %1648 = vmatprep.subr.mxu0 0.0
    %1649 = vmatpush1.msra.mxu0 %v544
    %1650 = vmatprep.subr.mxu0 0.0
    %1651 = vmatpush1.msra.mxu0 %v543
    %1652 = vmatprep.subr.mxu0 0.0
    %1653 = vmatpush1.msra.mxu0 %v542
    %1654 = vmatprep.subr.mxu0 0.0
    %1655 = vmatpush1.msra.mxu0 %v541
    %1656 = vmatprep.subr.mxu0 0.0
    %1657 = vmatpush1.msra.mxu0 %v540
    %1658 = vmatprep.subr.mxu0 0.0
    %1659 = vmatpush1.msra.mxu0 %v539
    %1660 = vmatprep.subr.mxu0 0.0
    %1661 = vmatpush2.msra.mxu0 %v570
    %1662 = vmatprep.subr.mxu0 0.0
    %1663 = vmatpush2.msra.mxu0 %v569
    %1664 = vmatprep.subr.mxu0 0.0
    %1665 = vmatpush2.msra.mxu0 %v568
    %1666 = vmatprep.subr.mxu0 0.0
    %1667 = vmatpush2.msra.mxu0 %v567
    %1668 = vmatprep.subr.mxu0 0.0
    %1669 = vmatpush2.msra.mxu0 %v566
    %1670 = vmatprep.subr.mxu0 0.0
    %1671 = vmatpush2.msra.mxu0 %v565
    %1672 = vmatprep.subr.mxu0 0.0
    %1673 = vmatpush2.msra.mxu0 %v564
    %1674 = vmatprep.subr.mxu0 0.0
    %1675 = vmatpush2.msra.mxu0 %v563
    %1676 = vmatprep.subr.mxu0 0.0
    %1677 = vmatpush2.msra.mxu0 %v562
    %1678 = vmatprep.subr.mxu0 0.0
    %1679 = vmatpush2.msra.mxu0 %v561
    %1680 = vmatprep.subr.mxu0 0.0
    %1681 = vmatpush2.msra.mxu0 %v560
    %1682 = vmatprep.subr.mxu0 0.0
    %1683 = vmatpush2.msra.mxu0 %v559
    %1684 = vmatprep.subr.mxu0 0.0
    %1685 = vmatpush2.msra.mxu0 %v558
    %1686 = vmatprep.subr.mxu0 0.0
    %1687 = vmatpush2.msra.mxu0 %v557
    %1688 = vmatprep.subr.mxu0 0.0
    %1689 = vmatpush2.msra.mxu0 %v556
    %1690 = vmatprep.subr.mxu0 0.0
    %1691 = vmatpush2.msra.mxu0 %v555
    %1692 = vmatprep.mubr.f32.mxu0 %v58
    %1693 = vmatmul.mubr.f32.gmra.mxu0 %v57
    %v1694 = vpop.f32.mrf.mxu0
    %v1695 = vadd.f32 %v1625, %v1694
    %v1696 = vpop.f32.mrf.mxu0
    %1697 = vdwg.mxu0
    %v1698 = vmax.f32 %v1695, 0.0
    %v1699 = vld [vmem:[%s3] sm:$0xff]
    %v1700 = vld [vmem:[%s3 + $0x8] sm:$0xff]
    %v1701 = vld [vmem:[%s3 + $0x10] sm:$0xff]
    %v1702 = vld [vmem:[%s3 + $0x18] sm:$0xff]
    %v1703 = vld [vmem:[%s4] sm:$0x1]
    %v1705 = vlaneseq
    %v1706 = vshrl.u32 %v1705, 7
    %v1707 = vsub.s32 0, %v1706
    %v1708 = vrot.slane %v1703, %v1707
    %vm1710 = vcmask 261120
    %v1712 = vsel %vm1710, %v1698, 0
    %1714 = vmatprep.subr.mxu0 0.0
    %1715 = vmatpush1.msra.mxu0 0.0
    %1716 = vmatprep.subr.mxu0 0.0
    %1717 = vmatpush1.msra.mxu0 0.0
    %1718 = vmatprep.subr.mxu0 0.0
    %1719 = vmatpush1.msra.mxu0 0.0
    %1720 = vmatprep.subr.mxu0 0.0
    %1721 = vmatpush1.msra.mxu0 0.0
    %1722 = vmatprep.subr.mxu0 0.0
    %1723 = vmatpush1.msra.mxu0 0.0
    %1724 = vmatprep.subr.mxu0 0.0
    %1725 = vmatpush1.msra.mxu0 0.0
    %1726 = vmatprep.subr.mxu0 0.0
    %1727 = vmatpush1.msra.mxu0 0.0
    %1728 = vmatprep.subr.mxu0 0.0
    %1729 = vmatpush1.msra.mxu0 0.0
    %1730 = vmatprep.subr.mxu0 0.0
    %1731 = vmatpush1.msra.mxu0 0.0
    %1732 = vmatprep.subr.mxu0 0.0
    %1733 = vmatpush1.msra.mxu0 0.0
    %1734 = vmatprep.subr.mxu0 0.0
    %1735 = vmatpush1.msra.mxu0 0.0
    %1736 = vmatprep.subr.mxu0 0.0
    %1737 = vmatpush1.msra.mxu0 0.0
    %1738 = vmatprep.subr.mxu0 0.0
    %1739 = vmatpush1.msra.mxu0 %v1702
    %1740 = vmatprep.subr.mxu0 0.0
    %1741 = vmatpush1.msra.mxu0 %v1701
    %1742 = vmatprep.subr.mxu0 0.0
    %1743 = vmatpush1.msra.mxu0 %v1700
    %1744 = vmatprep.subr.mxu0 0.0
    %1745 = vmatpush1.msra.mxu0 %v1699
    %1746 = vmatprep.subr.mxu0 0.0
    %1747 = vmatpush2.msra.mxu0 0.0
    %1748 = vmatprep.subr.mxu0 0.0
    %1749 = vmatpush2.msra.mxu0 0.0
    %1750 = vmatprep.subr.mxu0 0.0
    %1751 = vmatpush2.msra.mxu0 0.0
    %1752 = vmatprep.subr.mxu0 0.0
    %1753 = vmatpush2.msra.mxu0 0.0
    %1754 = vmatprep.subr.mxu0 0.0
    %1755 = vmatpush2.msra.mxu0 0.0
    %1756 = vmatprep.subr.mxu0 0.0
    %1757 = vmatpush2.msra.mxu0 0.0
    %1758 = vmatprep.subr.mxu0 0.0
    %1759 = vmatpush2.msra.mxu0 0.0
    %1760 = vmatprep.subr.mxu0 0.0
    %1761 = vmatpush2.msra.mxu0 0.0
    %1762 = vmatprep.subr.mxu0 0.0
    %1763 = vmatpush2.msra.mxu0 0.0
    %1764 = vmatprep.subr.mxu0 0.0
    %1765 = vmatpush2.msra.mxu0 0.0
    %1766 = vmatprep.subr.mxu0 0.0
    %1767 = vmatpush2.msra.mxu0 0.0
    %1768 = vmatprep.subr.mxu0 0.0
    %1769 = vmatpush2.msra.mxu0 0.0
    %1770 = vmatprep.subr.mxu0 0.0
    %1771 = vmatpush2.msra.mxu0 0.0
    %1772 = vmatprep.subr.mxu0 0.0
    %1773 = vmatpush2.msra.mxu0 0.0
    %1774 = vmatprep.subr.mxu0 0.0
    %1775 = vmatpush2.msra.mxu0 0.0
    %1776 = vmatprep.subr.mxu0 0.0
    %1777 = vmatpush2.msra.mxu0 0.0
    %1778 = vmatprep.mubr.f32.mxu0 0.0
    %1779 = vmatmul.mubr.f32.gmra.mxu0 %v1712
    %v1780 = vpop.f32.mrf.mxu0
    %v1781 = vadd.f32 %v1708, %v1780
    %v1782 = vpop.f32.mrf.mxu0
    %1783 = vdwg.mxu0
    %v1784 = vmax.f32 %v1781, 0.0
    %v1785 = vld [vmem:[%s5] sm:$0xff]
    %v1786 = vld [vmem:[%s5 + $0x8] sm:$0xff]
    %v1787 = vld [vmem:[%s5 + $0x10] sm:$0xff]
    %v1788 = vld [vmem:[%s5 + $0x18] sm:$0xff]
    %v1789 = vld [vmem:[%s6] sm:$0x1]
    %v1791 = vlaneseq
    %v1792 = vshrl.u32 %v1791, 7
    %v1793 = vsub.s32 0, %v1792
    %v1794 = vrot.slane %v1789, %v1793
    %v1797 = vsel %vm1710, %v1784, 0
    %1799 = vmatprep.subr.mxu0 0.0
    %1800 = vmatpush1.msra.mxu0 0.0
    %1801 = vmatprep.subr.mxu0 0.0
    %1802 = vmatpush1.msra.mxu0 0.0
    %1803 = vmatprep.subr.mxu0 0.0
    %1804 = vmatpush1.msra.mxu0 0.0
    %1805 = vmatprep.subr.mxu0 0.0
    %1806 = vmatpush1.msra.mxu0 0.0
    %1807 = vmatprep.subr.mxu0 0.0
    %1808 = vmatpush1.msra.mxu0 0.0
    %1809 = vmatprep.subr.mxu0 0.0
    %1810 = vmatpush1.msra.mxu0 0.0
    %1811 = vmatprep.subr.mxu0 0.0
    %1812 = vmatpush1.msra.mxu0 0.0
    %1813 = vmatprep.subr.mxu0 0.0
    %1814 = vmatpush1.msra.mxu0 0.0
    %1815 = vmatprep.subr.mxu0 0.0
    %1816 = vmatpush1.msra.mxu0 0.0
    %1817 = vmatprep.subr.mxu0 0.0
    %1818 = vmatpush1.msra.mxu0 0.0
    %1819 = vmatprep.subr.mxu0 0.0
    %1820 = vmatpush1.msra.mxu0 0.0
    %1821 = vmatprep.subr.mxu0 0.0
    %1822 = vmatpush1.msra.mxu0 0.0
    %1823 = vmatprep.subr.mxu0 0.0
    %1824 = vmatpush1.msra.mxu0 %v1788
    %1825 = vmatprep.subr.mxu0 0.0
    %1826 = vmatpush1.msra.mxu0 %v1787
    %1827 = vmatprep.subr.mxu0 0.0
    %1828 = vmatpush1.msra.mxu0 %v1786
    %1829 = vmatprep.subr.mxu0 0.0
    %1830 = vmatpush1.msra.mxu0 %v1785
    %1831 = vmatprep.subr.mxu0 0.0
    %1832 = vmatpush2.msra.mxu0 0.0
    %1833 = vmatprep.subr.mxu0 0.0
    %1834 = vmatpush2.msra.mxu0 0.0
    %1835 = vmatprep.subr.mxu0 0.0
    %1836 = vmatpush2.msra.mxu0 0.0
    %1837 = vmatprep.subr.mxu0 0.0
    %1838 = vmatpush2.msra.mxu0 0.0
    %1839 = vmatprep.subr.mxu0 0.0
    %1840 = vmatpush2.msra.mxu0 0.0
    %1841 = vmatprep.subr.mxu0 0.0
    %1842 = vmatpush2.msra.mxu0 0.0
    %1843 = vmatprep.subr.mxu0 0.0
    %1844 = vmatpush2.msra.mxu0 0.0
    %1845 = vmatprep.subr.mxu0 0.0
    %1846 = vmatpush2.msra.mxu0 0.0
    %1847 = vmatprep.subr.mxu0 0.0
    %1848 = vmatpush2.msra.mxu0 0.0
    %1849 = vmatprep.subr.mxu0 0.0
    %1850 = vmatpush2.msra.mxu0 0.0
    %1851 = vmatprep.subr.mxu0 0.0
    %1852 = vmatpush2.msra.mxu0 0.0
    %1853 = vmatprep.subr.mxu0 0.0
    %1854 = vmatpush2.msra.mxu0 0.0
    %1855 = vmatprep.subr.mxu0 0.0
    %1856 = vmatpush2.msra.mxu0 0.0
    %1857 = vmatprep.subr.mxu0 0.0
    %1858 = vmatpush2.msra.mxu0 0.0
    %1859 = vmatprep.subr.mxu0 0.0
    %1860 = vmatpush2.msra.mxu0 0.0
    %1861 = vmatprep.subr.mxu0 0.0
    %1862 = vmatpush2.msra.mxu0 0.0
    %1863 = vmatprep.mubr.f32.mxu0 0.0
    %1864 = vmatmul.mubr.f32.gmra.mxu0 %v1797
    %v1865 = vpop.f32.mrf.mxu0
    %v1866 = vadd.f32 %v1794, %v1865
    %v1867 = vpop.f32.mrf.mxu0
    %1868 = vdwg.mxu0
    %1869 = vst [vmem:[#allocation2] sm:$0xff] %v1866
    // Predicated region
    $region30: #{tpu_custom_call.1} parent=1 // pred_check
      _
    $region31: #{tpu_custom_call.1} parent=1 // pred_check_branch
      %1871 = sbr.rel (0) target = $region33
    $region32: #{tpu_custom_call.1} parent=1 // pred_region
      %s1873 = ssub.s32 128, 128
      %1874 = vsyncadd [#allocation3], %s1873
      %s1876 = sshll.u32 [#allocation2], 4
      %s1877 = int_to_ptr.vmem [resolvable:$true] %s1876
      %1879 = dma.vmem_to_hbm [thread:$0]  %s1877, 128, %s7, [#allocation3]
    $region33: #{tpu_custom_call.1} parent=1 // pred_fallthru
      _
    // Predicated region
    $region34: #{tpu_custom_call.1} parent=1 // pred_check
      _
    $region35: #{tpu_custom_call.1} parent=1 // pred_check_branch
      %1881 = sbr.rel (0) target = $region37
    $region36: #{tpu_custom_call.1} parent=1 // pred_region
      %1882 = dma.done [#allocation3], 128
    $region37: #{tpu_custom_call.1} parent=1 // pred_fallthru
      _
    %1883 = vsyncpa [#allocation3], 1

</llo_original>
